<compile_context>
chip_gen: v5e
topology: v5e:2x2
jax: 0.10.0
libtpu: 0.0.40
codegen_flags: <defaults>
</compile_context>

<pallas_src>
import math

import numpy as np

import jax
import jax.numpy as jnp
from jax.experimental import pallas as pl
from jax.experimental.pallas import tpu as pltpu

NUM_HEADS = 8
NUM_LAYERS = 2
LN_EPS = 1e-5
FFN_CHUNK = 512           # chunk of dim_feedforward processed at a time


def _layernorm(x, g, b):
    mu = jnp.mean(x, axis=-1, keepdims=True)
    xc = x - mu
    var = jnp.mean(xc * xc, axis=-1, keepdims=True)
    return xc * jax.lax.rsqrt(var + LN_EPS) * g + b


# -----------------------------------------------------------------------------
# Trace-time constants: one-hot "expand"/"reduce" matrices + masks.
# Token slab layout (MP = ceil(B*S / 8) * 8 rows):
#   rows [0, B*T)        : frame tokens, row = b*T + t  (token s = t + 1)
#   rows [B*T, B*T+B)    : CLS tokens,  row = B*T + b   (token s = 0)
#   rows [B*T+B, MP)     : zero padding (masked out everywhere)
# -----------------------------------------------------------------------------
def _attention_constants(B, T, D, H, MP):
    S = T + 1
    R = B * H * S
    HD = D // H

    def row(b, s):
        return B * T + b if s == 0 else b * T + (s - 1)

    tok_batch = np.full((MP,), -1, np.int64)
    for b in range(B):
        for s in range(S):
            tok_batch[row(b, s)] = b

    expand = np.zeros((R, MP), np.float32)    # token -> (batch, head, pos) row
    reduce_ = np.zeros((MP, R), np.float32)   # sum heads back onto token rows
    smask = np.full((R, MP), -1e30, np.float32)
    hmask = np.zeros((R, D), np.float32)      # keep only this head's columns
    for b in range(B):
        for h in range(H):
            for s in range(S):
                r = (b * H + h) * S + s
                m = row(b, s)
                expand[r, m] = 1.0
                reduce_[m, r] = 1.0
                hmask[r, h * HD:(h + 1) * HD] = 1.0
                smask[r, :] = np.where(tok_batch == b, 0.0, -1e30)
    return expand, smask, reduce_, hmask


# -----------------------------------------------------------------------------
# Kernel: CLS prepend + 2 post-norm encoder layers + classifier head, fully fused
# -----------------------------------------------------------------------------
def backend_kernel(x_ref, cls_ref, expand_ref, smask_ref, reduce_ref, hmask_ref,
                   wqkv_ref, bqkv_ref, wo_ref, bo_ref, ln1g_ref, ln1b_ref,
                   w1_ref, b1_ref, w2_ref, b2_ref, ln2g_ref, ln2b_ref,
                   wd1_ref, bd1_ref, wd2_ref, bd2_ref,
                   o_ref, xbuf):
    B, C, T = x_ref.shape
    D = C
    MP = xbuf.shape[0]
    F = w1_ref.shape[2]
    nt = (((1,), (1,)), ((), ()))            # contract last dims (A @ B^T style)

    # ---- assemble the (MP, D) token slab: frames, CLS rows, zero padding -----
    xbuf[...] = jnp.zeros((MP, D), jnp.float32)
    for b in range(B):                                        # aligned (T, D) stores
        xbuf[pl.ds(b * T, T), :] = jnp.transpose(x_ref[b], (1, 0))
    xbuf[pl.ds(B * T, B), :] = jnp.broadcast_to(cls_ref[...], (B, D))
    x = xbuf[...]                                             # (MP, D) f32

    expand = expand_ref[...]
    smask = smask_ref[...]
    reduce_ = reduce_ref[...]
    hmask = hmask_ref[...]

    # ---- 2 post-norm nn.TransformerEncoderLayer ------------------------------
    for l in range(NUM_LAYERS):
        # fused QKV projection (1/sqrt(head_dim) pre-folded into the q slice)
        qkv = (jnp.dot(x, wqkv_ref[l], preferred_element_type=jnp.float32)
               + bqkv_ref[l])                                 # (MP, 3D)
        q = qkv[:, 0:D]
        k = qkv[:, D:2 * D]
        v = qkv[:, 2 * D:3 * D]

        # all (batch, head) score rows in one matrix -> single softmax pass
        qe = jnp.dot(expand, q, preferred_element_type=jnp.float32) * hmask
        s = jax.lax.dot_general(qe, k, nt,
                                preferred_element_type=jnp.float32) + smask
        s = s - jnp.max(s, axis=-1, keepdims=True)
        p = jnp.exp(s)
        p = p * pl.reciprocal(jnp.sum(p, axis=-1, keepdims=True), approx=True)
        pv = jnp.dot(p, v, preferred_element_type=jnp.float32) * hmask
        attn = jnp.dot(reduce_, pv, preferred_element_type=jnp.float32)  # (MP, D)
        attn = (jnp.dot(attn, wo_ref[l], preferred_element_type=jnp.float32)
                + bo_ref[l])
        x = _layernorm(x + attn, ln1g_ref[l], ln1b_ref[l])

        # feed-forward, chunked over F: bf16 weights, MXU-native (F, D) w2,
        # f32 accumulation, no (MP, F) live intermediate.
        xb = x.astype(jnp.bfloat16)
        ff = jnp.zeros((MP, D), jnp.float32)
        nchunks = (F + FFN_CHUNK - 1) // FFN_CHUNK
        for c in range(nchunks):
            lo = c * FFN_CHUNK
            sz = min(FFN_CHUNK, F - lo)
            h1 = (jnp.dot(xb, w1_ref[l, :, lo:lo + sz],
                          preferred_element_type=jnp.float32)
                  + b1_ref[l, :, lo:lo + sz])
            h1 = jnp.maximum(h1, 0.0)
            ff = ff + jnp.dot(h1.astype(jnp.bfloat16), w2_ref[l, lo:lo + sz, :],
                              preferred_element_type=jnp.float32)
        x = _layernorm(x + ff + b2_ref[l], ln2g_ref[l], ln2b_ref[l])

    # ---- classifier head on the CLS rows (static aligned slice) --------------
    cls_x = x[B * T:B * T + B, :]                              # (B, D)
    h = jnp.maximum(
        jnp.dot(cls_x, wd1_ref[...], preferred_element_type=jnp.float32)
        + bd1_ref[...], 0.0)
    y = jnp.dot(h, wd2_ref[...], preferred_element_type=jnp.float32) + bd2_ref[...]
    o_ref[...] = 1.0 / (1.0 + jnp.exp(-y))                     # sigmoid


def backend_forward(seq, params):
    """seq: (B, C, T) float32 -- same layout PyTorch's forward receives."""
    B, C, T = seq.shape
    D = C
    S = T + 1
    MP = ((B * S + 7) // 8) * 8
    n_class = params["w_d2"].shape[1]
    expand, smask, reduce_, hmask = _attention_constants(B, T, D, NUM_HEADS, MP)

    vmem = pl.BlockSpec(memory_space=pltpu.MemorySpace.VMEM)
    return pl.pallas_call(
        backend_kernel,
        out_shape=jax.ShapeDtypeStruct((B, n_class), jnp.float32),
        in_specs=[vmem] * 22,
        out_specs=vmem,
        scratch_shapes=[pltpu.VMEM((MP, D), jnp.float32)],
    )(seq, params["cls"], expand, smask, reduce_, hmask,
      params["wqkv"], params["bqkv"], params["wo"], params["bo"],
      params["ln1_g"], params["ln1_b"],
      params["w1"], params["b1"], params["w2"], params["b2"],
      params["ln2_g"], params["ln2_b"],
      params["w_d1"], params["b_d1"], params["w_d2"], params["b_d2"])


# -----------------------------------------------------------------------------
# Parameters: "raw" torch-like weights (x @ W convention) + kernel packing
# -----------------------------------------------------------------------------
def init_raw_params(key, D, F, C, n_class, num_layers=NUM_LAYERS):
    # NOTE: placeholder deterministic init (does not replicate torch defaults /
    # torch.manual_seed(42) CLS values) -- kernel semantics are what matter here.
    keys = iter(jax.random.split(key, 64))

    def w(shape, scale=0.05):
        return (scale * jax.random.normal(next(keys), shape)).astype(jnp.float32)

    def stack(shape, scale=0.05):
        return jnp.stack([w(shape, scale) for _ in range(num_layers)], axis=0)

    return dict(
        wq=stack((D, D)), bq=stack((1, D)),
        wk=stack((D, D)), bk=stack((1, D)),
        wv=stack((D, D)), bv=stack((1, D)),
        wo=stack((D, D)), bo=stack((1, D)),
        ln1_g=jnp.ones((num_layers, 1, D), jnp.float32),
        ln1_b=jnp.zeros((num_layers, 1, D), jnp.float32),
        w1=stack((D, F)), b1=stack((1, F)),
        w2=stack((F, D)), b2=stack((1, D)),
        ln2_g=jnp.ones((num_layers, 1, D), jnp.float32),
        ln2_b=jnp.zeros((num_layers, 1, D), jnp.float32),
        cls=jax.random.uniform(next(keys), (1, D), dtype=jnp.float32),
        w_d1=w((D, C)), b_d1=w((1, C)),
        w_d2=w((C, n_class)), b_d2=w((1, n_class)),
    )


def prepare_kernel_params(raw, num_heads=NUM_HEADS):
    """Fuse QKV (with 1/sqrt(head_dim) pre-folded into q) and cast FFN to bf16."""
    D = raw["wq"].shape[-1]
    scale = 1.0 / math.sqrt(D // num_heads)
    p = {k: v for k, v in raw.items()
         if k not in ("wq", "bq", "wk", "bk", "wv", "bv")}
    p["wqkv"] = jnp.concatenate([raw["wq"] * scale, raw["wk"], raw["wv"]], axis=-1)
    p["bqkv"] = jnp.concatenate([raw["bq"] * scale, raw["bk"], raw["bv"]], axis=-1)
    p["w1"] = raw["w1"].astype(jnp.bfloat16)
    p["w2"] = raw["w2"].astype(jnp.bfloat16)   # already (F, D): MXU-native
    return p


# -----------------------------------------------------------------------------
# Pure-JAX reference (mirrors the PyTorch module, f32 everywhere)
# -----------------------------------------------------------------------------
def reference_forward(seq, raw):
    B, C, T = seq.shape
    D = C
    H = NUM_HEADS
    HD = D // H
    S = T + 1
    x = jnp.transpose(seq, (2, 0, 1))                        # (T, B, D)
    cls = jnp.broadcast_to(raw["cls"][None, :, :], (1, B, D))
    x = jnp.concatenate([cls, x], axis=0)                    # (S, B, D)
    for l in range(NUM_LAYERS):
        q = (x @ raw["wq"][l] + raw["bq"][l]).reshape(S, B, H, HD) / math.sqrt(HD)
        k = (x @ raw["wk"][l] + raw["bk"][l]).reshape(S, B, H, HD)
        v = (x @ raw["wv"][l] + raw["bv"][l]).reshape(S, B, H, HD)
        att = jax.nn.softmax(jnp.einsum("qbhd,kbhd->bhqk", q, k), axis=-1)
        o = jnp.einsum("bhqk,kbhd->qbhd", att, v).reshape(S, B, D)
        o = o @ raw["wo"][l] + raw["bo"][l]
        x = _layernorm(x + o, raw["ln1_g"][l], raw["ln1_b"][l])
        h1 = jax.nn.relu(x @ raw["w1"][l] + raw["b1"][l])
        ff = h1 @ raw["w2"][l] + raw["b2"][l]
        x = _layernorm(x + ff, raw["ln2_g"][l], raw["ln2_b"][l])
    c = x[0]                                                 # CLS outputs (B, D)
    h = jax.nn.relu(c @ raw["w_d1"] + raw["b_d1"])
    return jax.nn.sigmoid(h @ raw["w_d2"] + raw["b_d2"])


if __name__ == "__main__":
    B, C, T = 2, 32, 8          # batch, frontend_out_channels, time frames
    n_class = 10
    D = C                       # m = 1 (recurrent_units=None, not bidirectional)
    F = 2048                    # PyTorch TransformerEncoderLayer default dim_feedforward

    key = jax.random.PRNGKey(0)
    k_in, k_par = jax.random.split(key)
    seq = jax.random.normal(k_in, (B, C, T), dtype=jnp.float32)
    raw = init_raw_params(k_par, D, F, C, n_class)
    kparams = prepare_kernel_params(raw)

    fwd = jax.jit(backend_forward)
    out = jax.block_until_ready(fwd(seq, kparams))

    assert out.shape == (B, n_class)
    assert bool(jnp.all(jnp.isfinite(out)))
    assert bool(jnp.all((out >= 0.0) & (out <= 1.0)))

    # Loose tolerance: kernel uses bf16 FFN weights/activations and an
    # approximate (EUP) reciprocal in the softmax denominator.
    ref = reference_forward(seq, raw)
    np.testing.assert_allclose(np.asarray(out), np.asarray(ref), atol=5e-2)

    print("KERNEL_OK")
</pallas_src>

<mosaic_0001>
module attributes {stable_mosaic.version = 11 : i64} {
  func.func @backend_kernel(%arg0: memref<2x32x8xf32, #tpu.memory_space<vmem>>, %arg1: memref<1x32xf32, #tpu.memory_space<vmem>>, %arg2: memref<144x24xf32, #tpu.memory_space<vmem>>, %arg3: memref<144x24xf32, #tpu.memory_space<vmem>>, %arg4: memref<24x144xf32, #tpu.memory_space<vmem>>, %arg5: memref<144x32xf32, #tpu.memory_space<vmem>>, %arg6: memref<2x32x96xf32, #tpu.memory_space<vmem>>, %arg7: memref<2x1x96xf32, #tpu.memory_space<vmem>>, %arg8: memref<2x32x32xf32, #tpu.memory_space<vmem>>, %arg9: memref<2x1x32xf32, #tpu.memory_space<vmem>>, %arg10: memref<2x1x32xf32, #tpu.memory_space<vmem>>, %arg11: memref<2x1x32xf32, #tpu.memory_space<vmem>>, %arg12: memref<2x32x2048xbf16, #tpu.memory_space<vmem>>, %arg13: memref<2x1x2048xf32, #tpu.memory_space<vmem>>, %arg14: memref<2x2048x32xbf16, #tpu.memory_space<vmem>>, %arg15: memref<2x1x32xf32, #tpu.memory_space<vmem>>, %arg16: memref<2x1x32xf32, #tpu.memory_space<vmem>>, %arg17: memref<2x1x32xf32, #tpu.memory_space<vmem>>, %arg18: memref<32x32xf32, #tpu.memory_space<vmem>>, %arg19: memref<1x32xf32, #tpu.memory_space<vmem>>, %arg20: memref<32x10xf32, #tpu.memory_space<vmem>>, %arg21: memref<1x10xf32, #tpu.memory_space<vmem>>, %arg22: memref<2x10xf32, #tpu.memory_space<vmem>>, %arg23: memref<24x32xf32, #tpu.memory_space<vmem>>) attributes {dimension_semantics = [], scalar_prefetch = 0 : i64, scratch_operands = 1 : i64, tpu.core_type = #tpu.core_type<tc>} {
    %cst = arith.constant 0.000000e+00 : f32
    %0 = vector.broadcast %cst : f32 to vector<24x32xf32>
    %c0 = arith.constant 0 : index
    %c0_0 = arith.constant 0 : index
    %1 = vector.load %arg23[%c0, %c0_0] : memref<24x32xf32, #tpu.memory_space<vmem>>, vector<24x32xf32>
    tpu.vector_store %arg23[%c0, %c0_0], %0 {strides = array<i32>} : memref<24x32xf32, #tpu.memory_space<vmem>>, vector<24x32xf32>,
    %c0_1 = arith.constant 0 : index
    %c0_2 = arith.constant 0 : index
    %c0_3 = arith.constant 0 : index
    %2 = vector.load %arg0[%c0_1, %c0_2, %c0_3] : memref<2x32x8xf32, #tpu.memory_space<vmem>>, vector<1x32x8xf32>
    %3 = vector.shape_cast %2 : vector<1x32x8xf32> to vector<32x8xf32>
    %4 = tpu.transpose %3, [1, 0] : vector<32x8xf32> -> vector<8x32xf32>
    %c0_4 = arith.constant 0 : index
    %c0_5 = arith.constant 0 : index
    %5 = vector.load %arg23[%c0_4, %c0_5] : memref<24x32xf32, #tpu.memory_space<vmem>>, vector<8x32xf32>
    tpu.vector_store %arg23[%c0_4, %c0_5], %4 {strides = array<i32>} : memref<24x32xf32, #tpu.memory_space<vmem>>, vector<8x32xf32>,
    %c1 = arith.constant 1 : index
    %c0_6 = arith.constant 0 : index
    %c0_7 = arith.constant 0 : index
    %6 = vector.load %arg0[%c1, %c0_6, %c0_7] : memref<2x32x8xf32, #tpu.memory_space<vmem>>, vector<1x32x8xf32>
    %7 = vector.shape_cast %6 : vector<1x32x8xf32> to vector<32x8xf32>
    %8 = tpu.transpose %7, [1, 0] : vector<32x8xf32> -> vector<8x32xf32>
    %c8 = arith.constant 8 : index
    %c0_8 = arith.constant 0 : index
    %9 = vector.load %arg23[%c8, %c0_8] : memref<24x32xf32, #tpu.memory_space<vmem>>, vector<8x32xf32>
    tpu.vector_store %arg23[%c8, %c0_8], %8 {strides = array<i32>} : memref<24x32xf32, #tpu.memory_space<vmem>>, vector<8x32xf32>,
    %c0_9 = arith.constant 0 : index
    %c0_10 = arith.constant 0 : index
    %10 = vector.load %arg1[%c0_9, %c0_10] : memref<1x32xf32, #tpu.memory_space<vmem>>, vector<1x32xf32>
    %11 = vector.shape_cast %10 : vector<1x32xf32> to vector<1x32xf32>
    %12 = vector.broadcast %11 : vector<1x32xf32> to vector<2x32xf32>
    %c16 = arith.constant 16 : index
    %c0_11 = arith.constant 0 : index
    %13 = vector.load %arg23[%c16, %c0_11] : memref<24x32xf32, #tpu.memory_space<vmem>>, vector<2x32xf32>
    tpu.vector_store %arg23[%c16, %c0_11], %12 {strides = array<i32>} : memref<24x32xf32, #tpu.memory_space<vmem>>, vector<2x32xf32>,
    %c0_12 = arith.constant 0 : index
    %c0_13 = arith.constant 0 : index
    %14 = vector.load %arg23[%c0_12, %c0_13] : memref<24x32xf32, #tpu.memory_space<vmem>>, vector<24x32xf32>
    %c0_14 = arith.constant 0 : index
    %c0_15 = arith.constant 0 : index
    %15 = vector.load %arg2[%c0_14, %c0_15] : memref<144x24xf32, #tpu.memory_space<vmem>>, vector<144x24xf32>
    %c0_16 = arith.constant 0 : index
    %c0_17 = arith.constant 0 : index
    %16 = vector.load %arg3[%c0_16, %c0_17] : memref<144x24xf32, #tpu.memory_space<vmem>>, vector<144x24xf32>
    %c0_18 = arith.constant 0 : index
    %c0_19 = arith.constant 0 : index
    %17 = vector.load %arg4[%c0_18, %c0_19] : memref<24x144xf32, #tpu.memory_space<vmem>>, vector<24x144xf32>
    %c0_20 = arith.constant 0 : index
    %c0_21 = arith.constant 0 : index
    %18 = vector.load %arg5[%c0_20, %c0_21] : memref<144x32xf32, #tpu.memory_space<vmem>>, vector<144x32xf32>
    %c0_22 = arith.constant 0 : index
    %c0_23 = arith.constant 0 : index
    %c0_24 = arith.constant 0 : index
    %19 = vector.load %arg6[%c0_22, %c0_23, %c0_24] : memref<2x32x96xf32, #tpu.memory_space<vmem>>, vector<1x32x96xf32>
    %20 = vector.shape_cast %19 : vector<1x32x96xf32> to vector<32x96xf32>
    %cst_25 = arith.constant dense<0.000000e+00> : vector<24x96xf32>
    %21 = tpu.matmul %14, %20, %cst_25 {dimension_numbers = #tpu.dot_dimension_numbers<[1], [0], [0], [1], [0, 0, 1, 1], [], []>} : vector<24x32xf32>, vector<32x96xf32>, vector<24x96xf32> -> vector<24x96xf32>
    %c0_26 = arith.constant 0 : index
    %c0_27 = arith.constant 0 : index
    %c0_28 = arith.constant 0 : index
    %22 = vector.load %arg7[%c0_26, %c0_27, %c0_28] : memref<2x1x96xf32, #tpu.memory_space<vmem>>, vector<1x1x96xf32>
    %23 = vector.shape_cast %22 : vector<1x1x96xf32> to vector<1x96xf32>
    %24 = vector.broadcast %23 : vector<1x96xf32> to vector<24x96xf32>
    %25 = arith.addf %21, %24 : vector<24x96xf32>
    %26 = vector.extract_strided_slice %25 {offsets = [0, 0], sizes = [24, 32], strides = [1, 1]} : vector<24x96xf32> to vector<24x32xf32>
    %27 = vector.extract_strided_slice %25 {offsets = [0, 32], sizes = [24, 32], strides = [1, 1]} : vector<24x96xf32> to vector<24x32xf32>
    %28 = vector.extract_strided_slice %25 {offsets = [0, 64], sizes = [24, 32], strides = [1, 1]} : vector<24x96xf32> to vector<24x32xf32>
    %cst_29 = arith.constant dense<0.000000e+00> : vector<144x32xf32>
    %29 = tpu.matmul %15, %26, %cst_29 {dimension_numbers = #tpu.dot_dimension_numbers<[1], [0], [0], [1], [0, 0, 1, 1], [], []>} : vector<144x24xf32>, vector<24x32xf32>, vector<144x32xf32> -> vector<144x32xf32>
    %30 = arith.mulf %29, %18 : vector<144x32xf32>
    %cst_30 = arith.constant dense<0.000000e+00> : vector<144x24xf32>
    %31 = tpu.matmul %30, %27, %cst_30 {dimension_numbers = #tpu.dot_dimension_numbers<[1], [1], [0], [0], [0, 0, 1, 0], [], []>} : vector<144x32xf32>, vector<24x32xf32>, vector<144x24xf32> -> vector<144x24xf32>
    %32 = arith.addf %31, %16 : vector<144x24xf32>
    %cst_31 = arith.constant dense<0xFF800000> : vector<144xf32>
    %33 = vector.multi_reduction <maximumf>, %32, %cst_31 [1] : vector<144x24xf32> to vector<144xf32>
    %34 = vector.shape_cast %33 : vector<144xf32> to vector<144x1xf32>
    %35 = vector.broadcast %34 : vector<144x1xf32> to vector<144x24xf32>
    %36 = arith.subf %32, %35 : vector<144x24xf32>
    %37 = math.exp %36 : vector<144x24xf32>
    %cst_32 = arith.constant dense<0.000000e+00> : vector<144xf32>
    %38 = vector.multi_reduction <add>, %37, %cst_32 [1] : vector<144x24xf32> to vector<144xf32>
    %39 = vector.shape_cast %38 : vector<144xf32> to vector<144x1xf32>
    %40 = tpu.reciprocal %39 {approx = true} : vector<144x1xf32> -> vector<144x1xf32>
    %41 = vector.broadcast %40 : vector<144x1xf32> to vector<144x24xf32>
    %42 = arith.mulf %37, %41 : vector<144x24xf32>
    %cst_33 = arith.constant dense<0.000000e+00> : vector<144x32xf32>
    %43 = tpu.matmul %42, %28, %cst_33 {dimension_numbers = #tpu.dot_dimension_numbers<[1], [0], [0], [1], [0, 0, 1, 1], [], []>} : vector<144x24xf32>, vector<24x32xf32>, vector<144x32xf32> -> vector<144x32xf32>
    %44 = arith.mulf %43, %18 : vector<144x32xf32>
    %cst_34 = arith.constant dense<0.000000e+00> : vector<24x32xf32>
    %45 = tpu.matmul %17, %44, %cst_34 {dimension_numbers = #tpu.dot_dimension_numbers<[1], [0], [0], [1], [0, 0, 1, 1], [], []>} : vector<24x144xf32>, vector<144x32xf32>, vector<24x32xf32> -> vector<24x32xf32>
    %c0_35 = arith.constant 0 : index
    %c0_36 = arith.constant 0 : index
    %c0_37 = arith.constant 0 : index
    %46 = vector.load %arg8[%c0_35, %c0_36, %c0_37] : memref<2x32x32xf32, #tpu.memory_space<vmem>>, vector<1x32x32xf32>
    %47 = vector.shape_cast %46 : vector<1x32x32xf32> to vector<32x32xf32>
    %cst_38 = arith.constant dense<0.000000e+00> : vector<24x32xf32>
    %48 = tpu.matmul %45, %47, %cst_38 {dimension_numbers = #tpu.dot_dimension_numbers<[1], [0], [0], [1], [0, 0, 1, 1], [], []>} : vector<24x32xf32>, vector<32x32xf32>, vector<24x32xf32> -> vector<24x32xf32>
    %c0_39 = arith.constant 0 : index
    %c0_40 = arith.constant 0 : index
    %c0_41 = arith.constant 0 : index
    %49 = vector.load %arg9[%c0_39, %c0_40, %c0_41] : memref<2x1x32xf32, #tpu.memory_space<vmem>>, vector<1x1x32xf32>
    %50 = vector.shape_cast %49 : vector<1x1x32xf32> to vector<1x32xf32>
    %51 = vector.broadcast %50 : vector<1x32xf32> to vector<24x32xf32>
    %52 = arith.addf %48, %51 : vector<24x32xf32>
    %53 = arith.addf %14, %52 : vector<24x32xf32>
    %c0_42 = arith.constant 0 : index
    %c0_43 = arith.constant 0 : index
    %c0_44 = arith.constant 0 : index
    %54 = vector.load %arg10[%c0_42, %c0_43, %c0_44] : memref<2x1x32xf32, #tpu.memory_space<vmem>>, vector<1x1x32xf32>
    %55 = vector.shape_cast %54 : vector<1x1x32xf32> to vector<1x32xf32>
    %c0_45 = arith.constant 0 : index
    %c0_46 = arith.constant 0 : index
    %c0_47 = arith.constant 0 : index
    %56 = vector.load %arg11[%c0_45, %c0_46, %c0_47] : memref<2x1x32xf32, #tpu.memory_space<vmem>>, vector<1x1x32xf32>
    %57 = vector.shape_cast %56 : vector<1x1x32xf32> to vector<1x32xf32>
    %cst_48 = arith.constant dense<0.000000e+00> : vector<24xf32>
    %58 = vector.multi_reduction <add>, %53, %cst_48 [1] : vector<24x32xf32> to vector<24xf32>
    %59 = vector.shape_cast %58 : vector<24xf32> to vector<24x1xf32>
    %cst_49 = arith.constant 3.200000e+01 : f32
    %60 = vector.broadcast %cst_49 : f32 to vector<24x1xf32>
    %61 = arith.divf %59, %60 : vector<24x1xf32>
    %62 = vector.broadcast %61 : vector<24x1xf32> to vector<24x32xf32>
    %63 = arith.subf %53, %62 : vector<24x32xf32>
    %64 = arith.mulf %63, %63 : vector<24x32xf32>
    %cst_50 = arith.constant dense<0.000000e+00> : vector<24xf32>
    %65 = vector.multi_reduction <add>, %64, %cst_50 [1] : vector<24x32xf32> to vector<24xf32>
    %66 = vector.shape_cast %65 : vector<24xf32> to vector<24x1xf32>
    %cst_51 = arith.constant 3.200000e+01 : f32
    %67 = vector.broadcast %cst_51 : f32 to vector<24x1xf32>
    %68 = arith.divf %66, %67 : vector<24x1xf32>
    %cst_52 = arith.constant 9.99999974E-6 : f32
    %69 = vector.broadcast %cst_52 : f32 to vector<24x1xf32>
    %70 = arith.addf %68, %69 : vector<24x1xf32>
    %71 = math.rsqrt %70 : vector<24x1xf32>
    %72 = vector.broadcast %71 : vector<24x1xf32> to vector<24x32xf32>
    %73 = arith.mulf %63, %72 : vector<24x32xf32>
    %74 = vector.broadcast %55 : vector<1x32xf32> to vector<24x32xf32>
    %75 = arith.mulf %73, %74 : vector<24x32xf32>
    %76 = vector.broadcast %57 : vector<1x32xf32> to vector<24x32xf32>
    %77 = arith.addf %75, %76 : vector<24x32xf32>
    %78 = arith.truncf %77 : vector<24x32xf32> to vector<24x32xbf16>
    %cst_53 = arith.constant 0.000000e+00 : f32
    %79 = vector.broadcast %cst_53 : f32 to vector<24x32xf32>
    %c0_54 = arith.constant 0 : index
    %c0_55 = arith.constant 0 : index
    %c0_56 = arith.constant 0 : index
    %80 = vector.load %arg12[%c0_54, %c0_55, %c0_56] : memref<2x32x2048xbf16, #tpu.memory_space<vmem>>, vector<1x32x512xbf16>
    %81 = vector.shape_cast %80 : vector<1x32x512xbf16> to vector<32x512xbf16>
    %cst_57 = arith.constant dense<0.000000e+00> : vector<24x512xf32>
    %82 = tpu.matmul %78, %81, %cst_57 {dimension_numbers = #tpu.dot_dimension_numbers<[1], [0], [0], [1], [0, 0, 1, 1], [], []>} : vector<24x32xbf16>, vector<32x512xbf16>, vector<24x512xf32> -> vector<24x512xf32>
    %c0_58 = arith.constant 0 : index
    %c0_59 = arith.constant 0 : index
    %c0_60 = arith.constant 0 : index
    %83 = vector.load %arg13[%c0_58, %c0_59, %c0_60] : memref<2x1x2048xf32, #tpu.memory_space<vmem>>, vector<1x1x512xf32>
    %84 = vector.shape_cast %83 : vector<1x1x512xf32> to vector<1x512xf32>
    %85 = vector.broadcast %84 : vector<1x512xf32> to vector<24x512xf32>
    %86 = arith.addf %82, %85 : vector<24x512xf32>
    %cst_61 = arith.constant 0.000000e+00 : f32
    %87 = vector.broadcast %cst_61 : f32 to vector<24x512xf32>
    %88 = arith.maximumf %86, %87 : vector<24x512xf32>
    %89 = arith.truncf %88 : vector<24x512xf32> to vector<24x512xbf16>
    %c0_62 = arith.constant 0 : index
    %c0_63 = arith.constant 0 : index
    %c0_64 = arith.constant 0 : index
    %90 = vector.load %arg14[%c0_62, %c0_63, %c0_64] : memref<2x2048x32xbf16, #tpu.memory_space<vmem>>, vector<1x512x32xbf16>
    %91 = vector.shape_cast %90 : vector<1x512x32xbf16> to vector<512x32xbf16>
    %cst_65 = arith.constant dense<0.000000e+00> : vector<24x32xf32>
    %92 = tpu.matmul %89, %91, %cst_65 {dimension_numbers = #tpu.dot_dimension_numbers<[1], [0], [0], [1], [0, 0, 1, 1], [], []>} : vector<24x512xbf16>, vector<512x32xbf16>, vector<24x32xf32> -> vector<24x32xf32>
    %93 = arith.addf %79, %92 : vector<24x32xf32>
    %c0_66 = arith.constant 0 : index
    %c0_67 = arith.constant 0 : index
    %c512 = arith.constant 512 : index
    %94 = vector.load %arg12[%c0_66, %c0_67, %c512] : memref<2x32x2048xbf16, #tpu.memory_space<vmem>>, vector<1x32x512xbf16>
    %95 = vector.shape_cast %94 : vector<1x32x512xbf16> to vector<32x512xbf16>
    %cst_68 = arith.constant dense<0.000000e+00> : vector<24x512xf32>
    %96 = tpu.matmul %78, %95, %cst_68 {dimension_numbers = #tpu.dot_dimension_numbers<[1], [0], [0], [1], [0, 0, 1, 1], [], []>} : vector<24x32xbf16>, vector<32x512xbf16>, vector<24x512xf32> -> vector<24x512xf32>
    %c0_69 = arith.constant 0 : index
    %c0_70 = arith.constant 0 : index
    %c512_71 = arith.constant 512 : index
    %97 = vector.load %arg13[%c0_69, %c0_70, %c512_71] : memref<2x1x2048xf32, #tpu.memory_space<vmem>>, vector<1x1x512xf32>
    %98 = vector.shape_cast %97 : vector<1x1x512xf32> to vector<1x512xf32>
    %99 = vector.broadcast %98 : vector<1x512xf32> to vector<24x512xf32>
    %100 = arith.addf %96, %99 : vector<24x512xf32>
    %cst_72 = arith.constant 0.000000e+00 : f32
    %101 = vector.broadcast %cst_72 : f32 to vector<24x512xf32>
    %102 = arith.maximumf %100, %101 : vector<24x512xf32>
    %103 = arith.truncf %102 : vector<24x512xf32> to vector<24x512xbf16>
    %c0_73 = arith.constant 0 : index
    %c512_74 = arith.constant 512 : index
    %c0_75 = arith.constant 0 : index
    %104 = vector.load %arg14[%c0_73, %c512_74, %c0_75] : memref<2x2048x32xbf16, #tpu.memory_space<vmem>>, vector<1x512x32xbf16>
    %105 = vector.shape_cast %104 : vector<1x512x32xbf16> to vector<512x32xbf16>
    %cst_76 = arith.constant dense<0.000000e+00> : vector<24x32xf32>
    %106 = tpu.matmul %103, %105, %cst_76 {dimension_numbers = #tpu.dot_dimension_numbers<[1], [0], [0], [1], [0, 0, 1, 1], [], []>} : vector<24x512xbf16>, vector<512x32xbf16>, vector<24x32xf32> -> vector<24x32xf32>
    %107 = arith.addf %93, %106 : vector<24x32xf32>
    %c0_77 = arith.constant 0 : index
    %c0_78 = arith.constant 0 : index
    %c1024 = arith.constant 1024 : index
    %108 = vector.load %arg12[%c0_77, %c0_78, %c1024] : memref<2x32x2048xbf16, #tpu.memory_space<vmem>>, vector<1x32x512xbf16>
    %109 = vector.shape_cast %108 : vector<1x32x512xbf16> to vector<32x512xbf16>
    %cst_79 = arith.constant dense<0.000000e+00> : vector<24x512xf32>
    %110 = tpu.matmul %78, %109, %cst_79 {dimension_numbers = #tpu.dot_dimension_numbers<[1], [0], [0], [1], [0, 0, 1, 1], [], []>} : vector<24x32xbf16>, vector<32x512xbf16>, vector<24x512xf32> -> vector<24x512xf32>
    %c0_80 = arith.constant 0 : index
    %c0_81 = arith.constant 0 : index
    %c1024_82 = arith.constant 1024 : index
    %111 = vector.load %arg13[%c0_80, %c0_81, %c1024_82] : memref<2x1x2048xf32, #tpu.memory_space<vmem>>, vector<1x1x512xf32>
    %112 = vector.shape_cast %111 : vector<1x1x512xf32> to vector<1x512xf32>
    %113 = vector.broadcast %112 : vector<1x512xf32> to vector<24x512xf32>
    %114 = arith.addf %110, %113 : vector<24x512xf32>
    %cst_83 = arith.constant 0.000000e+00 : f32
    %115 = vector.broadcast %cst_83 : f32 to vector<24x512xf32>
    %116 = arith.maximumf %114, %115 : vector<24x512xf32>
    %117 = arith.truncf %116 : vector<24x512xf32> to vector<24x512xbf16>
    %c0_84 = arith.constant 0 : index
    %c1024_85 = arith.constant 1024 : index
    %c0_86 = arith.constant 0 : index
    %118 = vector.load %arg14[%c0_84, %c1024_85, %c0_86] : memref<2x2048x32xbf16, #tpu.memory_space<vmem>>, vector<1x512x32xbf16>
    %119 = vector.shape_cast %118 : vector<1x512x32xbf16> to vector<512x32xbf16>
    %cst_87 = arith.constant dense<0.000000e+00> : vector<24x32xf32>
    %120 = tpu.matmul %117, %119, %cst_87 {dimension_numbers = #tpu.dot_dimension_numbers<[1], [0], [0], [1], [0, 0, 1, 1], [], []>} : vector<24x512xbf16>, vector<512x32xbf16>, vector<24x32xf32> -> vector<24x32xf32>
    %121 = arith.addf %107, %120 : vector<24x32xf32>
    %c0_88 = arith.constant 0 : index
    %c0_89 = arith.constant 0 : index
    %c1536 = arith.constant 1536 : index
    %122 = vector.load %arg12[%c0_88, %c0_89, %c1536] : memref<2x32x2048xbf16, #tpu.memory_space<vmem>>, vector<1x32x512xbf16>
    %123 = vector.shape_cast %122 : vector<1x32x512xbf16> to vector<32x512xbf16>
    %cst_90 = arith.constant dense<0.000000e+00> : vector<24x512xf32>
    %124 = tpu.matmul %78, %123, %cst_90 {dimension_numbers = #tpu.dot_dimension_numbers<[1], [0], [0], [1], [0, 0, 1, 1], [], []>} : vector<24x32xbf16>, vector<32x512xbf16>, vector<24x512xf32> -> vector<24x512xf32>
    %c0_91 = arith.constant 0 : index
    %c0_92 = arith.constant 0 : index
    %c1536_93 = arith.constant 1536 : index
    %125 = vector.load %arg13[%c0_91, %c0_92, %c1536_93] : memref<2x1x2048xf32, #tpu.memory_space<vmem>>, vector<1x1x512xf32>
    %126 = vector.shape_cast %125 : vector<1x1x512xf32> to vector<1x512xf32>
    %127 = vector.broadcast %126 : vector<1x512xf32> to vector<24x512xf32>
    %128 = arith.addf %124, %127 : vector<24x512xf32>
    %cst_94 = arith.constant 0.000000e+00 : f32
    %129 = vector.broadcast %cst_94 : f32 to vector<24x512xf32>
    %130 = arith.maximumf %128, %129 : vector<24x512xf32>
    %131 = arith.truncf %130 : vector<24x512xf32> to vector<24x512xbf16>
    %c0_95 = arith.constant 0 : index
    %c1536_96 = arith.constant 1536 : index
    %c0_97 = arith.constant 0 : index
    %132 = vector.load %arg14[%c0_95, %c1536_96, %c0_97] : memref<2x2048x32xbf16, #tpu.memory_space<vmem>>, vector<1x512x32xbf16>
    %133 = vector.shape_cast %132 : vector<1x512x32xbf16> to vector<512x32xbf16>
    %cst_98 = arith.constant dense<0.000000e+00> : vector<24x32xf32>
    %134 = tpu.matmul %131, %133, %cst_98 {dimension_numbers = #tpu.dot_dimension_numbers<[1], [0], [0], [1], [0, 0, 1, 1], [], []>} : vector<24x512xbf16>, vector<512x32xbf16>, vector<24x32xf32> -> vector<24x32xf32>
    %135 = arith.addf %121, %134 : vector<24x32xf32>
    %136 = arith.addf %77, %135 : vector<24x32xf32>
    %c0_99 = arith.constant 0 : index
    %c0_100 = arith.constant 0 : index
    %c0_101 = arith.constant 0 : index
    %137 = vector.load %arg15[%c0_99, %c0_100, %c0_101] : memref<2x1x32xf32, #tpu.memory_space<vmem>>, vector<1x1x32xf32>
    %138 = vector.shape_cast %137 : vector<1x1x32xf32> to vector<1x32xf32>
    %139 = vector.broadcast %138 : vector<1x32xf32> to vector<24x32xf32>
    %140 = arith.addf %136, %139 : vector<24x32xf32>
    %c0_102 = arith.constant 0 : index
    %c0_103 = arith.constant 0 : index
    %c0_104 = arith.constant 0 : index
    %141 = vector.load %arg16[%c0_102, %c0_103, %c0_104] : memref<2x1x32xf32, #tpu.memory_space<vmem>>, vector<1x1x32xf32>
    %142 = vector.shape_cast %141 : vector<1x1x32xf32> to vector<1x32xf32>
    %c0_105 = arith.constant 0 : index
    %c0_106 = arith.constant 0 : index
    %c0_107 = arith.constant 0 : index
    %143 = vector.load %arg17[%c0_105, %c0_106, %c0_107] : memref<2x1x32xf32, #tpu.memory_space<vmem>>, vector<1x1x32xf32>
    %144 = vector.shape_cast %143 : vector<1x1x32xf32> to vector<1x32xf32>
    %cst_108 = arith.constant dense<0.000000e+00> : vector<24xf32>
    %145 = vector.multi_reduction <add>, %140, %cst_108 [1] : vector<24x32xf32> to vector<24xf32>
    %146 = vector.shape_cast %145 : vector<24xf32> to vector<24x1xf32>
    %cst_109 = arith.constant 3.200000e+01 : f32
    %147 = vector.broadcast %cst_109 : f32 to vector<24x1xf32>
    %148 = arith.divf %146, %147 : vector<24x1xf32>
    %149 = vector.broadcast %148 : vector<24x1xf32> to vector<24x32xf32>
    %150 = arith.subf %140, %149 : vector<24x32xf32>
    %151 = arith.mulf %150, %150 : vector<24x32xf32>
    %cst_110 = arith.constant dense<0.000000e+00> : vector<24xf32>
    %152 = vector.multi_reduction <add>, %151, %cst_110 [1] : vector<24x32xf32> to vector<24xf32>
    %153 = vector.shape_cast %152 : vector<24xf32> to vector<24x1xf32>
    %cst_111 = arith.constant 3.200000e+01 : f32
    %154 = vector.broadcast %cst_111 : f32 to vector<24x1xf32>
    %155 = arith.divf %153, %154 : vector<24x1xf32>
    %cst_112 = arith.constant 9.99999974E-6 : f32
    %156 = vector.broadcast %cst_112 : f32 to vector<24x1xf32>
    %157 = arith.addf %155, %156 : vector<24x1xf32>
    %158 = math.rsqrt %157 : vector<24x1xf32>
    %159 = vector.broadcast %158 : vector<24x1xf32> to vector<24x32xf32>
    %160 = arith.mulf %150, %159 : vector<24x32xf32>
    %161 = vector.broadcast %142 : vector<1x32xf32> to vector<24x32xf32>
    %162 = arith.mulf %160, %161 : vector<24x32xf32>
    %163 = vector.broadcast %144 : vector<1x32xf32> to vector<24x32xf32>
    %164 = arith.addf %162, %163 : vector<24x32xf32>
    %c1_113 = arith.constant 1 : index
    %c0_114 = arith.constant 0 : index
    %c0_115 = arith.constant 0 : index
    %165 = vector.load %arg6[%c1_113, %c0_114, %c0_115] : memref<2x32x96xf32, #tpu.memory_space<vmem>>, vector<1x32x96xf32>
    %166 = vector.shape_cast %165 : vector<1x32x96xf32> to vector<32x96xf32>
    %cst_116 = arith.constant dense<0.000000e+00> : vector<24x96xf32>
    %167 = tpu.matmul %164, %166, %cst_116 {dimension_numbers = #tpu.dot_dimension_numbers<[1], [0], [0], [1], [0, 0, 1, 1], [], []>} : vector<24x32xf32>, vector<32x96xf32>, vector<24x96xf32> -> vector<24x96xf32>
    %c1_117 = arith.constant 1 : index
    %c0_118 = arith.constant 0 : index
    %c0_119 = arith.constant 0 : index
    %168 = vector.load %arg7[%c1_117, %c0_118, %c0_119] : memref<2x1x96xf32, #tpu.memory_space<vmem>>, vector<1x1x96xf32>
    %169 = vector.shape_cast %168 : vector<1x1x96xf32> to vector<1x96xf32>
    %170 = vector.broadcast %169 : vector<1x96xf32> to vector<24x96xf32>
    %171 = arith.addf %167, %170 : vector<24x96xf32>
    %172 = vector.extract_strided_slice %171 {offsets = [0, 0], sizes = [24, 32], strides = [1, 1]} : vector<24x96xf32> to vector<24x32xf32>
    %173 = vector.extract_strided_slice %171 {offsets = [0, 32], sizes = [24, 32], strides = [1, 1]} : vector<24x96xf32> to vector<24x32xf32>
    %174 = vector.extract_strided_slice %171 {offsets = [0, 64], sizes = [24, 32], strides = [1, 1]} : vector<24x96xf32> to vector<24x32xf32>
    %cst_120 = arith.constant dense<0.000000e+00> : vector<144x32xf32>
    %175 = tpu.matmul %15, %172, %cst_120 {dimension_numbers = #tpu.dot_dimension_numbers<[1], [0], [0], [1], [0, 0, 1, 1], [], []>} : vector<144x24xf32>, vector<24x32xf32>, vector<144x32xf32> -> vector<144x32xf32>
    %176 = arith.mulf %175, %18 : vector<144x32xf32>
    %cst_121 = arith.constant dense<0.000000e+00> : vector<144x24xf32>
    %177 = tpu.matmul %176, %173, %cst_121 {dimension_numbers = #tpu.dot_dimension_numbers<[1], [1], [0], [0], [0, 0, 1, 0], [], []>} : vector<144x32xf32>, vector<24x32xf32>, vector<144x24xf32> -> vector<144x24xf32>
    %178 = arith.addf %177, %16 : vector<144x24xf32>
    %cst_122 = arith.constant dense<0xFF800000> : vector<144xf32>
    %179 = vector.multi_reduction <maximumf>, %178, %cst_122 [1] : vector<144x24xf32> to vector<144xf32>
    %180 = vector.shape_cast %179 : vector<144xf32> to vector<144x1xf32>
    %181 = vector.broadcast %180 : vector<144x1xf32> to vector<144x24xf32>
    %182 = arith.subf %178, %181 : vector<144x24xf32>
    %183 = math.exp %182 : vector<144x24xf32>
    %cst_123 = arith.constant dense<0.000000e+00> : vector<144xf32>
    %184 = vector.multi_reduction <add>, %183, %cst_123 [1] : vector<144x24xf32> to vector<144xf32>
    %185 = vector.shape_cast %184 : vector<144xf32> to vector<144x1xf32>
    %186 = tpu.reciprocal %185 {approx = true} : vector<144x1xf32> -> vector<144x1xf32>
    %187 = vector.broadcast %186 : vector<144x1xf32> to vector<144x24xf32>
    %188 = arith.mulf %183, %187 : vector<144x24xf32>
    %cst_124 = arith.constant dense<0.000000e+00> : vector<144x32xf32>
    %189 = tpu.matmul %188, %174, %cst_124 {dimension_numbers = #tpu.dot_dimension_numbers<[1], [0], [0], [1], [0, 0, 1, 1], [], []>} : vector<144x24xf32>, vector<24x32xf32>, vector<144x32xf32> -> vector<144x32xf32>
    %190 = arith.mulf %189, %18 : vector<144x32xf32>
    %cst_125 = arith.constant dense<0.000000e+00> : vector<24x32xf32>
    %191 = tpu.matmul %17, %190, %cst_125 {dimension_numbers = #tpu.dot_dimension_numbers<[1], [0], [0], [1], [0, 0, 1, 1], [], []>} : vector<24x144xf32>, vector<144x32xf32>, vector<24x32xf32> -> vector<24x32xf32>
    %c1_126 = arith.constant 1 : index
    %c0_127 = arith.constant 0 : index
    %c0_128 = arith.constant 0 : index
    %192 = vector.load %arg8[%c1_126, %c0_127, %c0_128] : memref<2x32x32xf32, #tpu.memory_space<vmem>>, vector<1x32x32xf32>
    %193 = vector.shape_cast %192 : vector<1x32x32xf32> to vector<32x32xf32>
    %cst_129 = arith.constant dense<0.000000e+00> : vector<24x32xf32>
    %194 = tpu.matmul %191, %193, %cst_129 {dimension_numbers = #tpu.dot_dimension_numbers<[1], [0], [0], [1], [0, 0, 1, 1], [], []>} : vector<24x32xf32>, vector<32x32xf32>, vector<24x32xf32> -> vector<24x32xf32>
    %c1_130 = arith.constant 1 : index
    %c0_131 = arith.constant 0 : index
    %c0_132 = arith.constant 0 : index
    %195 = vector.load %arg9[%c1_130, %c0_131, %c0_132] : memref<2x1x32xf32, #tpu.memory_space<vmem>>, vector<1x1x32xf32>
    %196 = vector.shape_cast %195 : vector<1x1x32xf32> to vector<1x32xf32>
    %197 = vector.broadcast %196 : vector<1x32xf32> to vector<24x32xf32>
    %198 = arith.addf %194, %197 : vector<24x32xf32>
    %199 = arith.addf %164, %198 : vector<24x32xf32>
    %c1_133 = arith.constant 1 : index
    %c0_134 = arith.constant 0 : index
    %c0_135 = arith.constant 0 : index
    %200 = vector.load %arg10[%c1_133, %c0_134, %c0_135] : memref<2x1x32xf32, #tpu.memory_space<vmem>>, vector<1x1x32xf32>
    %201 = vector.shape_cast %200 : vector<1x1x32xf32> to vector<1x32xf32>
    %c1_136 = arith.constant 1 : index
    %c0_137 = arith.constant 0 : index
    %c0_138 = arith.constant 0 : index
    %202 = vector.load %arg11[%c1_136, %c0_137, %c0_138] : memref<2x1x32xf32, #tpu.memory_space<vmem>>, vector<1x1x32xf32>
    %203 = vector.shape_cast %202 : vector<1x1x32xf32> to vector<1x32xf32>
    %cst_139 = arith.constant dense<0.000000e+00> : vector<24xf32>
    %204 = vector.multi_reduction <add>, %199, %cst_139 [1] : vector<24x32xf32> to vector<24xf32>
    %205 = vector.shape_cast %204 : vector<24xf32> to vector<24x1xf32>
    %cst_140 = arith.constant 3.200000e+01 : f32
    %206 = vector.broadcast %cst_140 : f32 to vector<24x1xf32>
    %207 = arith.divf %205, %206 : vector<24x1xf32>
    %208 = vector.broadcast %207 : vector<24x1xf32> to vector<24x32xf32>
    %209 = arith.subf %199, %208 : vector<24x32xf32>
    %210 = arith.mulf %209, %209 : vector<24x32xf32>
    %cst_141 = arith.constant dense<0.000000e+00> : vector<24xf32>
    %211 = vector.multi_reduction <add>, %210, %cst_141 [1] : vector<24x32xf32> to vector<24xf32>
    %212 = vector.shape_cast %211 : vector<24xf32> to vector<24x1xf32>
    %cst_142 = arith.constant 3.200000e+01 : f32
    %213 = vector.broadcast %cst_142 : f32 to vector<24x1xf32>
    %214 = arith.divf %212, %213 : vector<24x1xf32>
    %cst_143 = arith.constant 9.99999974E-6 : f32
    %215 = vector.broadcast %cst_143 : f32 to vector<24x1xf32>
    %216 = arith.addf %214, %215 : vector<24x1xf32>
    %217 = math.rsqrt %216 : vector<24x1xf32>
    %218 = vector.broadcast %217 : vector<24x1xf32> to vector<24x32xf32>
    %219 = arith.mulf %209, %218 : vector<24x32xf32>
    %220 = vector.broadcast %201 : vector<1x32xf32> to vector<24x32xf32>
    %221 = arith.mulf %219, %220 : vector<24x32xf32>
    %222 = vector.broadcast %203 : vector<1x32xf32> to vector<24x32xf32>
    %223 = arith.addf %221, %222 : vector<24x32xf32>
    %224 = arith.truncf %223 : vector<24x32xf32> to vector<24x32xbf16>
    %cst_144 = arith.constant 0.000000e+00 : f32
    %225 = vector.broadcast %cst_144 : f32 to vector<24x32xf32>
    %c1_145 = arith.constant 1 : index
    %c0_146 = arith.constant 0 : index
    %c0_147 = arith.constant 0 : index
    %226 = vector.load %arg12[%c1_145, %c0_146, %c0_147] : memref<2x32x2048xbf16, #tpu.memory_space<vmem>>, vector<1x32x512xbf16>
    %227 = vector.shape_cast %226 : vector<1x32x512xbf16> to vector<32x512xbf16>
    %cst_148 = arith.constant dense<0.000000e+00> : vector<24x512xf32>
    %228 = tpu.matmul %224, %227, %cst_148 {dimension_numbers = #tpu.dot_dimension_numbers<[1], [0], [0], [1], [0, 0, 1, 1], [], []>} : vector<24x32xbf16>, vector<32x512xbf16>, vector<24x512xf32> -> vector<24x512xf32>
    %c1_149 = arith.constant 1 : index
    %c0_150 = arith.constant 0 : index
    %c0_151 = arith.constant 0 : index
    %229 = vector.load %arg13[%c1_149, %c0_150, %c0_151] : memref<2x1x2048xf32, #tpu.memory_space<vmem>>, vector<1x1x512xf32>
    %230 = vector.shape_cast %229 : vector<1x1x512xf32> to vector<1x512xf32>
    %231 = vector.broadcast %230 : vector<1x512xf32> to vector<24x512xf32>
    %232 = arith.addf %228, %231 : vector<24x512xf32>
    %cst_152 = arith.constant 0.000000e+00 : f32
    %233 = vector.broadcast %cst_152 : f32 to vector<24x512xf32>
    %234 = arith.maximumf %232, %233 : vector<24x512xf32>
    %235 = arith.truncf %234 : vector<24x512xf32> to vector<24x512xbf16>
    %c1_153 = arith.constant 1 : index
    %c0_154 = arith.constant 0 : index
    %c0_155 = arith.constant 0 : index
    %236 = vector.load %arg14[%c1_153, %c0_154, %c0_155] : memref<2x2048x32xbf16, #tpu.memory_space<vmem>>, vector<1x512x32xbf16>
    %237 = vector.shape_cast %236 : vector<1x512x32xbf16> to vector<512x32xbf16>
    %cst_156 = arith.constant dense<0.000000e+00> : vector<24x32xf32>
    %238 = tpu.matmul %235, %237, %cst_156 {dimension_numbers = #tpu.dot_dimension_numbers<[1], [0], [0], [1], [0, 0, 1, 1], [], []>} : vector<24x512xbf16>, vector<512x32xbf16>, vector<24x32xf32> -> vector<24x32xf32>
    %239 = arith.addf %225, %238 : vector<24x32xf32>
    %c1_157 = arith.constant 1 : index
    %c0_158 = arith.constant 0 : index
    %c512_159 = arith.constant 512 : index
    %240 = vector.load %arg12[%c1_157, %c0_158, %c512_159] : memref<2x32x2048xbf16, #tpu.memory_space<vmem>>, vector<1x32x512xbf16>
    %241 = vector.shape_cast %240 : vector<1x32x512xbf16> to vector<32x512xbf16>
    %cst_160 = arith.constant dense<0.000000e+00> : vector<24x512xf32>
    %242 = tpu.matmul %224, %241, %cst_160 {dimension_numbers = #tpu.dot_dimension_numbers<[1], [0], [0], [1], [0, 0, 1, 1], [], []>} : vector<24x32xbf16>, vector<32x512xbf16>, vector<24x512xf32> -> vector<24x512xf32>
    %c1_161 = arith.constant 1 : index
    %c0_162 = arith.constant 0 : index
    %c512_163 = arith.constant 512 : index
    %243 = vector.load %arg13[%c1_161, %c0_162, %c512_163] : memref<2x1x2048xf32, #tpu.memory_space<vmem>>, vector<1x1x512xf32>
    %244 = vector.shape_cast %243 : vector<1x1x512xf32> to vector<1x512xf32>
    %245 = vector.broadcast %244 : vector<1x512xf32> to vector<24x512xf32>
    %246 = arith.addf %242, %245 : vector<24x512xf32>
    %cst_164 = arith.constant 0.000000e+00 : f32
    %247 = vector.broadcast %cst_164 : f32 to vector<24x512xf32>
    %248 = arith.maximumf %246, %247 : vector<24x512xf32>
    %249 = arith.truncf %248 : vector<24x512xf32> to vector<24x512xbf16>
    %c1_165 = arith.constant 1 : index
    %c512_166 = arith.constant 512 : index
    %c0_167 = arith.constant 0 : index
    %250 = vector.load %arg14[%c1_165, %c512_166, %c0_167] : memref<2x2048x32xbf16, #tpu.memory_space<vmem>>, vector<1x512x32xbf16>
    %251 = vector.shape_cast %250 : vector<1x512x32xbf16> to vector<512x32xbf16>
    %cst_168 = arith.constant dense<0.000000e+00> : vector<24x32xf32>
    %252 = tpu.matmul %249, %251, %cst_168 {dimension_numbers = #tpu.dot_dimension_numbers<[1], [0], [0], [1], [0, 0, 1, 1], [], []>} : vector<24x512xbf16>, vector<512x32xbf16>, vector<24x32xf32> -> vector<24x32xf32>
    %253 = arith.addf %239, %252 : vector<24x32xf32>
    %c1_169 = arith.constant 1 : index
    %c0_170 = arith.constant 0 : index
    %c1024_171 = arith.constant 1024 : index
    %254 = vector.load %arg12[%c1_169, %c0_170, %c1024_171] : memref<2x32x2048xbf16, #tpu.memory_space<vmem>>, vector<1x32x512xbf16>
    %255 = vector.shape_cast %254 : vector<1x32x512xbf16> to vector<32x512xbf16>
    %cst_172 = arith.constant dense<0.000000e+00> : vector<24x512xf32>
    %256 = tpu.matmul %224, %255, %cst_172 {dimension_numbers = #tpu.dot_dimension_numbers<[1], [0], [0], [1], [0, 0, 1, 1], [], []>} : vector<24x32xbf16>, vector<32x512xbf16>, vector<24x512xf32> -> vector<24x512xf32>
    %c1_173 = arith.constant 1 : index
    %c0_174 = arith.constant 0 : index
    %c1024_175 = arith.constant 1024 : index
    %257 = vector.load %arg13[%c1_173, %c0_174, %c1024_175] : memref<2x1x2048xf32, #tpu.memory_space<vmem>>, vector<1x1x512xf32>
    %258 = vector.shape_cast %257 : vector<1x1x512xf32> to vector<1x512xf32>
    %259 = vector.broadcast %258 : vector<1x512xf32> to vector<24x512xf32>
    %260 = arith.addf %256, %259 : vector<24x512xf32>
    %cst_176 = arith.constant 0.000000e+00 : f32
    %261 = vector.broadcast %cst_176 : f32 to vector<24x512xf32>
    %262 = arith.maximumf %260, %261 : vector<24x512xf32>
    %263 = arith.truncf %262 : vector<24x512xf32> to vector<24x512xbf16>
    %c1_177 = arith.constant 1 : index
    %c1024_178 = arith.constant 1024 : index
    %c0_179 = arith.constant 0 : index
    %264 = vector.load %arg14[%c1_177, %c1024_178, %c0_179] : memref<2x2048x32xbf16, #tpu.memory_space<vmem>>, vector<1x512x32xbf16>
    %265 = vector.shape_cast %264 : vector<1x512x32xbf16> to vector<512x32xbf16>
    %cst_180 = arith.constant dense<0.000000e+00> : vector<24x32xf32>
    %266 = tpu.matmul %263, %265, %cst_180 {dimension_numbers = #tpu.dot_dimension_numbers<[1], [0], [0], [1], [0, 0, 1, 1], [], []>} : vector<24x512xbf16>, vector<512x32xbf16>, vector<24x32xf32> -> vector<24x32xf32>
    %267 = arith.addf %253, %266 : vector<24x32xf32>
    %c1_181 = arith.constant 1 : index
    %c0_182 = arith.constant 0 : index
    %c1536_183 = arith.constant 1536 : index
    %268 = vector.load %arg12[%c1_181, %c0_182, %c1536_183] : memref<2x32x2048xbf16, #tpu.memory_space<vmem>>, vector<1x32x512xbf16>
    %269 = vector.shape_cast %268 : vector<1x32x512xbf16> to vector<32x512xbf16>
    %cst_184 = arith.constant dense<0.000000e+00> : vector<24x512xf32>
    %270 = tpu.matmul %224, %269, %cst_184 {dimension_numbers = #tpu.dot_dimension_numbers<[1], [0], [0], [1], [0, 0, 1, 1], [], []>} : vector<24x32xbf16>, vector<32x512xbf16>, vector<24x512xf32> -> vector<24x512xf32>
    %c1_185 = arith.constant 1 : index
    %c0_186 = arith.constant 0 : index
    %c1536_187 = arith.constant 1536 : index
    %271 = vector.load %arg13[%c1_185, %c0_186, %c1536_187] : memref<2x1x2048xf32, #tpu.memory_space<vmem>>, vector<1x1x512xf32>
    %272 = vector.shape_cast %271 : vector<1x1x512xf32> to vector<1x512xf32>
    %273 = vector.broadcast %272 : vector<1x512xf32> to vector<24x512xf32>
    %274 = arith.addf %270, %273 : vector<24x512xf32>
    %cst_188 = arith.constant 0.000000e+00 : f32
    %275 = vector.broadcast %cst_188 : f32 to vector<24x512xf32>
    %276 = arith.maximumf %274, %275 : vector<24x512xf32>
    %277 = arith.truncf %276 : vector<24x512xf32> to vector<24x512xbf16>
    %c1_189 = arith.constant 1 : index
    %c1536_190 = arith.constant 1536 : index
    %c0_191 = arith.constant 0 : index
    %278 = vector.load %arg14[%c1_189, %c1536_190, %c0_191] : memref<2x2048x32xbf16, #tpu.memory_space<vmem>>, vector<1x512x32xbf16>
    %279 = vector.shape_cast %278 : vector<1x512x32xbf16> to vector<512x32xbf16>
    %cst_192 = arith.constant dense<0.000000e+00> : vector<24x32xf32>
    %280 = tpu.matmul %277, %279, %cst_192 {dimension_numbers = #tpu.dot_dimension_numbers<[1], [0], [0], [1], [0, 0, 1, 1], [], []>} : vector<24x512xbf16>, vector<512x32xbf16>, vector<24x32xf32> -> vector<24x32xf32>
    %281 = arith.addf %267, %280 : vector<24x32xf32>
    %282 = arith.addf %223, %281 : vector<24x32xf32>
    %c1_193 = arith.constant 1 : index
    %c0_194 = arith.constant 0 : index
    %c0_195 = arith.constant 0 : index
    %283 = vector.load %arg15[%c1_193, %c0_194, %c0_195] : memref<2x1x32xf32, #tpu.memory_space<vmem>>, vector<1x1x32xf32>
    %284 = vector.shape_cast %283 : vector<1x1x32xf32> to vector<1x32xf32>
    %285 = vector.broadcast %284 : vector<1x32xf32> to vector<24x32xf32>
    %286 = arith.addf %282, %285 : vector<24x32xf32>
    %c1_196 = arith.constant 1 : index
    %c0_197 = arith.constant 0 : index
    %c0_198 = arith.constant 0 : index
    %287 = vector.load %arg16[%c1_196, %c0_197, %c0_198] : memref<2x1x32xf32, #tpu.memory_space<vmem>>, vector<1x1x32xf32>
    %288 = vector.shape_cast %287 : vector<1x1x32xf32> to vector<1x32xf32>
    %c1_199 = arith.constant 1 : index
    %c0_200 = arith.constant 0 : index
    %c0_201 = arith.constant 0 : index
    %289 = vector.load %arg17[%c1_199, %c0_200, %c0_201] : memref<2x1x32xf32, #tpu.memory_space<vmem>>, vector<1x1x32xf32>
    %290 = vector.shape_cast %289 : vector<1x1x32xf32> to vector<1x32xf32>
    %cst_202 = arith.constant dense<0.000000e+00> : vector<24xf32>
    %291 = vector.multi_reduction <add>, %286, %cst_202 [1] : vector<24x32xf32> to vector<24xf32>
    %292 = vector.shape_cast %291 : vector<24xf32> to vector<24x1xf32>
    %cst_203 = arith.constant 3.200000e+01 : f32
    %293 = vector.broadcast %cst_203 : f32 to vector<24x1xf32>
    %294 = arith.divf %292, %293 : vector<24x1xf32>
    %295 = vector.broadcast %294 : vector<24x1xf32> to vector<24x32xf32>
    %296 = arith.subf %286, %295 : vector<24x32xf32>
    %297 = arith.mulf %296, %296 : vector<24x32xf32>
    %cst_204 = arith.constant dense<0.000000e+00> : vector<24xf32>
    %298 = vector.multi_reduction <add>, %297, %cst_204 [1] : vector<24x32xf32> to vector<24xf32>
    %299 = vector.shape_cast %298 : vector<24xf32> to vector<24x1xf32>
    %cst_205 = arith.constant 3.200000e+01 : f32
    %300 = vector.broadcast %cst_205 : f32 to vector<24x1xf32>
    %301 = arith.divf %299, %300 : vector<24x1xf32>
    %cst_206 = arith.constant 9.99999974E-6 : f32
    %302 = vector.broadcast %cst_206 : f32 to vector<24x1xf32>
    %303 = arith.addf %301, %302 : vector<24x1xf32>
    %304 = math.rsqrt %303 : vector<24x1xf32>
    %305 = vector.broadcast %304 : vector<24x1xf32> to vector<24x32xf32>
    %306 = arith.mulf %296, %305 : vector<24x32xf32>
    %307 = vector.broadcast %288 : vector<1x32xf32> to vector<24x32xf32>
    %308 = arith.mulf %306, %307 : vector<24x32xf32>
    %309 = vector.broadcast %290 : vector<1x32xf32> to vector<24x32xf32>
    %310 = arith.addf %308, %309 : vector<24x32xf32>
    %311 = vector.extract_strided_slice %310 {offsets = [16, 0], sizes = [2, 32], strides = [1, 1]} : vector<24x32xf32> to vector<2x32xf32>
    %c0_207 = arith.constant 0 : index
    %c0_208 = arith.constant 0 : index
    %312 = vector.load %arg18[%c0_207, %c0_208] : memref<32x32xf32, #tpu.memory_space<vmem>>, vector<32x32xf32>
    %cst_209 = arith.constant dense<0.000000e+00> : vector<2x32xf32>
    %313 = tpu.matmul %311, %312, %cst_209 {dimension_numbers = #tpu.dot_dimension_numbers<[1], [0], [0], [1], [0, 0, 1, 1], [], []>} : vector<2x32xf32>, vector<32x32xf32>, vector<2x32xf32> -> vector<2x32xf32>
    %c0_210 = arith.constant 0 : index
    %c0_211 = arith.constant 0 : index
    %314 = vector.load %arg19[%c0_210, %c0_211] : memref<1x32xf32, #tpu.memory_space<vmem>>, vector<1x32xf32>
    %315 = vector.broadcast %314 : vector<1x32xf32> to vector<2x32xf32>
    %316 = arith.addf %313, %315 : vector<2x32xf32>
    %cst_212 = arith.constant 0.000000e+00 : f32
    %317 = vector.broadcast %cst_212 : f32 to vector<2x32xf32>
    %318 = arith.maximumf %316, %317 : vector<2x32xf32>
    %c0_213 = arith.constant 0 : index
    %c0_214 = arith.constant 0 : index
    %319 = vector.load %arg20[%c0_213, %c0_214] : memref<32x10xf32, #tpu.memory_space<vmem>>, vector<32x10xf32>
    %cst_215 = arith.constant dense<0.000000e+00> : vector<2x10xf32>
    %320 = tpu.matmul %318, %319, %cst_215 {dimension_numbers = #tpu.dot_dimension_numbers<[1], [0], [0], [1], [0, 0, 1, 1], [], []>} : vector<2x32xf32>, vector<32x10xf32>, vector<2x10xf32> -> vector<2x10xf32>
    %c0_216 = arith.constant 0 : index
    %c0_217 = arith.constant 0 : index
    %321 = vector.load %arg21[%c0_216, %c0_217] : memref<1x10xf32, #tpu.memory_space<vmem>>, vector<1x10xf32>
    %322 = vector.broadcast %321 : vector<1x10xf32> to vector<2x10xf32>
    %323 = arith.addf %320, %322 : vector<2x10xf32>
    %cst_218 = arith.constant 0.000000e+00 : f32
    %324 = vector.broadcast %cst_218 : f32 to vector<2x10xf32>
    %325 = arith.subf %324, %323 : vector<2x10xf32>
    %326 = math.exp %325 : vector<2x10xf32>
    %cst_219 = arith.constant 1.000000e+00 : f32
    %327 = vector.broadcast %cst_219 : f32 to vector<2x10xf32>
    %328 = arith.addf %327, %326 : vector<2x10xf32>
    %cst_220 = arith.constant 1.000000e+00 : f32
    %329 = vector.broadcast %cst_220 : f32 to vector<2x10xf32>
    %330 = arith.divf %329, %328 : vector<2x10xf32>
    %c0_221 = arith.constant 0 : index
    %c0_222 = arith.constant 0 : index
    %331 = vector.load %arg22[%c0_221, %c0_222] : memref<2x10xf32, #tpu.memory_space<vmem>>, vector<2x10xf32>
    tpu.vector_store %arg22[%c0_221, %c0_222], %330 {strides = array<i32>} : memref<2x10xf32, #tpu.memory_space<vmem>>, vector<2x10xf32>,
    return
  }
}

</mosaic_0001>

<llo_original>
// kernel: backend_forward.1
$region0: #{backend_forward.1}
  #allocation0 [shape = 'u32[]', space=smem, size = 0x4, offset = 0x4, fixed_abs, tag = 'smem constant byte address 0x4 - core index']
  #allocation1 [shape = 'u32[72,128]{1,0:T(1,128)}', space=vmem, size = 0x9000, scoped, tag = 'internal scratch']
  #allocation2 [shape = 'f32[24,32]{1,0:T(8,128)}', space=vmem, size = 0x3000, scoped, tag = 'scratch operand']
  %s0 = inlined_call_operand.vmem [shape: f32[2,32,8], index: 0, kind: input, shape index: {}]
  %s1 = inlined_call_operand.vmem [shape: f32[1,32], index: 1, kind: input, shape index: {}]
  %s2 = inlined_call_operand.vmem [shape: f32[144,24], index: 2, kind: input, shape index: {}]
  %s3 = inlined_call_operand.vmem [shape: f32[144,24], index: 3, kind: input, shape index: {}]
  %s4 = inlined_call_operand.vmem [shape: f32[24,144], index: 4, kind: input, shape index: {}]
  %s5 = inlined_call_operand.vmem [shape: f32[144,32], index: 5, kind: input, shape index: {}]
  %s6 = inlined_call_operand.vmem [shape: f32[2,32,96], index: 6, kind: input, shape index: {}]
  %s7 = inlined_call_operand.vmem [shape: f32[2,1,96], index: 7, kind: input, shape index: {}]
  %s8 = inlined_call_operand.vmem [shape: f32[2,32,32], index: 8, kind: input, shape index: {}]
  %s9 = inlined_call_operand.vmem [shape: f32[2,1,32], index: 9, kind: input, shape index: {}]
  %s10 = inlined_call_operand.vmem [shape: f32[2,1,32], index: 10, kind: input, shape index: {}]
  %s11 = inlined_call_operand.vmem [shape: f32[2,1,32], index: 11, kind: input, shape index: {}]
  %s12 = inlined_call_operand.vmem [shape: bf16[2,32,2048], index: 12, kind: input, shape index: {}]
  %s13 = inlined_call_operand.vmem [shape: f32[2,1,2048], index: 13, kind: input, shape index: {}]
  %s14 = inlined_call_operand.vmem [shape: bf16[2,2048,32], index: 14, kind: input, shape index: {}]
  %s15 = inlined_call_operand.vmem [shape: f32[2,1,32], index: 15, kind: input, shape index: {}]
  %s16 = inlined_call_operand.vmem [shape: f32[2,1,32], index: 16, kind: input, shape index: {}]
  %s17 = inlined_call_operand.vmem [shape: f32[2,1,32], index: 17, kind: input, shape index: {}]
  %s18 = inlined_call_operand.vmem [shape: f32[32,32], index: 18, kind: input, shape index: {}]
  %s19 = inlined_call_operand.vmem [shape: f32[1,32], index: 19, kind: input, shape index: {}]
  %s20 = inlined_call_operand.vmem [shape: f32[32,10], index: 20, kind: input, shape index: {}]
  %s21 = inlined_call_operand.vmem [shape: f32[1,10], index: 21, kind: input, shape index: {}]
  %s22 = inlined_call_operand.hbm [shape: f32[2,10], index: 22, kind: output, shape index: {}]
  %s23 = sld [smem:[#allocation0]]
  $region98: #{backend_forward.1} parent=0
    _
  %s25 = ssub.s32 1, %s23
  %s26 = scalar_select 0, %s25, %s23
  $region1: #{backend_forward.1} parent=0
    #allocation3 [shape = 'u8[1024]{0}', space=vmem, size = 0x400, scoped, tag = 'output window, operand 0, single buffered']
    #allocation4 [shape = 's32[1]{0}', space=sflag, size = 0x4, scoped, tag = 'scoped memory for backend_forward.1']
    %27 = vsyncpa [#allocation4], 0
    // Predicated region
    $region2: #{backend_forward.1} parent=1 // pred_check
      _
    $region3: #{backend_forward.1} parent=1 // pred_check_branch
      %29 = sbr.rel (0) target = $region5
    $region4: #{backend_forward.1} parent=1 // pred_region
      _
    $region5: #{backend_forward.1} parent=1 // pred_fallthru
      _
    // Predicated region
    $region6: #{backend_forward.1} parent=1 // pred_check
      _
    $region7: #{backend_forward.1} parent=1 // pred_check_branch
      %31 = sbr.rel (0) target = $region9
    $region8: #{backend_forward.1} parent=1 // pred_region
      _
    $region9: #{backend_forward.1} parent=1 // pred_fallthru
      _
    // Predicated region
    $region10: #{backend_forward.1} parent=1 // pred_check
      _
    $region11: #{backend_forward.1} parent=1 // pred_check_branch
      %33 = sbr.rel (0) target = $region13
    $region12: #{backend_forward.1} parent=1 // pred_region
      _
    $region13: #{backend_forward.1} parent=1 // pred_fallthru
      _
    // Predicated region
    $region14: #{backend_forward.1} parent=1 // pred_check
      _
    $region15: #{backend_forward.1} parent=1 // pred_check_branch
      %35 = sbr.rel (0) target = $region17
    $region16: #{backend_forward.1} parent=1 // pred_region
      _
    $region17: #{backend_forward.1} parent=1 // pred_fallthru
      _
    // Predicated region
    $region18: #{backend_forward.1} parent=1 // pred_check
      _
    $region19: #{backend_forward.1} parent=1 // pred_check_branch
      %37 = sbr.rel (0) target = $region21
    $region20: #{backend_forward.1} parent=1 // pred_region
      _
    $region21: #{backend_forward.1} parent=1 // pred_fallthru
      _
    // Predicated region
    $region22: #{backend_forward.1} parent=1 // pred_check
      _
    $region23: #{backend_forward.1} parent=1 // pred_check_branch
      %39 = sbr.rel (0) target = $region25
    $region24: #{backend_forward.1} parent=1 // pred_region
      _
    $region25: #{backend_forward.1} parent=1 // pred_fallthru
      _
    // Predicated region
    $region26: #{backend_forward.1} parent=1 // pred_check
      _
    $region27: #{backend_forward.1} parent=1 // pred_check_branch
      %41 = sbr.rel (0) target = $region29
    $region28: #{backend_forward.1} parent=1 // pred_region
      _
    $region29: #{backend_forward.1} parent=1 // pred_fallthru
      _
    // Predicated region
    $region30: #{backend_forward.1} parent=1 // pred_check
      _
    $region31: #{backend_forward.1} parent=1 // pred_check_branch
      %43 = sbr.rel (0) target = $region33
    $region32: #{backend_forward.1} parent=1 // pred_region
      _
    $region33: #{backend_forward.1} parent=1 // pred_fallthru
      _
    // Predicated region
    $region34: #{backend_forward.1} parent=1 // pred_check
      _
    $region35: #{backend_forward.1} parent=1 // pred_check_branch
      %45 = sbr.rel (0) target = $region37
    $region36: #{backend_forward.1} parent=1 // pred_region
      _
    $region37: #{backend_forward.1} parent=1 // pred_fallthru
      _
    // Predicated region
    $region38: #{backend_forward.1} parent=1 // pred_check
      _
    $region39: #{backend_forward.1} parent=1 // pred_check_branch
      %47 = sbr.rel (0) target = $region41
    $region40: #{backend_forward.1} parent=1 // pred_region
      _
    $region41: #{backend_forward.1} parent=1 // pred_fallthru
      _
    // Predicated region
    $region42: #{backend_forward.1} parent=1 // pred_check
      _
    $region43: #{backend_forward.1} parent=1 // pred_check_branch
      %49 = sbr.rel (0) target = $region45
    $region44: #{backend_forward.1} parent=1 // pred_region
      _
    $region45: #{backend_forward.1} parent=1 // pred_fallthru
      _
    // Predicated region
    $region46: #{backend_forward.1} parent=1 // pred_check
      _
    $region47: #{backend_forward.1} parent=1 // pred_check_branch
      %51 = sbr.rel (0) target = $region49
    $region48: #{backend_forward.1} parent=1 // pred_region
      _
    $region49: #{backend_forward.1} parent=1 // pred_fallthru
      _
    // Predicated region
    $region50: #{backend_forward.1} parent=1 // pred_check
      _
    $region51: #{backend_forward.1} parent=1 // pred_check_branch
      %53 = sbr.rel (0) target = $region53
    $region52: #{backend_forward.1} parent=1 // pred_region
      _
    $region53: #{backend_forward.1} parent=1 // pred_fallthru
      _
    // Predicated region
    $region54: #{backend_forward.1} parent=1 // pred_check
      _
    $region55: #{backend_forward.1} parent=1 // pred_check_branch
      %55 = sbr.rel (0) target = $region57
    $region56: #{backend_forward.1} parent=1 // pred_region
      _
    $region57: #{backend_forward.1} parent=1 // pred_fallthru
      _
    // Predicated region
    $region58: #{backend_forward.1} parent=1 // pred_check
      _
    $region59: #{backend_forward.1} parent=1 // pred_check_branch
      %57 = sbr.rel (0) target = $region61
    $region60: #{backend_forward.1} parent=1 // pred_region
      _
    $region61: #{backend_forward.1} parent=1 // pred_fallthru
      _
    // Predicated region
    $region62: #{backend_forward.1} parent=1 // pred_check
      _
    $region63: #{backend_forward.1} parent=1 // pred_check_branch
      %59 = sbr.rel (0) target = $region65
    $region64: #{backend_forward.1} parent=1 // pred_region
      _
    $region65: #{backend_forward.1} parent=1 // pred_fallthru
      _
    // Predicated region
    $region66: #{backend_forward.1} parent=1 // pred_check
      _
    $region67: #{backend_forward.1} parent=1 // pred_check_branch
      %61 = sbr.rel (0) target = $region69
    $region68: #{backend_forward.1} parent=1 // pred_region
      _
    $region69: #{backend_forward.1} parent=1 // pred_fallthru
      _
    // Predicated region
    $region70: #{backend_forward.1} parent=1 // pred_check
      _
    $region71: #{backend_forward.1} parent=1 // pred_check_branch
      %63 = sbr.rel (0) target = $region73
    $region72: #{backend_forward.1} parent=1 // pred_region
      _
    $region73: #{backend_forward.1} parent=1 // pred_fallthru
      _
    // Predicated region
    $region74: #{backend_forward.1} parent=1 // pred_check
      _
    $region75: #{backend_forward.1} parent=1 // pred_check_branch
      %65 = sbr.rel (0) target = $region77
    $region76: #{backend_forward.1} parent=1 // pred_region
      _
    $region77: #{backend_forward.1} parent=1 // pred_fallthru
      _
    // Predicated region
    $region78: #{backend_forward.1} parent=1 // pred_check
      _
    $region79: #{backend_forward.1} parent=1 // pred_check_branch
      %67 = sbr.rel (0) target = $region81
    $region80: #{backend_forward.1} parent=1 // pred_region
      _
    $region81: #{backend_forward.1} parent=1 // pred_fallthru
      _
    // Predicated region
    $region82: #{backend_forward.1} parent=1 // pred_check
      _
    $region83: #{backend_forward.1} parent=1 // pred_check_branch
      %69 = sbr.rel (0) target = $region85
    $region84: #{backend_forward.1} parent=1 // pred_region
      _
    $region85: #{backend_forward.1} parent=1 // pred_fallthru
      _
    // Predicated region
    $region86: #{backend_forward.1} parent=1 // pred_check
      _
    $region87: #{backend_forward.1} parent=1 // pred_check_branch
      %71 = sbr.rel (0) target = $region89
    $region88: #{backend_forward.1} parent=1 // pred_region
      _
    $region89: #{backend_forward.1} parent=1 // pred_fallthru
      _
    %vm73 = vcmask 261120
    %74 = vst.msk [vmem:[#allocation2] sm:$0xff] %vm73, 0.0
    %75 = vst.msk [vmem:[#allocation2 + $0x8] sm:$0xff] %vm73, 0.0
    %76 = vst.msk [vmem:[#allocation2 + $0x10] sm:$0xff] %vm73, 0.0
    %v77 = vld [vmem:[%s0] sm:$0xff]
    %v78 = vld [vmem:[%s0 + $0x8] sm:$0xff]
    %v79 = vld [vmem:[%s0 + $0x10] sm:$0xff]
    %v80 = vld [vmem:[%s0 + $0x18] sm:$0xff]
    %81 = vxpose.xlu0.b32.start [1/16] %v77, 128
    %82 = vxpose.xlu0.b32.cont [2/16] %v78, 128
    %83 = vxpose.xlu0.b32.cont [3/16] %v79, 128
    %84 = vxpose.xlu0.b32.cont [4/16] %v80, 128
    %85 = vxpose.xlu0.b32.cont [5/16] 0.0, 128
    %86 = vxpose.xlu0.b32.cont [6/16] 0.0, 128
    %87 = vxpose.xlu0.b32.cont [7/16] 0.0, 128
    %88 = vxpose.xlu0.b32.cont [8/16] 0.0, 128
    %89 = vxpose.xlu0.b32.cont [9/16] 0.0, 128
    %90 = vxpose.xlu0.b32.cont [10/16] 0.0, 128
    %91 = vxpose.xlu0.b32.cont [11/16] 0.0, 128
    %92 = vxpose.xlu0.b32.cont [12/16] 0.0, 128
    %93 = vxpose.xlu0.b32.cont [13/16] 0.0, 128
    %94 = vxpose.xlu0.b32.cont [14/16] 0.0, 128
    %95 = vxpose.xlu0.b32.cont [15/16] 0.0, 128
    %96 = vxpose.xlu0.b32.end [16/16] 0.0, 128
    %v97 = vpop.trf.xlu0
    %v98 = vpop.trf.xlu0
    %v99 = vpop.trf.xlu0
    %v100 = vpop.trf.xlu0
    %v101 = vpop.trf.xlu0
    %v102 = vpop.trf.xlu0
    %v103 = vpop.trf.xlu0
    %v104 = vpop.trf.xlu0
    %v105 = vpop.trf.xlu0
    %v106 = vpop.trf.xlu0
    %v107 = vpop.trf.xlu0
    %v108 = vpop.trf.xlu0
    %v109 = vpop.trf.xlu0
    %v110 = vpop.trf.xlu0
    %v111 = vpop.trf.xlu0
    %v112 = vpop.trf.xlu0
    %113 = vst.msk [vmem:[#allocation2] sm:$0xff] %vm73, %v97
    %s114 = scalar_lea.vmem %s0, 32
    %v115 = vld [vmem:[%s114] sm:$0xff]
    %v116 = vld [vmem:[%s114 + $0x8] sm:$0xff]
    %v117 = vld [vmem:[%s114 + $0x10] sm:$0xff]
    %v118 = vld [vmem:[%s114 + $0x18] sm:$0xff]
    %119 = vxpose.xlu0.b32.start [1/16] %v115, 128
    %120 = vxpose.xlu0.b32.cont [2/16] %v116, 128
    %121 = vxpose.xlu0.b32.cont [3/16] %v117, 128
    %122 = vxpose.xlu0.b32.cont [4/16] %v118, 128
    %123 = vxpose.xlu0.b32.cont [5/16] 0.0, 128
    %124 = vxpose.xlu0.b32.cont [6/16] 0.0, 128
    %125 = vxpose.xlu0.b32.cont [7/16] 0.0, 128
    %126 = vxpose.xlu0.b32.cont [8/16] 0.0, 128
    %127 = vxpose.xlu0.b32.cont [9/16] 0.0, 128
    %128 = vxpose.xlu0.b32.cont [10/16] 0.0, 128
    %129 = vxpose.xlu0.b32.cont [11/16] 0.0, 128
    %130 = vxpose.xlu0.b32.cont [12/16] 0.0, 128
    %131 = vxpose.xlu0.b32.cont [13/16] 0.0, 128
    %132 = vxpose.xlu0.b32.cont [14/16] 0.0, 128
    %133 = vxpose.xlu0.b32.cont [15/16] 0.0, 128
    %134 = vxpose.xlu0.b32.end [16/16] 0.0, 128
    %v135 = vpop.trf.xlu0
    %v136 = vpop.trf.xlu0
    %v137 = vpop.trf.xlu0
    %v138 = vpop.trf.xlu0
    %v139 = vpop.trf.xlu0
    %v140 = vpop.trf.xlu0
    %v141 = vpop.trf.xlu0
    %v142 = vpop.trf.xlu0
    %v143 = vpop.trf.xlu0
    %v144 = vpop.trf.xlu0
    %v145 = vpop.trf.xlu0
    %v146 = vpop.trf.xlu0
    %v147 = vpop.trf.xlu0
    %v148 = vpop.trf.xlu0
    %v149 = vpop.trf.xlu0
    %v150 = vpop.trf.xlu0
    %151 = vst.msk [vmem:[#allocation2 + $0x8] sm:$0xff] %vm73, %v135
    %v152 = vld [vmem:[%s1] sm:$0x1]
    %v154 = vperm.slane %v152, 0
    %vm156 = vcmask 254976
    %157 = vst.msk [vmem:[#allocation2 + $0x10] sm:$0x3] %vm156, %v154
    %v158 = vld [vmem:[#allocation2] sm:$0xff]
    %v159 = vld [vmem:[#allocation2 + $0x8] sm:$0xff]
    %v160 = vld [vmem:[#allocation2 + $0x10] sm:$0xff]
    %v161 = vld [vmem:[%s2] sm:$0xff]
    %v162 = vld [vmem:[%s2 + $0x8] sm:$0xff]
    %v163 = vld [vmem:[%s2 + $0x10] sm:$0xff]
    %v164 = vld [vmem:[%s2 + $0x18] sm:$0xff]
    %v165 = vld [vmem:[%s2 + $0x20] sm:$0xff]
    %v166 = vld [vmem:[%s2 + $0x28] sm:$0xff]
    %v167 = vld [vmem:[%s2 + $0x30] sm:$0xff]
    %v168 = vld [vmem:[%s2 + $0x38] sm:$0xff]
    %v169 = vld [vmem:[%s2 + $0x40] sm:$0xff]
    %v170 = vld [vmem:[%s2 + $0x48] sm:$0xff]
    %v171 = vld [vmem:[%s2 + $0x50] sm:$0xff]
    %v172 = vld [vmem:[%s2 + $0x58] sm:$0xff]
    %v173 = vld [vmem:[%s2 + $0x60] sm:$0xff]
    %v174 = vld [vmem:[%s2 + $0x68] sm:$0xff]
    %v175 = vld [vmem:[%s2 + $0x70] sm:$0xff]
    %v176 = vld [vmem:[%s2 + $0x78] sm:$0xff]
    %v177 = vld [vmem:[%s2 + $0x80] sm:$0xff]
    %v178 = vld [vmem:[%s2 + $0x88] sm:$0xff]
    %v179 = vld [vmem:[%s3] sm:$0xff]
    %v180 = vld [vmem:[%s3 + $0x8] sm:$0xff]
    %v181 = vld [vmem:[%s3 + $0x10] sm:$0xff]
    %v182 = vld [vmem:[%s3 + $0x18] sm:$0xff]
    %v183 = vld [vmem:[%s3 + $0x20] sm:$0xff]
    %v184 = vld [vmem:[%s3 + $0x28] sm:$0xff]
    %v185 = vld [vmem:[%s3 + $0x30] sm:$0xff]
    %v186 = vld [vmem:[%s3 + $0x38] sm:$0xff]
    %v187 = vld [vmem:[%s3 + $0x40] sm:$0xff]
    %v188 = vld [vmem:[%s3 + $0x48] sm:$0xff]
    %v189 = vld [vmem:[%s3 + $0x50] sm:$0xff]
    %v190 = vld [vmem:[%s3 + $0x58] sm:$0xff]
    %v191 = vld [vmem:[%s3 + $0x60] sm:$0xff]
    %v192 = vld [vmem:[%s3 + $0x68] sm:$0xff]
    %v193 = vld [vmem:[%s3 + $0x70] sm:$0xff]
    %v194 = vld [vmem:[%s3 + $0x78] sm:$0xff]
    %v195 = vld [vmem:[%s3 + $0x80] sm:$0xff]
    %v196 = vld [vmem:[%s3 + $0x88] sm:$0xff]
    %v197 = vld [vmem:[%s4] sm:$0xff]
    %v198 = vld [vmem:[%s4 + $0x8] sm:$0xff]
    %v199 = vld [vmem:[%s4 + $0x10] sm:$0xff]
    %v200 = vld [vmem:[%s4 + $0x18] sm:$0xff]
    %v201 = vld [vmem:[%s4 + $0x20] sm:$0xff]
    %v202 = vld [vmem:[%s4 + $0x28] sm:$0xff]
    %v203 = vld [vmem:[%s5] sm:$0xff]
    %v204 = vld [vmem:[%s5 + $0x8] sm:$0xff]
    %v205 = vld [vmem:[%s5 + $0x10] sm:$0xff]
    %v206 = vld [vmem:[%s5 + $0x18] sm:$0xff]
    %v207 = vld [vmem:[%s5 + $0x20] sm:$0xff]
    %v208 = vld [vmem:[%s5 + $0x28] sm:$0xff]
    %v209 = vld [vmem:[%s5 + $0x30] sm:$0xff]
    %v210 = vld [vmem:[%s5 + $0x38] sm:$0xff]
    %v211 = vld [vmem:[%s5 + $0x40] sm:$0xff]
    %v212 = vld [vmem:[%s5 + $0x48] sm:$0xff]
    %v213 = vld [vmem:[%s5 + $0x50] sm:$0xff]
    %v214 = vld [vmem:[%s5 + $0x58] sm:$0xff]
    %v215 = vld [vmem:[%s5 + $0x60] sm:$0xff]
    %v216 = vld [vmem:[%s5 + $0x68] sm:$0xff]
    %v217 = vld [vmem:[%s5 + $0x70] sm:$0xff]
    %v218 = vld [vmem:[%s5 + $0x78] sm:$0xff]
    %v219 = vld [vmem:[%s5 + $0x80] sm:$0xff]
    %v220 = vld [vmem:[%s5 + $0x88] sm:$0xff]
    %v221 = vld [vmem:[%s6] sm:$0xff]
    %v222 = vld [vmem:[%s6 + $0x8] sm:$0xff]
    %v223 = vld [vmem:[%s6 + $0x10] sm:$0xff]
    %v224 = vld [vmem:[%s6 + $0x18] sm:$0xff]
    %v225 = vld [vmem:[%s7] sm:$0x1]
    %v227 = vperm.slane %v225, 0
    %v230 = vsel %vm73, %v158, 0
    %v233 = vsel %vm73, %v159, 0
    %v236 = vsel %vm73, %v160, 0
    %238 = vmatpush.msra.mxu0 0.0
    %239 = vmatpush.msra.mxu0 0.0
    %240 = vmatpush.msra.mxu0 0.0
    %241 = vmatpush.msra.mxu0 0.0
    %242 = vmatpush.msra.mxu0 0.0
    %243 = vmatpush.msra.mxu0 0.0
    %244 = vmatpush.msra.mxu0 0.0
    %245 = vmatpush.msra.mxu0 0.0
    %246 = vmatpush.msra.mxu0 0.0
    %247 = vmatpush.msra.mxu0 0.0
    %248 = vmatpush.msra.mxu0 0.0
    %249 = vmatpush.msra.mxu0 0.0
    %250 = vmatpush.msra.mxu0 %v224
    %251 = vmatpush.msra.mxu0 %v223
    %252 = vmatpush.msra.mxu0 %v222
    %253 = vmatpush.msra.mxu0 %v221
    %254 = vmatmul.f32.gmra.mxu0 %v230
    %v255 = vpop.f32.mrf.mxu0
    %v256 = vadd.f32 %v227, %v255
    %257 = vmatmul.f32.gmra.mxu0 %v233
    %v258 = vpop.f32.mrf.mxu0
    %v259 = vadd.f32 %v227, %v258
    %260 = vmatmul.f32.gmra.mxu0 %v236
    %v261 = vpop.f32.mrf.mxu0
    %v262 = vadd.f32 %v227, %v261
    %263 = vdwg.mxu0
    %vm264 = vcmask 195584
    %v266 = vsel %vm264, %v161, 0
    %v269 = vsel %vm264, %v162, 0
    %v272 = vsel %vm264, %v163, 0
    %v275 = vsel %vm264, %v164, 0
    %v278 = vsel %vm264, %v165, 0
    %v281 = vsel %vm264, %v166, 0
    %v284 = vsel %vm264, %v167, 0
    %v287 = vsel %vm264, %v168, 0
    %v290 = vsel %vm264, %v169, 0
    %v293 = vsel %vm264, %v170, 0
    %v296 = vsel %vm264, %v171, 0
    %v299 = vsel %vm264, %v172, 0
    %v302 = vsel %vm264, %v173, 0
    %v305 = vsel %vm264, %v174, 0
    %v308 = vsel %vm264, %v175, 0
    %v311 = vsel %vm264, %v176, 0
    %v314 = vsel %vm264, %v177, 0
    %v317 = vsel %vm264, %v178, 0
    %319 = vmatpush.msra.mxu0 0.0
    %320 = vmatpush.msra.mxu0 0.0
    %321 = vmatpush.msra.mxu0 0.0
    %322 = vmatpush.msra.mxu0 0.0
    %323 = vmatpush.msra.mxu0 0.0
    %324 = vmatpush.msra.mxu0 0.0
    %325 = vmatpush.msra.mxu0 0.0
    %326 = vmatpush.msra.mxu0 0.0
    %327 = vmatpush.msra.mxu0 0.0
    %328 = vmatpush.msra.mxu0 0.0
    %329 = vmatpush.msra.mxu0 0.0
    %330 = vmatpush.msra.mxu0 0.0
    %331 = vmatpush.msra.mxu0 0.0
    %332 = vmatpush.msra.mxu0 %v262
    %333 = vmatpush.msra.mxu0 %v259
    %334 = vmatpush.msra.mxu0 %v256
    %335 = vmatmul.f32.gmra.mxu0 %v266
    %v336 = vpop.f32.mrf.mxu0
    %v337 = vadd.f32 0.0, %v336
    %338 = vmatmul.f32.gmra.mxu0 %v269
    %v339 = vpop.f32.mrf.mxu0
    %v340 = vadd.f32 0.0, %v339
    %341 = vmatmul.f32.gmra.mxu0 %v272
    %v342 = vpop.f32.mrf.mxu0
    %v343 = vadd.f32 0.0, %v342
    %344 = vmatmul.f32.gmra.mxu0 %v275
    %v345 = vpop.f32.mrf.mxu0
    %v346 = vadd.f32 0.0, %v345
    %347 = vmatmul.f32.gmra.mxu0 %v278
    %v348 = vpop.f32.mrf.mxu0
    %v349 = vadd.f32 0.0, %v348
    %350 = vmatmul.f32.gmra.mxu0 %v281
    %v351 = vpop.f32.mrf.mxu0
    %v352 = vadd.f32 0.0, %v351
    %353 = vmatmul.f32.gmra.mxu0 %v284
    %v354 = vpop.f32.mrf.mxu0
    %v355 = vadd.f32 0.0, %v354
    %356 = vmatmul.f32.gmra.mxu0 %v287
    %v357 = vpop.f32.mrf.mxu0
    %v358 = vadd.f32 0.0, %v357
    %359 = vmatmul.f32.gmra.mxu0 %v290
    %v360 = vpop.f32.mrf.mxu0
    %v361 = vadd.f32 0.0, %v360
    %362 = vmatmul.f32.gmra.mxu0 %v293
    %v363 = vpop.f32.mrf.mxu0
    %v364 = vadd.f32 0.0, %v363
    %365 = vmatmul.f32.gmra.mxu0 %v296
    %v366 = vpop.f32.mrf.mxu0
    %v367 = vadd.f32 0.0, %v366
    %368 = vmatmul.f32.gmra.mxu0 %v299
    %v369 = vpop.f32.mrf.mxu0
    %v370 = vadd.f32 0.0, %v369
    %371 = vmatmul.f32.gmra.mxu0 %v302
    %v372 = vpop.f32.mrf.mxu0
    %v373 = vadd.f32 0.0, %v372
    %374 = vmatmul.f32.gmra.mxu0 %v305
    %v375 = vpop.f32.mrf.mxu0
    %v376 = vadd.f32 0.0, %v375
    %377 = vmatmul.f32.gmra.mxu0 %v308
    %v378 = vpop.f32.mrf.mxu0
    %v379 = vadd.f32 0.0, %v378
    %380 = vmatmul.f32.gmra.mxu0 %v311
    %v381 = vpop.f32.mrf.mxu0
    %v382 = vadd.f32 0.0, %v381
    %383 = vmatmul.f32.gmra.mxu0 %v314
    %v384 = vpop.f32.mrf.mxu0
    %v385 = vadd.f32 0.0, %v384
    %386 = vmatmul.f32.gmra.mxu0 %v317
    %v387 = vpop.f32.mrf.mxu0
    %v388 = vadd.f32 0.0, %v387
    %389 = vdwg.mxu0
    %v390 = vmul.f32 %v337, %v203
    %v391 = vmul.f32 %v340, %v204
    %v392 = vmul.f32 %v343, %v205
    %v393 = vmul.f32 %v346, %v206
    %v394 = vmul.f32 %v349, %v207
    %v395 = vmul.f32 %v352, %v208
    %v396 = vmul.f32 %v355, %v209
    %v397 = vmul.f32 %v358, %v210
    %v398 = vmul.f32 %v361, %v211
    %v399 = vmul.f32 %v364, %v212
    %v400 = vmul.f32 %v367, %v213
    %v401 = vmul.f32 %v370, %v214
    %v402 = vmul.f32 %v373, %v215
    %v403 = vmul.f32 %v376, %v216
    %v404 = vmul.f32 %v379, %v217
    %v405 = vmul.f32 %v382, %v218
    %v406 = vmul.f32 %v385, %v219
    %v407 = vmul.f32 %v388, %v220
    %411 = vrot.lane.b32.xlu0 %v256, 96
    %v412 = vpop.permute.xlu0 %411
    %413 = vrot.lane.b32.xlu0 %v259, 96
    %v414 = vpop.permute.xlu0 %413
    %415 = vrot.lane.b32.xlu0 %v262, 96
    %v416 = vpop.permute.xlu0 %415
    %v418 = vsel %vm73, %v390, 0
    %v421 = vsel %vm73, %v391, 0
    %v424 = vsel %vm73, %v392, 0
    %v427 = vsel %vm73, %v393, 0
    %v430 = vsel %vm73, %v394, 0
    %v433 = vsel %vm73, %v395, 0
    %v436 = vsel %vm73, %v396, 0
    %v439 = vsel %vm73, %v397, 0
    %v442 = vsel %vm73, %v398, 0
    %v445 = vsel %vm73, %v399, 0
    %v448 = vsel %vm73, %v400, 0
    %v451 = vsel %vm73, %v401, 0
    %v454 = vsel %vm73, %v402, 0
    %v457 = vsel %vm73, %v403, 0
    %v460 = vsel %vm73, %v404, 0
    %v463 = vsel %vm73, %v405, 0
    %v466 = vsel %vm73, %v406, 0
    %v469 = vsel %vm73, %v407, 0
    %v471 = vsel %vm73, %v412, 0
    %v473 = vsel %vm73, %v414, 0
    %v475 = vsel %vm73, %v416, 0
    %477 = vmatpush.xpose.msra.mxu0 0.0
    %478 = vmatpush.xpose.msra.mxu0 0.0
    %479 = vmatpush.xpose.msra.mxu0 0.0
    %480 = vmatpush.xpose.msra.mxu0 0.0
    %481 = vmatpush.xpose.msra.mxu0 0.0
    %482 = vmatpush.xpose.msra.mxu0 0.0
    %483 = vmatpush.xpose.msra.mxu0 0.0
    %484 = vmatpush.xpose.msra.mxu0 0.0
    %485 = vmatpush.xpose.msra.mxu0 0.0
    %486 = vmatpush.xpose.msra.mxu0 0.0
    %487 = vmatpush.xpose.msra.mxu0 0.0
    %488 = vmatpush.xpose.msra.mxu0 0.0
    %489 = vmatpush.xpose.msra.mxu0 0.0
    %490 = vmatpush.xpose.msra.mxu0 %v475
    %491 = vmatpush.xpose.msra.mxu0 %v473
    %492 = vmatpush.xpose.msra.mxu0 %v471
    %493 = vmatmul.f32.gmra.mxu0 %v418
    %v494 = vpop.f32.mrf.mxu0
    %v495 = vadd.f32 %v179, %v494
    %496 = vmatmul.f32.gmra.mxu0 %v421
    %v497 = vpop.f32.mrf.mxu0
    %v498 = vadd.f32 %v180, %v497
    %499 = vmatmul.f32.gmra.mxu0 %v424
    %v500 = vpop.f32.mrf.mxu0
    %v501 = vadd.f32 %v181, %v500
    %502 = vmatmul.f32.gmra.mxu0 %v427
    %v503 = vpop.f32.mrf.mxu0
    %v504 = vadd.f32 %v182, %v503
    %505 = vmatmul.f32.gmra.mxu0 %v430
    %v506 = vpop.f32.mrf.mxu0
    %v507 = vadd.f32 %v183, %v506
    %508 = vmatmul.f32.gmra.mxu0 %v433
    %v509 = vpop.f32.mrf.mxu0
    %v510 = vadd.f32 %v184, %v509
    %511 = vmatmul.f32.gmra.mxu0 %v436
    %v512 = vpop.f32.mrf.mxu0
    %v513 = vadd.f32 %v185, %v512
    %514 = vmatmul.f32.gmra.mxu0 %v439
    %v515 = vpop.f32.mrf.mxu0
    %v516 = vadd.f32 %v186, %v515
    %517 = vmatmul.f32.gmra.mxu0 %v442
    %v518 = vpop.f32.mrf.mxu0
    %v519 = vadd.f32 %v187, %v518
    %520 = vmatmul.f32.gmra.mxu0 %v445
    %v521 = vpop.f32.mrf.mxu0
    %v522 = vadd.f32 %v188, %v521
    %523 = vmatmul.f32.gmra.mxu0 %v448
    %v524 = vpop.f32.mrf.mxu0
    %v525 = vadd.f32 %v189, %v524
    %526 = vmatmul.f32.gmra.mxu0 %v451
    %v527 = vpop.f32.mrf.mxu0
    %v528 = vadd.f32 %v190, %v527
    %529 = vmatmul.f32.gmra.mxu0 %v454
    %v530 = vpop.f32.mrf.mxu0
    %v531 = vadd.f32 %v191, %v530
    %532 = vmatmul.f32.gmra.mxu0 %v457
    %v533 = vpop.f32.mrf.mxu0
    %v534 = vadd.f32 %v192, %v533
    %535 = vmatmul.f32.gmra.mxu0 %v460
    %v536 = vpop.f32.mrf.mxu0
    %v537 = vadd.f32 %v193, %v536
    %538 = vmatmul.f32.gmra.mxu0 %v463
    %v539 = vpop.f32.mrf.mxu0
    %v540 = vadd.f32 %v194, %v539
    %541 = vmatmul.f32.gmra.mxu0 %v466
    %v542 = vpop.f32.mrf.mxu0
    %v543 = vadd.f32 %v195, %v542
    %544 = vmatmul.f32.gmra.mxu0 %v469
    %v545 = vpop.f32.mrf.mxu0
    %v546 = vadd.f32 %v196, %v545
    %547 = vdwg.mxu0
    %v548 = vsel %vm264, %v495, -inf
    %549 = vmax.xlane.f32.xlu0 %v548
    %v550 = vpop.xlane.xlu0 %549
    %v551 = vsel %vm264, %v498, -inf
    %552 = vmax.xlane.f32.xlu0 %v551
    %v553 = vpop.xlane.xlu0 %552
    %v554 = vsel %vm264, %v501, -inf
    %555 = vmax.xlane.f32.xlu0 %v554
    %v556 = vpop.xlane.xlu0 %555
    %v557 = vsel %vm264, %v504, -inf
    %558 = vmax.xlane.f32.xlu0 %v557
    %v559 = vpop.xlane.xlu0 %558
    %v560 = vsel %vm264, %v507, -inf
    %561 = vmax.xlane.f32.xlu0 %v560
    %v562 = vpop.xlane.xlu0 %561
    %v563 = vsel %vm264, %v510, -inf
    %564 = vmax.xlane.f32.xlu0 %v563
    %v565 = vpop.xlane.xlu0 %564
    %v566 = vsel %vm264, %v513, -inf
    %567 = vmax.xlane.f32.xlu0 %v566
    %v568 = vpop.xlane.xlu0 %567
    %v569 = vsel %vm264, %v516, -inf
    %570 = vmax.xlane.f32.xlu0 %v569
    %v571 = vpop.xlane.xlu0 %570
    %v572 = vsel %vm264, %v519, -inf
    %573 = vmax.xlane.f32.xlu0 %v572
    %v574 = vpop.xlane.xlu0 %573
    %v575 = vsel %vm264, %v522, -inf
    %576 = vmax.xlane.f32.xlu0 %v575
    %v577 = vpop.xlane.xlu0 %576
    %v578 = vsel %vm264, %v525, -inf
    %579 = vmax.xlane.f32.xlu0 %v578
    %v580 = vpop.xlane.xlu0 %579
    %v581 = vsel %vm264, %v528, -inf
    %582 = vmax.xlane.f32.xlu0 %v581
    %v583 = vpop.xlane.xlu0 %582
    %v584 = vsel %vm264, %v531, -inf
    %585 = vmax.xlane.f32.xlu0 %v584
    %v586 = vpop.xlane.xlu0 %585
    %v587 = vsel %vm264, %v534, -inf
    %588 = vmax.xlane.f32.xlu0 %v587
    %v589 = vpop.xlane.xlu0 %588
    %v590 = vsel %vm264, %v537, -inf
    %591 = vmax.xlane.f32.xlu0 %v590
    %v592 = vpop.xlane.xlu0 %591
    %v593 = vsel %vm264, %v540, -inf
    %594 = vmax.xlane.f32.xlu0 %v593
    %v595 = vpop.xlane.xlu0 %594
    %v596 = vsel %vm264, %v543, -inf
    %597 = vmax.xlane.f32.xlu0 %v596
    %v598 = vpop.xlane.xlu0 %597
    %v599 = vsel %vm264, %v546, -inf
    %600 = vmax.xlane.f32.xlu0 %v599
    %v601 = vpop.xlane.xlu0 %600
    %v602 = vsub.f32 %v495, %v550
    %v603 = vsub.f32 %v498, %v553
    %v604 = vsub.f32 %v501, %v556
    %v605 = vsub.f32 %v504, %v559
    %v606 = vsub.f32 %v507, %v562
    %v607 = vsub.f32 %v510, %v565
    %v608 = vsub.f32 %v513, %v568
    %v609 = vsub.f32 %v516, %v571
    %v610 = vsub.f32 %v519, %v574
    %v611 = vsub.f32 %v522, %v577
    %v612 = vsub.f32 %v525, %v580
    %v613 = vsub.f32 %v528, %v583
    %v614 = vsub.f32 %v531, %v586
    %v615 = vsub.f32 %v534, %v589
    %v616 = vsub.f32 %v537, %v592
    %v617 = vsub.f32 %v540, %v595
    %v618 = vsub.f32 %v543, %v598
    %v619 = vsub.f32 %v546, %v601
    %v620 = vmul.f32 %v602, 1.442695
    %v621 = vpow.pop %v620
    %v622 = vmul.f32 %v603, 1.442695
    %v623 = vpow.pop %v622
    %v624 = vmul.f32 %v604, 1.442695
    %v625 = vpow.pop %v624
    %v626 = vmul.f32 %v605, 1.442695
    %v627 = vpow.pop %v626
    %v628 = vmul.f32 %v606, 1.442695
    %v629 = vpow.pop %v628
    %v630 = vmul.f32 %v607, 1.442695
    %v631 = vpow.pop %v630
    %v632 = vmul.f32 %v608, 1.442695
    %v633 = vpow.pop %v632
    %v634 = vmul.f32 %v609, 1.442695
    %v635 = vpow.pop %v634
    %v636 = vmul.f32 %v610, 1.442695
    %v637 = vpow.pop %v636
    %v638 = vmul.f32 %v611, 1.442695
    %v639 = vpow.pop %v638
    %v640 = vmul.f32 %v612, 1.442695
    %v641 = vpow.pop %v640
    %v642 = vmul.f32 %v613, 1.442695
    %v643 = vpow.pop %v642
    %v644 = vmul.f32 %v614, 1.442695
    %v645 = vpow.pop %v644
    %v646 = vmul.f32 %v615, 1.442695
    %v647 = vpow.pop %v646
    %v648 = vmul.f32 %v616, 1.442695
    %v649 = vpow.pop %v648
    %v650 = vmul.f32 %v617, 1.442695
    %v651 = vpow.pop %v650
    %v652 = vmul.f32 %v618, 1.442695
    %v653 = vpow.pop %v652
    %v654 = vmul.f32 %v619, 1.442695
    %v655 = vpow.pop %v654
    %v656 = vsel %vm264, %v621, 0.0
    %657 = vadd.xlane.f32.xlu0 %v656
    %v658 = vpop.xlane.xlu0 %657
    %v659 = vsel %vm264, %v623, 0.0
    %660 = vadd.xlane.f32.xlu0 %v659
    %v661 = vpop.xlane.xlu0 %660
    %v662 = vsel %vm264, %v625, 0.0
    %663 = vadd.xlane.f32.xlu0 %v662
    %v664 = vpop.xlane.xlu0 %663
    %v665 = vsel %vm264, %v627, 0.0
    %666 = vadd.xlane.f32.xlu0 %v665
    %v667 = vpop.xlane.xlu0 %666
    %v668 = vsel %vm264, %v629, 0.0
    %669 = vadd.xlane.f32.xlu0 %v668
    %v670 = vpop.xlane.xlu0 %669
    %v671 = vsel %vm264, %v631, 0.0
    %672 = vadd.xlane.f32.xlu0 %v671
    %v673 = vpop.xlane.xlu0 %672
    %v674 = vsel %vm264, %v633, 0.0
    %675 = vadd.xlane.f32.xlu0 %v674
    %v676 = vpop.xlane.xlu0 %675
    %v677 = vsel %vm264, %v635, 0.0
    %678 = vadd.xlane.f32.xlu0 %v677
    %v679 = vpop.xlane.xlu0 %678
    %v680 = vsel %vm264, %v637, 0.0
    %681 = vadd.xlane.f32.xlu0 %v680
    %v682 = vpop.xlane.xlu0 %681
    %v683 = vsel %vm264, %v639, 0.0
    %684 = vadd.xlane.f32.xlu0 %v683
    %v685 = vpop.xlane.xlu0 %684
    %v686 = vsel %vm264, %v641, 0.0
    %687 = vadd.xlane.f32.xlu0 %v686
    %v688 = vpop.xlane.xlu0 %687
    %v689 = vsel %vm264, %v643, 0.0
    %690 = vadd.xlane.f32.xlu0 %v689
    %v691 = vpop.xlane.xlu0 %690
    %v692 = vsel %vm264, %v645, 0.0
    %693 = vadd.xlane.f32.xlu0 %v692
    %v694 = vpop.xlane.xlu0 %693
    %v695 = vsel %vm264, %v647, 0.0
    %696 = vadd.xlane.f32.xlu0 %v695
    %v697 = vpop.xlane.xlu0 %696
    %v698 = vsel %vm264, %v649, 0.0
    %699 = vadd.xlane.f32.xlu0 %v698
    %v700 = vpop.xlane.xlu0 %699
    %v701 = vsel %vm264, %v651, 0.0
    %702 = vadd.xlane.f32.xlu0 %v701
    %v703 = vpop.xlane.xlu0 %702
    %v704 = vsel %vm264, %v653, 0.0
    %705 = vadd.xlane.f32.xlu0 %v704
    %v706 = vpop.xlane.xlu0 %705
    %v707 = vsel %vm264, %v655, 0.0
    %708 = vadd.xlane.f32.xlu0 %v707
    %v709 = vpop.xlane.xlu0 %708
    %v710 = vrcp.pop %v658
    %v711 = vrcp.pop %v661
    %v712 = vrcp.pop %v664
    %v713 = vrcp.pop %v667
    %v714 = vrcp.pop %v670
    %v715 = vrcp.pop %v673
    %v716 = vrcp.pop %v676
    %v717 = vrcp.pop %v679
    %v718 = vrcp.pop %v682
    %v719 = vrcp.pop %v685
    %v720 = vrcp.pop %v688
    %v721 = vrcp.pop %v691
    %v722 = vrcp.pop %v694
    %v723 = vrcp.pop %v697
    %v724 = vrcp.pop %v700
    %v725 = vrcp.pop %v703
    %v726 = vrcp.pop %v706
    %v727 = vrcp.pop %v709
    %v728 = vmul.f32 %v621, %v710
    %v729 = vmul.f32 %v623, %v711
    %v730 = vmul.f32 %v625, %v712
    %v731 = vmul.f32 %v627, %v713
    %v732 = vmul.f32 %v629, %v714
    %v733 = vmul.f32 %v631, %v715
    %v734 = vmul.f32 %v633, %v716
    %v735 = vmul.f32 %v635, %v717
    %v736 = vmul.f32 %v637, %v718
    %v737 = vmul.f32 %v639, %v719
    %v738 = vmul.f32 %v641, %v720
    %v739 = vmul.f32 %v643, %v721
    %v740 = vmul.f32 %v645, %v722
    %v741 = vmul.f32 %v647, %v723
    %v742 = vmul.f32 %v649, %v724
    %v743 = vmul.f32 %v651, %v725
    %v744 = vmul.f32 %v653, %v726
    %v745 = vmul.f32 %v655, %v727
    %746 = vrot.lane.b32.xlu0 %v256, 64
    %v747 = vpop.permute.xlu0 %746
    %748 = vrot.lane.b32.xlu0 %v259, 64
    %v749 = vpop.permute.xlu0 %748
    %750 = vrot.lane.b32.xlu0 %v262, 64
    %v751 = vpop.permute.xlu0 %750
    %v756 = vsel %vm264, %v728, 0
    %v759 = vsel %vm264, %v729, 0
    %v762 = vsel %vm264, %v730, 0
    %v765 = vsel %vm264, %v731, 0
    %v768 = vsel %vm264, %v732, 0
    %v771 = vsel %vm264, %v733, 0
    %v774 = vsel %vm264, %v734, 0
    %v777 = vsel %vm264, %v735, 0
    %v780 = vsel %vm264, %v736, 0
    %v783 = vsel %vm264, %v737, 0
    %v786 = vsel %vm264, %v738, 0
    %v789 = vsel %vm264, %v739, 0
    %v792 = vsel %vm264, %v740, 0
    %v795 = vsel %vm264, %v741, 0
    %v798 = vsel %vm264, %v742, 0
    %v801 = vsel %vm264, %v743, 0
    %v804 = vsel %vm264, %v744, 0
    %v807 = vsel %vm264, %v745, 0
    %809 = vmatpush.msra.mxu0 0.0
    %810 = vmatpush.msra.mxu0 0.0
    %811 = vmatpush.msra.mxu0 0.0
    %812 = vmatpush.msra.mxu0 0.0
    %813 = vmatpush.msra.mxu0 0.0
    %814 = vmatpush.msra.mxu0 0.0
    %815 = vmatpush.msra.mxu0 0.0
    %816 = vmatpush.msra.mxu0 0.0
    %817 = vmatpush.msra.mxu0 0.0
    %818 = vmatpush.msra.mxu0 0.0
    %819 = vmatpush.msra.mxu0 0.0
    %820 = vmatpush.msra.mxu0 0.0
    %821 = vmatpush.msra.mxu0 0.0
    %822 = vmatpush.msra.mxu0 %v751
    %823 = vmatpush.msra.mxu0 %v749
    %824 = vmatpush.msra.mxu0 %v747
    %825 = vmatmul.f32.gmra.mxu0 %v756
    %v826 = vpop.f32.mrf.mxu0
    %v827 = vadd.f32 0.0, %v826
    %828 = vmatmul.f32.gmra.mxu0 %v759
    %v829 = vpop.f32.mrf.mxu0
    %v830 = vadd.f32 0.0, %v829
    %831 = vmatmul.f32.gmra.mxu0 %v762
    %v832 = vpop.f32.mrf.mxu0
    %v833 = vadd.f32 0.0, %v832
    %834 = vmatmul.f32.gmra.mxu0 %v765
    %v835 = vpop.f32.mrf.mxu0
    %v836 = vadd.f32 0.0, %v835
    %837 = vmatmul.f32.gmra.mxu0 %v768
    %v838 = vpop.f32.mrf.mxu0
    %v839 = vadd.f32 0.0, %v838
    %840 = vmatmul.f32.gmra.mxu0 %v771
    %v841 = vpop.f32.mrf.mxu0
    %v842 = vadd.f32 0.0, %v841
    %843 = vmatmul.f32.gmra.mxu0 %v774
    %v844 = vpop.f32.mrf.mxu0
    %v845 = vadd.f32 0.0, %v844
    %846 = vmatmul.f32.gmra.mxu0 %v777
    %v847 = vpop.f32.mrf.mxu0
    %v848 = vadd.f32 0.0, %v847
    %849 = vmatmul.f32.gmra.mxu0 %v780
    %v850 = vpop.f32.mrf.mxu0
    %v851 = vadd.f32 0.0, %v850
    %852 = vmatmul.f32.gmra.mxu0 %v783
    %v853 = vpop.f32.mrf.mxu0
    %v854 = vadd.f32 0.0, %v853
    %855 = vmatmul.f32.gmra.mxu0 %v786
    %v856 = vpop.f32.mrf.mxu0
    %v857 = vadd.f32 0.0, %v856
    %858 = vmatmul.f32.gmra.mxu0 %v789
    %v859 = vpop.f32.mrf.mxu0
    %v860 = vadd.f32 0.0, %v859
    %861 = vmatmul.f32.gmra.mxu0 %v792
    %v862 = vpop.f32.mrf.mxu0
    %v863 = vadd.f32 0.0, %v862
    %864 = vmatmul.f32.gmra.mxu0 %v795
    %v865 = vpop.f32.mrf.mxu0
    %v866 = vadd.f32 0.0, %v865
    %867 = vmatmul.f32.gmra.mxu0 %v798
    %v868 = vpop.f32.mrf.mxu0
    %v869 = vadd.f32 0.0, %v868
    %870 = vmatmul.f32.gmra.mxu0 %v801
    %v871 = vpop.f32.mrf.mxu0
    %v872 = vadd.f32 0.0, %v871
    %873 = vmatmul.f32.gmra.mxu0 %v804
    %v874 = vpop.f32.mrf.mxu0
    %v875 = vadd.f32 0.0, %v874
    %876 = vmatmul.f32.gmra.mxu0 %v807
    %v877 = vpop.f32.mrf.mxu0
    %v878 = vadd.f32 0.0, %v877
    %879 = vdwg.mxu0
    %v880 = vmul.f32 %v827, %v203
    %v881 = vmul.f32 %v830, %v204
    %v882 = vmul.f32 %v833, %v205
    %v883 = vmul.f32 %v836, %v206
    %v884 = vmul.f32 %v839, %v207
    %v885 = vmul.f32 %v842, %v208
    %v886 = vmul.f32 %v845, %v209
    %v887 = vmul.f32 %v848, %v210
    %v888 = vmul.f32 %v851, %v211
    %v889 = vmul.f32 %v854, %v212
    %v890 = vmul.f32 %v857, %v213
    %v891 = vmul.f32 %v860, %v214
    %v892 = vmul.f32 %v863, %v215
    %v893 = vmul.f32 %v866, %v216
    %v894 = vmul.f32 %v869, %v217
    %v895 = vmul.f32 %v872, %v218
    %v896 = vmul.f32 %v875, %v219
    %v897 = vmul.f32 %v878, %v220
    %vm898 = vcmask 130048
    %v900 = vsel %vm898, %v198, 0
    %v903 = vsel %vm898, %v200, 0
    %v906 = vsel %vm898, %v202, 0
    %908 = vmatpush.msra.mxu0 %v895
    %909 = vmatpush.msra.mxu0 %v894
    %910 = vmatpush.msra.mxu0 %v893
    %911 = vmatpush.msra.mxu0 %v892
    %912 = vmatpush.msra.mxu0 %v891
    %913 = vmatpush.msra.mxu0 %v890
    %914 = vmatpush.msra.mxu0 %v889
    %915 = vmatpush.msra.mxu0 %v888
    %916 = vmatpush.msra.mxu0 %v887
    %917 = vmatpush.msra.mxu0 %v886
    %918 = vmatpush.msra.mxu0 %v885
    %919 = vmatpush.msra.mxu0 %v884
    %920 = vmatpush.msra.mxu0 %v883
    %921 = vmatpush.msra.mxu0 %v882
    %922 = vmatpush.msra.mxu0 %v881
    %923 = vmatpush.msra.mxu0 %v880
    %924 = vmatmul.f32.gmra.mxu0 %v197
    %v925 = vpop.f32.mrf.mxu0
    %v926 = vadd.f32 0.0, %v925
    %927 = vmatmul.f32.gmra.mxu0 %v199
    %v928 = vpop.f32.mrf.mxu0
    %v929 = vadd.f32 0.0, %v928
    %930 = vmatmul.f32.gmra.mxu0 %v201
    %v931 = vpop.f32.mrf.mxu0
    %v932 = vadd.f32 0.0, %v931
    %933 = vdwg.mxu0
    %934 = vmatpush.msra.mxu0 0.0
    %935 = vmatpush.msra.mxu0 0.0
    %936 = vmatpush.msra.mxu0 0.0
    %937 = vmatpush.msra.mxu0 0.0
    %938 = vmatpush.msra.mxu0 0.0
    %939 = vmatpush.msra.mxu0 0.0
    %940 = vmatpush.msra.mxu0 0.0
    %941 = vmatpush.msra.mxu0 0.0
    %942 = vmatpush.msra.mxu0 0.0
    %943 = vmatpush.msra.mxu0 0.0
    %944 = vmatpush.msra.mxu0 0.0
    %945 = vmatpush.msra.mxu0 0.0
    %946 = vmatpush.msra.mxu0 0.0
    %947 = vmatpush.msra.mxu0 0.0
    %948 = vmatpush.msra.mxu0 %v897
    %949 = vmatpush.msra.mxu0 %v896
    %950 = vmatmul.f32.gmra.mxu0 %v900
    %v951 = vpop.f32.mrf.mxu0
    %v952 = vadd.f32 %v926, %v951
    %953 = vmatmul.f32.gmra.mxu0 %v903
    %v954 = vpop.f32.mrf.mxu0
    %v955 = vadd.f32 %v929, %v954
    %956 = vmatmul.f32.gmra.mxu0 %v906
    %v957 = vpop.f32.mrf.mxu0
    %v958 = vadd.f32 %v932, %v957
    %959 = vdwg.mxu0
    %v960 = vld [vmem:[%s8] sm:$0xff]
    %v961 = vld [vmem:[%s8 + $0x8] sm:$0xff]
    %v962 = vld [vmem:[%s8 + $0x10] sm:$0xff]
    %v963 = vld [vmem:[%s8 + $0x18] sm:$0xff]
    %v964 = vld [vmem:[%s9] sm:$0x1]
    %v966 = vperm.slane %v964, 0
    %v969 = vsel %vm73, %v952, 0
    %v972 = vsel %vm73, %v955, 0
    %v975 = vsel %vm73, %v958, 0
    %977 = vmatpush.msra.mxu0 0.0
    %978 = vmatpush.msra.mxu0 0.0
    %979 = vmatpush.msra.mxu0 0.0
    %980 = vmatpush.msra.mxu0 0.0
    %981 = vmatpush.msra.mxu0 0.0
    %982 = vmatpush.msra.mxu0 0.0
    %983 = vmatpush.msra.mxu0 0.0
    %984 = vmatpush.msra.mxu0 0.0
    %985 = vmatpush.msra.mxu0 0.0
    %986 = vmatpush.msra.mxu0 0.0
    %987 = vmatpush.msra.mxu0 0.0
    %988 = vmatpush.msra.mxu0 0.0
    %989 = vmatpush.msra.mxu0 %v963
    %990 = vmatpush.msra.mxu0 %v962
    %991 = vmatpush.msra.mxu0 %v961
    %992 = vmatpush.msra.mxu0 %v960
    %993 = vmatmul.f32.gmra.mxu0 %v969
    %v994 = vpop.f32.mrf.mxu0
    %v995 = vadd.f32 %v966, %v994
    %996 = vmatmul.f32.gmra.mxu0 %v972
    %v997 = vpop.f32.mrf.mxu0
    %v998 = vadd.f32 %v966, %v997
    %999 = vmatmul.f32.gmra.mxu0 %v975
    %v1000 = vpop.f32.mrf.mxu0
    %v1001 = vadd.f32 %v966, %v1000
    %1002 = vdwg.mxu0
    %v1003 = vadd.f32 %v158, %v995
    %v1004 = vadd.f32 %v159, %v998
    %v1005 = vadd.f32 %v160, %v1001
    %v1006 = vld [vmem:[%s10] sm:$0x1]
    %v1007 = vld [vmem:[%s11] sm:$0x1]
    %v1008 = vsel %vm73, %v1003, 0.0
    %1009 = vadd.xlane.f32.xlu0 %v1008
    %v1010 = vpop.xlane.xlu0 %1009
    %v1011 = vsel %vm73, %v1004, 0.0
    %1012 = vadd.xlane.f32.xlu0 %v1011
    %v1013 = vpop.xlane.xlu0 %1012
    %v1014 = vsel %vm73, %v1005, 0.0
    %1015 = vadd.xlane.f32.xlu0 %v1014
    %v1016 = vpop.xlane.xlu0 %1015
    %v1017 = vrcp.pop 32.0
    %v1018 = vmul.f32 32.0, %v1017
    %v1019 = vsub.f32 1.0, %v1018
    %v1020 = vmul.f32 %v1017, %v1019
    %v1021 = vadd.f32 %v1017, %v1020
    %vm1022 = vweird.f32 %v1017
    %v1023 = vsel %vm1022, %v1017, %v1021
    %v1024 = vmul.f32 %v1010, %v1023
    %v1025 = vmul.f32 %v1013, %v1023
    %v1026 = vmul.f32 %v1016, %v1023
    %v1027 = vsub.f32 %v1003, %v1024
    %v1028 = vsub.f32 %v1004, %v1025
    %v1029 = vsub.f32 %v1005, %v1026
    %v1030 = vmul.f32 %v1027, %v1027
    %v1031 = vmul.f32 %v1028, %v1028
    %v1032 = vmul.f32 %v1029, %v1029
    %v1033 = vsel %vm73, %v1030, 0.0
    %1034 = vadd.xlane.f32.xlu0 %v1033
    %v1035 = vpop.xlane.xlu0 %1034
    %v1036 = vsel %vm73, %v1031, 0.0
    %1037 = vadd.xlane.f32.xlu0 %v1036
    %v1038 = vpop.xlane.xlu0 %1037
    %v1039 = vsel %vm73, %v1032, 0.0
    %1040 = vadd.xlane.f32.xlu0 %v1039
    %v1041 = vpop.xlane.xlu0 %1040
    %v1042 = vmul.f32 %v1035, %v1023
    %v1043 = vmul.f32 %v1038, %v1023
    %v1044 = vmul.f32 %v1041, %v1023
    %v1045 = vadd.f32 %v1042, 1e-05
    %v1046 = vadd.f32 %v1043, 1e-05
    %v1047 = vadd.f32 %v1044, 1e-05
    %v1048 = vrsqrt.pop %v1045
    %v1049 = vmul.f32 %v1048, %v1045
    %v1050 = vmul.f32 %v1049, %v1048
    %v1051 = vmul.f32 0.5, %v1050
    %v1052 = vsub.f32 1.5, %v1051
    %v1053 = vmul.f32 %v1048, %v1052
    %vm1054 = vweird.f32 %v1045
    %vm1055 = vweird.f32 %v1048
    %vm1056 = vmor %vm1054, %vm1055
    %v1057 = vsel %vm1056, %v1048, %v1053
    %v1058 = vrsqrt.pop %v1046
    %v1059 = vmul.f32 %v1058, %v1046
    %v1060 = vmul.f32 %v1059, %v1058
    %v1061 = vmul.f32 0.5, %v1060
    %v1062 = vsub.f32 1.5, %v1061
    %v1063 = vmul.f32 %v1058, %v1062
    %vm1064 = vweird.f32 %v1046
    %vm1065 = vweird.f32 %v1058
    %vm1066 = vmor %vm1064, %vm1065
    %v1067 = vsel %vm1066, %v1058, %v1063
    %v1068 = vrsqrt.pop %v1047
    %v1069 = vmul.f32 %v1068, %v1047
    %v1070 = vmul.f32 %v1069, %v1068
    %v1071 = vmul.f32 0.5, %v1070
    %v1072 = vsub.f32 1.5, %v1071
    %v1073 = vmul.f32 %v1068, %v1072
    %vm1074 = vweird.f32 %v1047
    %vm1075 = vweird.f32 %v1068
    %vm1076 = vmor %vm1074, %vm1075
    %v1077 = vsel %vm1076, %v1068, %v1073
    %v1078 = vmul.f32 %v1027, %v1057
    %v1079 = vmul.f32 %v1028, %v1067
    %v1080 = vmul.f32 %v1029, %v1077
    %v1082 = vperm.slane %v1006, 0
    %v1084 = vmul.f32 %v1078, %v1082
    %v1085 = vmul.f32 %v1079, %v1082
    %v1086 = vmul.f32 %v1080, %v1082
    %v1088 = vperm.slane %v1007, 0
    %v1090 = vadd.f32 %v1084, %v1088
    %v1091 = vadd.f32 %v1085, %v1088
    %v1092 = vadd.f32 %v1086, %v1088
    %v1093 = vpack.c.bf16 %v1091, %v1090
    %v1094 = vpack.c.bf16 %v1092, %v1092
    %v1095 = vld [vmem:[%s12] sm:$0xff]
    %v1096 = vld [vmem:[%s12 + $0x8] sm:$0xff]
    %v1097 = vld [vmem:[%s12 + $0x40] sm:$0xff]
    %v1098 = vld [vmem:[%s12 + $0x48] sm:$0xff]
    %v1099 = vld [vmem:[%s12 + $0x80] sm:$0xff]
    %v1100 = vld [vmem:[%s12 + $0x88] sm:$0xff]
    %v1101 = vld [vmem:[%s12 + $0xc0] sm:$0xff]
    %v1102 = vld [vmem:[%s12 + $0xc8] sm:$0xff]
    %v1103 = vld [vmem:[%s13] sm:$0xf]
    %v1105 = vperm.slane %v1103, 0
    %v1106 = vperm.slane %v1103, 1
    %v1107 = vperm.slane %v1103, 2
    %v1108 = vperm.slane %v1103, 3
    %v1121 = vunpack.c.l.b16 %v1095
    %v1122 = vunpack.c.h.b16 %v1095
    %v1123 = vunpack.c.l.b16 %v1096
    %v1124 = vunpack.c.h.b16 %v1096
    %v1125 = vunpack.c.l.b16 %v1097
    %v1126 = vunpack.c.h.b16 %v1097
    %v1127 = vunpack.c.l.b16 %v1098
    %v1128 = vunpack.c.h.b16 %v1098
    %v1129 = vunpack.c.l.b16 %v1099
    %v1130 = vunpack.c.h.b16 %v1099
    %v1131 = vunpack.c.l.b16 %v1100
    %v1132 = vunpack.c.h.b16 %v1100
    %v1133 = vunpack.c.l.b16 %v1101
    %v1134 = vunpack.c.h.b16 %v1101
    %v1135 = vunpack.c.l.b16 %v1102
    %v1136 = vunpack.c.h.b16 %v1102
    %v1137 = vpack.c.b16 %v1125, %v1121
    %v1138 = vpack.c.b16 %v1126, %v1122
    %v1139 = vpack.c.b16 %v1127, %v1123
    %v1140 = vpack.c.b16 %v1128, %v1124
    %v1141 = vpack.c.b16 %v1133, %v1129
    %v1142 = vpack.c.b16 %v1134, %v1130
    %v1143 = vpack.c.b16 %v1135, %v1131
    %v1144 = vpack.c.b16 %v1136, %v1132
    %v1154 = vsel %vm73, %v1093, 0
    %v1157 = vsel %vm73, %v1094, 0
    %1159 = vmatpush.bf16.msra.mxu0 0
    %1160 = vmatpush.bf16.msra.mxu0 0
    %1161 = vmatpush.bf16.msra.mxu0 0
    %1162 = vmatpush.bf16.msra.mxu0 0
    %1163 = vmatpush.bf16.msra.mxu0 0
    %1164 = vmatpush.bf16.msra.mxu0 0
    %1165 = vmatpush.bf16.msra.mxu0 %v1141
    %1166 = vmatpush.bf16.msra.mxu0 %v1137
    %1167 = vmatmul.bf16.gmra.mxu0 %v1154
    %v1168 = vpop.f32.mrf.mxu0
    %v1169 = vadd.f32 %v1105, %v1168
    %v1170 = vpop.f32.mrf.mxu0
    %v1171 = vadd.f32 %v1105, %v1170
    %1172 = vmatmul.bf16.gmra.mxu0 %v1157
    %v1173 = vpop.f32.mrf.mxu0
    %v1174 = vadd.f32 %v1105, %v1173
    %v1175 = vpop.f32.mrf.mxu0
    %1176 = vdwg.mxu0
    %1177 = vmatpush.bf16.msra.mxu0 0
    %1178 = vmatpush.bf16.msra.mxu0 0
    %1179 = vmatpush.bf16.msra.mxu0 0
    %1180 = vmatpush.bf16.msra.mxu0 0
    %1181 = vmatpush.bf16.msra.mxu0 0
    %1182 = vmatpush.bf16.msra.mxu0 0
    %1183 = vmatpush.bf16.msra.mxu0 %v1142
    %1184 = vmatpush.bf16.msra.mxu0 %v1138
    %1185 = vmatmul.bf16.gmra.mxu0 %v1154
    %v1186 = vpop.f32.mrf.mxu0
    %v1187 = vadd.f32 %v1106, %v1186
    %v1188 = vpop.f32.mrf.mxu0
    %v1189 = vadd.f32 %v1106, %v1188
    %1190 = vmatmul.bf16.gmra.mxu0 %v1157
    %v1191 = vpop.f32.mrf.mxu0
    %v1192 = vadd.f32 %v1106, %v1191
    %v1193 = vpop.f32.mrf.mxu0
    %1194 = vdwg.mxu0
    %1195 = vmatpush.bf16.msra.mxu0 0
    %1196 = vmatpush.bf16.msra.mxu0 0
    %1197 = vmatpush.bf16.msra.mxu0 0
    %1198 = vmatpush.bf16.msra.mxu0 0
    %1199 = vmatpush.bf16.msra.mxu0 0
    %1200 = vmatpush.bf16.msra.mxu0 0
    %1201 = vmatpush.bf16.msra.mxu0 %v1143
    %1202 = vmatpush.bf16.msra.mxu0 %v1139
    %1203 = vmatmul.bf16.gmra.mxu0 %v1154
    %v1204 = vpop.f32.mrf.mxu0
    %v1205 = vadd.f32 %v1107, %v1204
    %v1206 = vpop.f32.mrf.mxu0
    %v1207 = vadd.f32 %v1107, %v1206
    %1208 = vmatmul.bf16.gmra.mxu0 %v1157
    %v1209 = vpop.f32.mrf.mxu0
    %v1210 = vadd.f32 %v1107, %v1209
    %v1211 = vpop.f32.mrf.mxu0
    %1212 = vdwg.mxu0
    %1213 = vmatpush.bf16.msra.mxu0 0
    %1214 = vmatpush.bf16.msra.mxu0 0
    %1215 = vmatpush.bf16.msra.mxu0 0
    %1216 = vmatpush.bf16.msra.mxu0 0
    %1217 = vmatpush.bf16.msra.mxu0 0
    %1218 = vmatpush.bf16.msra.mxu0 0
    %1219 = vmatpush.bf16.msra.mxu0 %v1144
    %1220 = vmatpush.bf16.msra.mxu0 %v1140
    %1221 = vmatmul.bf16.gmra.mxu0 %v1154
    %v1222 = vpop.f32.mrf.mxu0
    %v1223 = vadd.f32 %v1108, %v1222
    %v1224 = vpop.f32.mrf.mxu0
    %v1225 = vadd.f32 %v1108, %v1224
    %1226 = vmatmul.bf16.gmra.mxu0 %v1157
    %v1227 = vpop.f32.mrf.mxu0
    %v1228 = vadd.f32 %v1108, %v1227
    %v1229 = vpop.f32.mrf.mxu0
    %1230 = vdwg.mxu0
    %v1231 = vmax.f32 %v1169, 0.0
    %v1232 = vmax.f32 %v1187, 0.0
    %v1233 = vmax.f32 %v1205, 0.0
    %v1234 = vmax.f32 %v1223, 0.0
    %v1235 = vmax.f32 %v1171, 0.0
    %v1236 = vmax.f32 %v1189, 0.0
    %v1237 = vmax.f32 %v1207, 0.0
    %v1238 = vmax.f32 %v1225, 0.0
    %v1239 = vmax.f32 %v1174, 0.0
    %v1240 = vmax.f32 %v1192, 0.0
    %v1241 = vmax.f32 %v1210, 0.0
    %v1242 = vmax.f32 %v1228, 0.0
    %v1243 = vpack.c.bf16 %v1235, %v1231
    %v1244 = vpack.c.bf16 %v1236, %v1232
    %v1245 = vpack.c.bf16 %v1237, %v1233
    %v1246 = vpack.c.bf16 %v1238, %v1234
    %v1247 = vpack.c.bf16 %v1239, %v1239
    %v1248 = vpack.c.bf16 %v1240, %v1240
    %v1249 = vpack.c.bf16 %v1241, %v1241
    %v1250 = vpack.c.bf16 %v1242, %v1242
    %v1251 = vld [vmem:[%s14] sm:$0xf]
    %v1252 = vld [vmem:[%s14 + $0x4] sm:$0xf]
    %v1253 = vld [vmem:[%s14 + $0x8] sm:$0xf]
    %v1254 = vld [vmem:[%s14 + $0xc] sm:$0xf]
    %v1255 = vld [vmem:[%s14 + $0x10] sm:$0xf]
    %v1256 = vld [vmem:[%s14 + $0x14] sm:$0xf]
    %v1257 = vld [vmem:[%s14 + $0x18] sm:$0xf]
    %v1258 = vld [vmem:[%s14 + $0x1c] sm:$0xf]
    %v1259 = vld [vmem:[%s14 + $0x20] sm:$0xf]
    %v1260 = vld [vmem:[%s14 + $0x24] sm:$0xf]
    %v1261 = vld [vmem:[%s14 + $0x28] sm:$0xf]
    %v1262 = vld [vmem:[%s14 + $0x2c] sm:$0xf]
    %v1263 = vld [vmem:[%s14 + $0x30] sm:$0xf]
    %v1264 = vld [vmem:[%s14 + $0x34] sm:$0xf]
    %v1265 = vld [vmem:[%s14 + $0x38] sm:$0xf]
    %v1266 = vld [vmem:[%s14 + $0x3c] sm:$0xf]
    %v1267 = vld [vmem:[%s14 + $0x40] sm:$0xf]
    %v1268 = vld [vmem:[%s14 + $0x44] sm:$0xf]
    %v1269 = vld [vmem:[%s14 + $0x48] sm:$0xf]
    %v1270 = vld [vmem:[%s14 + $0x4c] sm:$0xf]
    %v1271 = vld [vmem:[%s14 + $0x50] sm:$0xf]
    %v1272 = vld [vmem:[%s14 + $0x54] sm:$0xf]
    %v1273 = vld [vmem:[%s14 + $0x58] sm:$0xf]
    %v1274 = vld [vmem:[%s14 + $0x5c] sm:$0xf]
    %v1275 = vld [vmem:[%s14 + $0x60] sm:$0xf]
    %v1276 = vld [vmem:[%s14 + $0x64] sm:$0xf]
    %v1277 = vld [vmem:[%s14 + $0x68] sm:$0xf]
    %v1278 = vld [vmem:[%s14 + $0x6c] sm:$0xf]
    %v1279 = vld [vmem:[%s14 + $0x70] sm:$0xf]
    %v1280 = vld [vmem:[%s14 + $0x74] sm:$0xf]
    %v1281 = vld [vmem:[%s14 + $0x78] sm:$0xf]
    %v1282 = vld [vmem:[%s14 + $0x7c] sm:$0xf]
    %v1283 = vld [vmem:[%s14 + $0x80] sm:$0xf]
    %v1284 = vld [vmem:[%s14 + $0x84] sm:$0xf]
    %v1285 = vld [vmem:[%s14 + $0x88] sm:$0xf]
    %v1286 = vld [vmem:[%s14 + $0x8c] sm:$0xf]
    %v1287 = vld [vmem:[%s14 + $0x90] sm:$0xf]
    %v1288 = vld [vmem:[%s14 + $0x94] sm:$0xf]
    %v1289 = vld [vmem:[%s14 + $0x98] sm:$0xf]
    %v1290 = vld [vmem:[%s14 + $0x9c] sm:$0xf]
    %v1291 = vld [vmem:[%s14 + $0xa0] sm:$0xf]
    %v1292 = vld [vmem:[%s14 + $0xa4] sm:$0xf]
    %v1293 = vld [vmem:[%s14 + $0xa8] sm:$0xf]
    %v1294 = vld [vmem:[%s14 + $0xac] sm:$0xf]
    %v1295 = vld [vmem:[%s14 + $0xb0] sm:$0xf]
    %v1296 = vld [vmem:[%s14 + $0xb4] sm:$0xf]
    %v1297 = vld [vmem:[%s14 + $0xb8] sm:$0xf]
    %v1298 = vld [vmem:[%s14 + $0xbc] sm:$0xf]
    %v1299 = vld [vmem:[%s14 + $0xc0] sm:$0xf]
    %v1300 = vld [vmem:[%s14 + $0xc4] sm:$0xf]
    %v1301 = vld [vmem:[%s14 + $0xc8] sm:$0xf]
    %v1302 = vld [vmem:[%s14 + $0xcc] sm:$0xf]
    %v1303 = vld [vmem:[%s14 + $0xd0] sm:$0xf]
    %v1304 = vld [vmem:[%s14 + $0xd4] sm:$0xf]
    %v1305 = vld [vmem:[%s14 + $0xd8] sm:$0xf]
    %v1306 = vld [vmem:[%s14 + $0xdc] sm:$0xf]
    %v1307 = vld [vmem:[%s14 + $0xe0] sm:$0xf]
    %v1308 = vld [vmem:[%s14 + $0xe4] sm:$0xf]
    %v1309 = vld [vmem:[%s14 + $0xe8] sm:$0xf]
    %v1310 = vld [vmem:[%s14 + $0xec] sm:$0xf]
    %v1311 = vld [vmem:[%s14 + $0xf0] sm:$0xf]
    %v1312 = vld [vmem:[%s14 + $0xf4] sm:$0xf]
    %v1313 = vld [vmem:[%s14 + $0xf8] sm:$0xf]
    %v1314 = vld [vmem:[%s14 + $0xfc] sm:$0xf]
    %v1315 = vld [vmem:[%s12 + $0x10] sm:$0xff]
    %v1316 = vld [vmem:[%s12 + $0x18] sm:$0xff]
    %v1317 = vld [vmem:[%s12 + $0x50] sm:$0xff]
    %v1318 = vld [vmem:[%s12 + $0x58] sm:$0xff]
    %v1319 = vld [vmem:[%s12 + $0x90] sm:$0xff]
    %v1320 = vld [vmem:[%s12 + $0x98] sm:$0xff]
    %v1321 = vld [vmem:[%s12 + $0xd0] sm:$0xff]
    %v1322 = vld [vmem:[%s12 + $0xd8] sm:$0xff]
    %v1323 = vld [vmem:[%s13 + $0x4] sm:$0xf]
    %v1325 = vperm.slane %v1323, 0
    %v1326 = vperm.slane %v1323, 1
    %v1327 = vperm.slane %v1323, 2
    %v1328 = vperm.slane %v1323, 3
    %v1341 = vunpack.c.l.b16 %v1315
    %v1342 = vunpack.c.h.b16 %v1315
    %v1343 = vunpack.c.l.b16 %v1316
    %v1344 = vunpack.c.h.b16 %v1316
    %v1345 = vunpack.c.l.b16 %v1317
    %v1346 = vunpack.c.h.b16 %v1317
    %v1347 = vunpack.c.l.b16 %v1318
    %v1348 = vunpack.c.h.b16 %v1318
    %v1349 = vunpack.c.l.b16 %v1319
    %v1350 = vunpack.c.h.b16 %v1319
    %v1351 = vunpack.c.l.b16 %v1320
    %v1352 = vunpack.c.h.b16 %v1320
    %v1353 = vunpack.c.l.b16 %v1321
    %v1354 = vunpack.c.h.b16 %v1321
    %v1355 = vunpack.c.l.b16 %v1322
    %v1356 = vunpack.c.h.b16 %v1322
    %v1357 = vpack.c.b16 %v1345, %v1341
    %v1358 = vpack.c.b16 %v1346, %v1342
    %v1359 = vpack.c.b16 %v1347, %v1343
    %v1360 = vpack.c.b16 %v1348, %v1344
    %v1361 = vpack.c.b16 %v1353, %v1349
    %v1362 = vpack.c.b16 %v1354, %v1350
    %v1363 = vpack.c.b16 %v1355, %v1351
    %v1364 = vpack.c.b16 %v1356, %v1352
    %1373 = vmatpush.bf16.msra.mxu0 0
    %1374 = vmatpush.bf16.msra.mxu0 0
    %1375 = vmatpush.bf16.msra.mxu0 0
    %1376 = vmatpush.bf16.msra.mxu0 0
    %1377 = vmatpush.bf16.msra.mxu0 0
    %1378 = vmatpush.bf16.msra.mxu0 0
    %1379 = vmatpush.bf16.msra.mxu0 %v1361
    %1380 = vmatpush.bf16.msra.mxu0 %v1357
    %1381 = vmatmul.bf16.gmra.mxu0 %v1154
    %v1382 = vpop.f32.mrf.mxu0
    %v1383 = vadd.f32 %v1325, %v1382
    %v1384 = vpop.f32.mrf.mxu0
    %v1385 = vadd.f32 %v1325, %v1384
    %1386 = vmatmul.bf16.gmra.mxu0 %v1157
    %v1387 = vpop.f32.mrf.mxu0
    %v1388 = vadd.f32 %v1325, %v1387
    %v1389 = vpop.f32.mrf.mxu0
    %1390 = vdwg.mxu0
    %1391 = vmatpush.bf16.msra.mxu0 0
    %1392 = vmatpush.bf16.msra.mxu0 0
    %1393 = vmatpush.bf16.msra.mxu0 0
    %1394 = vmatpush.bf16.msra.mxu0 0
    %1395 = vmatpush.bf16.msra.mxu0 0
    %1396 = vmatpush.bf16.msra.mxu0 0
    %1397 = vmatpush.bf16.msra.mxu0 %v1362
    %1398 = vmatpush.bf16.msra.mxu0 %v1358
    %1399 = vmatmul.bf16.gmra.mxu0 %v1154
    %v1400 = vpop.f32.mrf.mxu0
    %v1401 = vadd.f32 %v1326, %v1400
    %v1402 = vpop.f32.mrf.mxu0
    %v1403 = vadd.f32 %v1326, %v1402
    %1404 = vmatmul.bf16.gmra.mxu0 %v1157
    %v1405 = vpop.f32.mrf.mxu0
    %v1406 = vadd.f32 %v1326, %v1405
    %v1407 = vpop.f32.mrf.mxu0
    %1408 = vdwg.mxu0
    %1409 = vmatpush.bf16.msra.mxu0 0
    %1410 = vmatpush.bf16.msra.mxu0 0
    %1411 = vmatpush.bf16.msra.mxu0 0
    %1412 = vmatpush.bf16.msra.mxu0 0
    %1413 = vmatpush.bf16.msra.mxu0 0
    %1414 = vmatpush.bf16.msra.mxu0 0
    %1415 = vmatpush.bf16.msra.mxu0 %v1363
    %1416 = vmatpush.bf16.msra.mxu0 %v1359
    %1417 = vmatmul.bf16.gmra.mxu0 %v1154
    %v1418 = vpop.f32.mrf.mxu0
    %v1419 = vadd.f32 %v1327, %v1418
    %v1420 = vpop.f32.mrf.mxu0
    %v1421 = vadd.f32 %v1327, %v1420
    %1422 = vmatmul.bf16.gmra.mxu0 %v1157
    %v1423 = vpop.f32.mrf.mxu0
    %v1424 = vadd.f32 %v1327, %v1423
    %v1425 = vpop.f32.mrf.mxu0
    %1426 = vdwg.mxu0
    %1427 = vmatpush.bf16.msra.mxu0 0
    %1428 = vmatpush.bf16.msra.mxu0 0
    %1429 = vmatpush.bf16.msra.mxu0 0
    %1430 = vmatpush.bf16.msra.mxu0 0
    %1431 = vmatpush.bf16.msra.mxu0 0
    %1432 = vmatpush.bf16.msra.mxu0 0
    %1433 = vmatpush.bf16.msra.mxu0 %v1364
    %1434 = vmatpush.bf16.msra.mxu0 %v1360
    %1435 = vmatmul.bf16.gmra.mxu0 %v1154
    %v1436 = vpop.f32.mrf.mxu0
    %v1437 = vadd.f32 %v1328, %v1436
    %v1438 = vpop.f32.mrf.mxu0
    %v1439 = vadd.f32 %v1328, %v1438
    %1440 = vmatmul.bf16.gmra.mxu0 %v1157
    %v1441 = vpop.f32.mrf.mxu0
    %v1442 = vadd.f32 %v1328, %v1441
    %v1443 = vpop.f32.mrf.mxu0
    %1444 = vdwg.mxu0
    %v1445 = vmax.f32 %v1383, 0.0
    %v1446 = vmax.f32 %v1401, 0.0
    %v1447 = vmax.f32 %v1419, 0.0
    %v1448 = vmax.f32 %v1437, 0.0
    %v1449 = vmax.f32 %v1385, 0.0
    %v1450 = vmax.f32 %v1403, 0.0
    %v1451 = vmax.f32 %v1421, 0.0
    %v1452 = vmax.f32 %v1439, 0.0
    %v1453 = vmax.f32 %v1388, 0.0
    %v1454 = vmax.f32 %v1406, 0.0
    %v1455 = vmax.f32 %v1424, 0.0
    %v1456 = vmax.f32 %v1442, 0.0
    %v1457 = vpack.c.bf16 %v1449, %v1445
    %v1458 = vpack.c.bf16 %v1450, %v1446
    %v1459 = vpack.c.bf16 %v1451, %v1447
    %v1460 = vpack.c.bf16 %v1452, %v1448
    %v1461 = vpack.c.bf16 %v1453, %v1453
    %v1462 = vpack.c.bf16 %v1454, %v1454
    %v1463 = vpack.c.bf16 %v1455, %v1455
    %v1464 = vpack.c.bf16 %v1456, %v1456
    %v1465 = vld [vmem:[%s14 + $0x100] sm:$0xf]
    %v1466 = vld [vmem:[%s14 + $0x104] sm:$0xf]
    %v1467 = vld [vmem:[%s14 + $0x108] sm:$0xf]
    %v1468 = vld [vmem:[%s14 + $0x10c] sm:$0xf]
    %v1469 = vld [vmem:[%s14 + $0x110] sm:$0xf]
    %v1470 = vld [vmem:[%s14 + $0x114] sm:$0xf]
    %v1471 = vld [vmem:[%s14 + $0x118] sm:$0xf]
    %v1472 = vld [vmem:[%s14 + $0x11c] sm:$0xf]
    %v1473 = vld [vmem:[%s14 + $0x120] sm:$0xf]
    %v1474 = vld [vmem:[%s14 + $0x124] sm:$0xf]
    %v1475 = vld [vmem:[%s14 + $0x128] sm:$0xf]
    %v1476 = vld [vmem:[%s14 + $0x12c] sm:$0xf]
    %v1477 = vld [vmem:[%s14 + $0x130] sm:$0xf]
    %v1478 = vld [vmem:[%s14 + $0x134] sm:$0xf]
    %v1479 = vld [vmem:[%s14 + $0x138] sm:$0xf]
    %v1480 = vld [vmem:[%s14 + $0x13c] sm:$0xf]
    %v1481 = vld [vmem:[%s14 + $0x140] sm:$0xf]
    %v1482 = vld [vmem:[%s14 + $0x144] sm:$0xf]
    %v1483 = vld [vmem:[%s14 + $0x148] sm:$0xf]
    %v1484 = vld [vmem:[%s14 + $0x14c] sm:$0xf]
    %v1485 = vld [vmem:[%s14 + $0x150] sm:$0xf]
    %v1486 = vld [vmem:[%s14 + $0x154] sm:$0xf]
    %v1487 = vld [vmem:[%s14 + $0x158] sm:$0xf]
    %v1488 = vld [vmem:[%s14 + $0x15c] sm:$0xf]
    %v1489 = vld [vmem:[%s14 + $0x160] sm:$0xf]
    %v1490 = vld [vmem:[%s14 + $0x164] sm:$0xf]
    %v1491 = vld [vmem:[%s14 + $0x168] sm:$0xf]
    %v1492 = vld [vmem:[%s14 + $0x16c] sm:$0xf]
    %v1493 = vld [vmem:[%s14 + $0x170] sm:$0xf]
    %v1494 = vld [vmem:[%s14 + $0x174] sm:$0xf]
    %v1495 = vld [vmem:[%s14 + $0x178] sm:$0xf]
    %v1496 = vld [vmem:[%s14 + $0x17c] sm:$0xf]
    %v1497 = vld [vmem:[%s14 + $0x180] sm:$0xf]
    %v1498 = vld [vmem:[%s14 + $0x184] sm:$0xf]
    %v1499 = vld [vmem:[%s14 + $0x188] sm:$0xf]
    %v1500 = vld [vmem:[%s14 + $0x18c] sm:$0xf]
    %v1501 = vld [vmem:[%s14 + $0x190] sm:$0xf]
    %v1502 = vld [vmem:[%s14 + $0x194] sm:$0xf]
    %v1503 = vld [vmem:[%s14 + $0x198] sm:$0xf]
    %v1504 = vld [vmem:[%s14 + $0x19c] sm:$0xf]
    %v1505 = vld [vmem:[%s14 + $0x1a0] sm:$0xf]
    %v1506 = vld [vmem:[%s14 + $0x1a4] sm:$0xf]
    %v1507 = vld [vmem:[%s14 + $0x1a8] sm:$0xf]
    %v1508 = vld [vmem:[%s14 + $0x1ac] sm:$0xf]
    %v1509 = vld [vmem:[%s14 + $0x1b0] sm:$0xf]
    %v1510 = vld [vmem:[%s14 + $0x1b4] sm:$0xf]
    %v1511 = vld [vmem:[%s14 + $0x1b8] sm:$0xf]
    %v1512 = vld [vmem:[%s14 + $0x1bc] sm:$0xf]
    %v1513 = vld [vmem:[%s14 + $0x1c0] sm:$0xf]
    %v1514 = vld [vmem:[%s14 + $0x1c4] sm:$0xf]
    %v1515 = vld [vmem:[%s14 + $0x1c8] sm:$0xf]
    %v1516 = vld [vmem:[%s14 + $0x1cc] sm:$0xf]
    %v1517 = vld [vmem:[%s14 + $0x1d0] sm:$0xf]
    %v1518 = vld [vmem:[%s14 + $0x1d4] sm:$0xf]
    %v1519 = vld [vmem:[%s14 + $0x1d8] sm:$0xf]
    %v1520 = vld [vmem:[%s14 + $0x1dc] sm:$0xf]
    %v1521 = vld [vmem:[%s14 + $0x1e0] sm:$0xf]
    %v1522 = vld [vmem:[%s14 + $0x1e4] sm:$0xf]
    %v1523 = vld [vmem:[%s14 + $0x1e8] sm:$0xf]
    %v1524 = vld [vmem:[%s14 + $0x1ec] sm:$0xf]
    %v1525 = vld [vmem:[%s14 + $0x1f0] sm:$0xf]
    %v1526 = vld [vmem:[%s14 + $0x1f4] sm:$0xf]
    %v1527 = vld [vmem:[%s14 + $0x1f8] sm:$0xf]
    %v1528 = vld [vmem:[%s14 + $0x1fc] sm:$0xf]
    %v1593 = vunpack.c.l.b16 %v1465
    %v1594 = vunpack.c.l.b16 %v1466
    %v1595 = vunpack.c.l.b16 %v1467
    %v1596 = vunpack.c.l.b16 %v1468
    %v1597 = vunpack.c.l.b16 %v1469
    %v1598 = vunpack.c.l.b16 %v1470
    %v1599 = vunpack.c.l.b16 %v1471
    %v1600 = vunpack.c.l.b16 %v1472
    %v1601 = vunpack.c.l.b16 %v1473
    %v1602 = vunpack.c.l.b16 %v1474
    %v1603 = vunpack.c.l.b16 %v1475
    %v1604 = vunpack.c.l.b16 %v1476
    %v1605 = vunpack.c.l.b16 %v1477
    %v1606 = vunpack.c.l.b16 %v1478
    %v1607 = vunpack.c.l.b16 %v1479
    %v1608 = vunpack.c.l.b16 %v1480
    %v1609 = vunpack.c.l.b16 %v1481
    %v1610 = vunpack.c.l.b16 %v1482
    %v1611 = vunpack.c.l.b16 %v1483
    %v1612 = vunpack.c.l.b16 %v1484
    %v1613 = vunpack.c.l.b16 %v1485
    %v1614 = vunpack.c.l.b16 %v1486
    %v1615 = vunpack.c.l.b16 %v1487
    %v1616 = vunpack.c.l.b16 %v1488
    %v1617 = vunpack.c.l.b16 %v1489
    %v1618 = vunpack.c.l.b16 %v1490
    %v1619 = vunpack.c.l.b16 %v1491
    %v1620 = vunpack.c.l.b16 %v1492
    %v1621 = vunpack.c.l.b16 %v1493
    %v1622 = vunpack.c.l.b16 %v1494
    %v1623 = vunpack.c.l.b16 %v1495
    %v1624 = vunpack.c.l.b16 %v1496
    %v1625 = vunpack.c.l.b16 %v1497
    %v1626 = vunpack.c.l.b16 %v1498
    %v1627 = vunpack.c.l.b16 %v1499
    %v1628 = vunpack.c.l.b16 %v1500
    %v1629 = vunpack.c.l.b16 %v1501
    %v1630 = vunpack.c.l.b16 %v1502
    %v1631 = vunpack.c.l.b16 %v1503
    %v1632 = vunpack.c.l.b16 %v1504
    %v1633 = vunpack.c.l.b16 %v1505
    %v1634 = vunpack.c.l.b16 %v1506
    %v1635 = vunpack.c.l.b16 %v1507
    %v1636 = vunpack.c.l.b16 %v1508
    %v1637 = vunpack.c.l.b16 %v1509
    %v1638 = vunpack.c.l.b16 %v1510
    %v1639 = vunpack.c.l.b16 %v1511
    %v1640 = vunpack.c.l.b16 %v1512
    %v1641 = vunpack.c.l.b16 %v1513
    %v1642 = vunpack.c.l.b16 %v1514
    %v1643 = vunpack.c.l.b16 %v1515
    %v1644 = vunpack.c.l.b16 %v1516
    %v1645 = vunpack.c.l.b16 %v1517
    %v1646 = vunpack.c.l.b16 %v1518
    %v1647 = vunpack.c.l.b16 %v1519
    %v1648 = vunpack.c.l.b16 %v1520
    %v1649 = vunpack.c.l.b16 %v1521
    %v1650 = vunpack.c.l.b16 %v1522
    %v1651 = vunpack.c.l.b16 %v1523
    %v1652 = vunpack.c.l.b16 %v1524
    %v1653 = vunpack.c.l.b16 %v1525
    %v1654 = vunpack.c.l.b16 %v1526
    %v1655 = vunpack.c.l.b16 %v1527
    %v1656 = vunpack.c.l.b16 %v1528
    %v1657 = vpack.c.b16 %v1594, %v1593
    %v1658 = vpack.c.b16 %v1596, %v1595
    %v1659 = vpack.c.b16 %v1598, %v1597
    %v1660 = vpack.c.b16 %v1600, %v1599
    %v1661 = vpack.c.b16 %v1602, %v1601
    %v1662 = vpack.c.b16 %v1604, %v1603
    %v1663 = vpack.c.b16 %v1606, %v1605
    %v1664 = vpack.c.b16 %v1608, %v1607
    %v1665 = vpack.c.b16 %v1610, %v1609
    %v1666 = vpack.c.b16 %v1612, %v1611
    %v1667 = vpack.c.b16 %v1614, %v1613
    %v1668 = vpack.c.b16 %v1616, %v1615
    %v1669 = vpack.c.b16 %v1618, %v1617
    %v1670 = vpack.c.b16 %v1620, %v1619
    %v1671 = vpack.c.b16 %v1622, %v1621
    %v1672 = vpack.c.b16 %v1624, %v1623
    %v1673 = vpack.c.b16 %v1626, %v1625
    %v1674 = vpack.c.b16 %v1628, %v1627
    %v1675 = vpack.c.b16 %v1630, %v1629
    %v1676 = vpack.c.b16 %v1632, %v1631
    %v1677 = vpack.c.b16 %v1634, %v1633
    %v1678 = vpack.c.b16 %v1636, %v1635
    %v1679 = vpack.c.b16 %v1638, %v1637
    %v1680 = vpack.c.b16 %v1640, %v1639
    %v1681 = vpack.c.b16 %v1642, %v1641
    %v1682 = vpack.c.b16 %v1644, %v1643
    %v1683 = vpack.c.b16 %v1646, %v1645
    %v1684 = vpack.c.b16 %v1648, %v1647
    %v1685 = vpack.c.b16 %v1650, %v1649
    %v1686 = vpack.c.b16 %v1652, %v1651
    %v1687 = vpack.c.b16 %v1654, %v1653
    %v1688 = vpack.c.b16 %v1656, %v1655
    %1721 = vmatpush.bf16.msra.mxu0 %v1664
    %1722 = vmatpush.bf16.msra.mxu0 %v1663
    %1723 = vmatpush.bf16.msra.mxu0 %v1662
    %1724 = vmatpush.bf16.msra.mxu0 %v1661
    %1725 = vmatpush.bf16.msra.mxu0 %v1660
    %1726 = vmatpush.bf16.msra.mxu0 %v1659
    %1727 = vmatpush.bf16.msra.mxu0 %v1658
    %1728 = vmatpush.bf16.msra.mxu0 %v1657
    %1729 = vmatmul.bf16.gmra.mxu0 %v1457
    %v1730 = vpop.f32.mrf.mxu0
    %v1731 = vadd.f32 0.0, %v1730
    %v1732 = vpop.f32.mrf.mxu0
    %v1733 = vadd.f32 0.0, %v1732
    %1734 = vmatmul.bf16.gmra.mxu0 %v1461
    %v1735 = vpop.f32.mrf.mxu0
    %v1736 = vadd.f32 0.0, %v1735
    %v1737 = vpop.f32.mrf.mxu0
    %1738 = vdwg.mxu0
    %1739 = vmatpush.bf16.msra.mxu0 %v1672
    %1740 = vmatpush.bf16.msra.mxu0 %v1671
    %1741 = vmatpush.bf16.msra.mxu0 %v1670
    %1742 = vmatpush.bf16.msra.mxu0 %v1669
    %1743 = vmatpush.bf16.msra.mxu0 %v1668
    %1744 = vmatpush.bf16.msra.mxu0 %v1667
    %1745 = vmatpush.bf16.msra.mxu0 %v1666
    %1746 = vmatpush.bf16.msra.mxu0 %v1665
    %1747 = vmatmul.bf16.gmra.mxu0 %v1458
    %v1748 = vpop.f32.mrf.mxu0
    %v1749 = vadd.f32 %v1731, %v1748
    %v1750 = vpop.f32.mrf.mxu0
    %v1751 = vadd.f32 %v1733, %v1750
    %1752 = vmatmul.bf16.gmra.mxu0 %v1462
    %v1753 = vpop.f32.mrf.mxu0
    %v1754 = vadd.f32 %v1736, %v1753
    %v1755 = vpop.f32.mrf.mxu0
    %1756 = vdwg.mxu0
    %1757 = vmatpush.bf16.msra.mxu0 %v1680
    %1758 = vmatpush.bf16.msra.mxu0 %v1679
    %1759 = vmatpush.bf16.msra.mxu0 %v1678
    %1760 = vmatpush.bf16.msra.mxu0 %v1677
    %1761 = vmatpush.bf16.msra.mxu0 %v1676
    %1762 = vmatpush.bf16.msra.mxu0 %v1675
    %1763 = vmatpush.bf16.msra.mxu0 %v1674
    %1764 = vmatpush.bf16.msra.mxu0 %v1673
    %1765 = vmatmul.bf16.gmra.mxu0 %v1459
    %v1766 = vpop.f32.mrf.mxu0
    %v1767 = vadd.f32 %v1749, %v1766
    %v1768 = vpop.f32.mrf.mxu0
    %v1769 = vadd.f32 %v1751, %v1768
    %1770 = vmatmul.bf16.gmra.mxu0 %v1463
    %v1771 = vpop.f32.mrf.mxu0
    %v1772 = vadd.f32 %v1754, %v1771
    %v1773 = vpop.f32.mrf.mxu0
    %1774 = vdwg.mxu0
    %1775 = vmatpush.bf16.msra.mxu0 %v1688
    %1776 = vmatpush.bf16.msra.mxu0 %v1687
    %1777 = vmatpush.bf16.msra.mxu0 %v1686
    %1778 = vmatpush.bf16.msra.mxu0 %v1685
    %1779 = vmatpush.bf16.msra.mxu0 %v1684
    %1780 = vmatpush.bf16.msra.mxu0 %v1683
    %1781 = vmatpush.bf16.msra.mxu0 %v1682
    %1782 = vmatpush.bf16.msra.mxu0 %v1681
    %1783 = vmatmul.bf16.gmra.mxu0 %v1460
    %v1784 = vpop.f32.mrf.mxu0
    %v1785 = vadd.f32 %v1767, %v1784
    %v1786 = vpop.f32.mrf.mxu0
    %v1787 = vadd.f32 %v1769, %v1786
    %1788 = vmatmul.bf16.gmra.mxu0 %v1464
    %v1789 = vpop.f32.mrf.mxu0
    %v1790 = vadd.f32 %v1772, %v1789
    %v1791 = vpop.f32.mrf.mxu0
    %1792 = vdwg.mxu0
    %v1857 = vunpack.c.l.b16 %v1251
    %v1858 = vunpack.c.l.b16 %v1252
    %v1859 = vunpack.c.l.b16 %v1253
    %v1860 = vunpack.c.l.b16 %v1254
    %v1861 = vunpack.c.l.b16 %v1255
    %v1862 = vunpack.c.l.b16 %v1256
    %v1863 = vunpack.c.l.b16 %v1257
    %v1864 = vunpack.c.l.b16 %v1258
    %v1865 = vunpack.c.l.b16 %v1259
    %v1866 = vunpack.c.l.b16 %v1260
    %v1867 = vunpack.c.l.b16 %v1261
    %v1868 = vunpack.c.l.b16 %v1262
    %v1869 = vunpack.c.l.b16 %v1263
    %v1870 = vunpack.c.l.b16 %v1264
    %v1871 = vunpack.c.l.b16 %v1265
    %v1872 = vunpack.c.l.b16 %v1266
    %v1873 = vunpack.c.l.b16 %v1267
    %v1874 = vunpack.c.l.b16 %v1268
    %v1875 = vunpack.c.l.b16 %v1269
    %v1876 = vunpack.c.l.b16 %v1270
    %v1877 = vunpack.c.l.b16 %v1271
    %v1878 = vunpack.c.l.b16 %v1272
    %v1879 = vunpack.c.l.b16 %v1273
    %v1880 = vunpack.c.l.b16 %v1274
    %v1881 = vunpack.c.l.b16 %v1275
    %v1882 = vunpack.c.l.b16 %v1276
    %v1883 = vunpack.c.l.b16 %v1277
    %v1884 = vunpack.c.l.b16 %v1278
    %v1885 = vunpack.c.l.b16 %v1279
    %v1886 = vunpack.c.l.b16 %v1280
    %v1887 = vunpack.c.l.b16 %v1281
    %v1888 = vunpack.c.l.b16 %v1282
    %v1889 = vunpack.c.l.b16 %v1283
    %v1890 = vunpack.c.l.b16 %v1284
    %v1891 = vunpack.c.l.b16 %v1285
    %v1892 = vunpack.c.l.b16 %v1286
    %v1893 = vunpack.c.l.b16 %v1287
    %v1894 = vunpack.c.l.b16 %v1288
    %v1895 = vunpack.c.l.b16 %v1289
    %v1896 = vunpack.c.l.b16 %v1290
    %v1897 = vunpack.c.l.b16 %v1291
    %v1898 = vunpack.c.l.b16 %v1292
    %v1899 = vunpack.c.l.b16 %v1293
    %v1900 = vunpack.c.l.b16 %v1294
    %v1901 = vunpack.c.l.b16 %v1295
    %v1902 = vunpack.c.l.b16 %v1296
    %v1903 = vunpack.c.l.b16 %v1297
    %v1904 = vunpack.c.l.b16 %v1298
    %v1905 = vunpack.c.l.b16 %v1299
    %v1906 = vunpack.c.l.b16 %v1300
    %v1907 = vunpack.c.l.b16 %v1301
    %v1908 = vunpack.c.l.b16 %v1302
    %v1909 = vunpack.c.l.b16 %v1303
    %v1910 = vunpack.c.l.b16 %v1304
    %v1911 = vunpack.c.l.b16 %v1305
    %v1912 = vunpack.c.l.b16 %v1306
    %v1913 = vunpack.c.l.b16 %v1307
    %v1914 = vunpack.c.l.b16 %v1308
    %v1915 = vunpack.c.l.b16 %v1309
    %v1916 = vunpack.c.l.b16 %v1310
    %v1917 = vunpack.c.l.b16 %v1311
    %v1918 = vunpack.c.l.b16 %v1312
    %v1919 = vunpack.c.l.b16 %v1313
    %v1920 = vunpack.c.l.b16 %v1314
    %v1921 = vpack.c.b16 %v1858, %v1857
    %v1922 = vpack.c.b16 %v1860, %v1859
    %v1923 = vpack.c.b16 %v1862, %v1861
    %v1924 = vpack.c.b16 %v1864, %v1863
    %v1925 = vpack.c.b16 %v1866, %v1865
    %v1926 = vpack.c.b16 %v1868, %v1867
    %v1927 = vpack.c.b16 %v1870, %v1869
    %v1928 = vpack.c.b16 %v1872, %v1871
    %v1929 = vpack.c.b16 %v1874, %v1873
    %v1930 = vpack.c.b16 %v1876, %v1875
    %v1931 = vpack.c.b16 %v1878, %v1877
    %v1932 = vpack.c.b16 %v1880, %v1879
    %v1933 = vpack.c.b16 %v1882, %v1881
    %v1934 = vpack.c.b16 %v1884, %v1883
    %v1935 = vpack.c.b16 %v1886, %v1885
    %v1936 = vpack.c.b16 %v1888, %v1887
    %v1937 = vpack.c.b16 %v1890, %v1889
    %v1938 = vpack.c.b16 %v1892, %v1891
    %v1939 = vpack.c.b16 %v1894, %v1893
    %v1940 = vpack.c.b16 %v1896, %v1895
    %v1941 = vpack.c.b16 %v1898, %v1897
    %v1942 = vpack.c.b16 %v1900, %v1899
    %v1943 = vpack.c.b16 %v1902, %v1901
    %v1944 = vpack.c.b16 %v1904, %v1903
    %v1945 = vpack.c.b16 %v1906, %v1905
    %v1946 = vpack.c.b16 %v1908, %v1907
    %v1947 = vpack.c.b16 %v1910, %v1909
    %v1948 = vpack.c.b16 %v1912, %v1911
    %v1949 = vpack.c.b16 %v1914, %v1913
    %v1950 = vpack.c.b16 %v1916, %v1915
    %v1951 = vpack.c.b16 %v1918, %v1917
    %v1952 = vpack.c.b16 %v1920, %v1919
    %1985 = vmatpush.bf16.msra.mxu0 %v1928
    %1986 = vmatpush.bf16.msra.mxu0 %v1927
    %1987 = vmatpush.bf16.msra.mxu0 %v1926
    %1988 = vmatpush.bf16.msra.mxu0 %v1925
    %1989 = vmatpush.bf16.msra.mxu0 %v1924
    %1990 = vmatpush.bf16.msra.mxu0 %v1923
    %1991 = vmatpush.bf16.msra.mxu0 %v1922
    %1992 = vmatpush.bf16.msra.mxu0 %v1921
    %1993 = vmatmul.bf16.gmra.mxu0 %v1243
    %v1994 = vpop.f32.mrf.mxu0
    %v1995 = vadd.f32 %v1785, %v1994
    %v1996 = vpop.f32.mrf.mxu0
    %v1997 = vadd.f32 %v1787, %v1996
    %1998 = vmatmul.bf16.gmra.mxu0 %v1247
    %v1999 = vpop.f32.mrf.mxu0
    %v2000 = vadd.f32 %v1790, %v1999
    %v2001 = vpop.f32.mrf.mxu0
    %2002 = vdwg.mxu0
    %2003 = vmatpush.bf16.msra.mxu0 %v1936
    %2004 = vmatpush.bf16.msra.mxu0 %v1935
    %2005 = vmatpush.bf16.msra.mxu0 %v1934
    %2006 = vmatpush.bf16.msra.mxu0 %v1933
    %2007 = vmatpush.bf16.msra.mxu0 %v1932
    %2008 = vmatpush.bf16.msra.mxu0 %v1931
    %2009 = vmatpush.bf16.msra.mxu0 %v1930
    %2010 = vmatpush.bf16.msra.mxu0 %v1929
    %2011 = vmatmul.bf16.gmra.mxu0 %v1244
    %v2012 = vpop.f32.mrf.mxu0
    %v2013 = vadd.f32 %v1995, %v2012
    %v2014 = vpop.f32.mrf.mxu0
    %v2015 = vadd.f32 %v1997, %v2014
    %2016 = vmatmul.bf16.gmra.mxu0 %v1248
    %v2017 = vpop.f32.mrf.mxu0
    %v2018 = vadd.f32 %v2000, %v2017
    %v2019 = vpop.f32.mrf.mxu0
    %2020 = vdwg.mxu0
    %2021 = vmatpush.bf16.msra.mxu0 %v1944
    %2022 = vmatpush.bf16.msra.mxu0 %v1943
    %2023 = vmatpush.bf16.msra.mxu0 %v1942
    %2024 = vmatpush.bf16.msra.mxu0 %v1941
    %2025 = vmatpush.bf16.msra.mxu0 %v1940
    %2026 = vmatpush.bf16.msra.mxu0 %v1939
    %2027 = vmatpush.bf16.msra.mxu0 %v1938
    %2028 = vmatpush.bf16.msra.mxu0 %v1937
    %2029 = vmatmul.bf16.gmra.mxu0 %v1245
    %v2030 = vpop.f32.mrf.mxu0
    %v2031 = vadd.f32 %v2013, %v2030
    %v2032 = vpop.f32.mrf.mxu0
    %v2033 = vadd.f32 %v2015, %v2032
    %2034 = vmatmul.bf16.gmra.mxu0 %v1249
    %v2035 = vpop.f32.mrf.mxu0
    %v2036 = vadd.f32 %v2018, %v2035
    %v2037 = vpop.f32.mrf.mxu0
    %2038 = vdwg.mxu0
    %2039 = vmatpush.bf16.msra.mxu0 %v1952
    %2040 = vmatpush.bf16.msra.mxu0 %v1951
    %2041 = vmatpush.bf16.msra.mxu0 %v1950
    %2042 = vmatpush.bf16.msra.mxu0 %v1949
    %2043 = vmatpush.bf16.msra.mxu0 %v1948
    %2044 = vmatpush.bf16.msra.mxu0 %v1947
    %2045 = vmatpush.bf16.msra.mxu0 %v1946
    %2046 = vmatpush.bf16.msra.mxu0 %v1945
    %2047 = vmatmul.bf16.gmra.mxu0 %v1246
    %v2048 = vpop.f32.mrf.mxu0
    %v2049 = vadd.f32 %v2031, %v2048
    %v2050 = vpop.f32.mrf.mxu0
    %v2051 = vadd.f32 %v2033, %v2050
    %2052 = vmatmul.bf16.gmra.mxu0 %v1250
    %v2053 = vpop.f32.mrf.mxu0
    %v2054 = vadd.f32 %v2036, %v2053
    %v2055 = vpop.f32.mrf.mxu0
    %2056 = vdwg.mxu0
    %v2057 = vld [vmem:[%s12 + $0x20] sm:$0xff]
    %v2058 = vld [vmem:[%s12 + $0x28] sm:$0xff]
    %v2059 = vld [vmem:[%s12 + $0x60] sm:$0xff]
    %v2060 = vld [vmem:[%s12 + $0x68] sm:$0xff]
    %v2061 = vld [vmem:[%s12 + $0xa0] sm:$0xff]
    %v2062 = vld [vmem:[%s12 + $0xa8] sm:$0xff]
    %v2063 = vld [vmem:[%s12 + $0xe0] sm:$0xff]
    %v2064 = vld [vmem:[%s12 + $0xe8] sm:$0xff]
    %v2065 = vld [vmem:[%s13 + $0x8] sm:$0xf]
    %v2067 = vperm.slane %v2065, 0
    %v2068 = vperm.slane %v2065, 1
    %v2069 = vperm.slane %v2065, 2
    %v2070 = vperm.slane %v2065, 3
    %v2083 = vunpack.c.l.b16 %v2057
    %v2084 = vunpack.c.h.b16 %v2057
    %v2085 = vunpack.c.l.b16 %v2058
    %v2086 = vunpack.c.h.b16 %v2058
    %v2087 = vunpack.c.l.b16 %v2059
    %v2088 = vunpack.c.h.b16 %v2059
    %v2089 = vunpack.c.l.b16 %v2060
    %v2090 = vunpack.c.h.b16 %v2060
    %v2091 = vunpack.c.l.b16 %v2061
    %v2092 = vunpack.c.h.b16 %v2061
    %v2093 = vunpack.c.l.b16 %v2062
    %v2094 = vunpack.c.h.b16 %v2062
    %v2095 = vunpack.c.l.b16 %v2063
    %v2096 = vunpack.c.h.b16 %v2063
    %v2097 = vunpack.c.l.b16 %v2064
    %v2098 = vunpack.c.h.b16 %v2064
    %v2099 = vpack.c.b16 %v2087, %v2083
    %v2100 = vpack.c.b16 %v2088, %v2084
    %v2101 = vpack.c.b16 %v2089, %v2085
    %v2102 = vpack.c.b16 %v2090, %v2086
    %v2103 = vpack.c.b16 %v2095, %v2091
    %v2104 = vpack.c.b16 %v2096, %v2092
    %v2105 = vpack.c.b16 %v2097, %v2093
    %v2106 = vpack.c.b16 %v2098, %v2094
    %2115 = vmatpush.bf16.msra.mxu0 0
    %2116 = vmatpush.bf16.msra.mxu0 0
    %2117 = vmatpush.bf16.msra.mxu0 0
    %2118 = vmatpush.bf16.msra.mxu0 0
    %2119 = vmatpush.bf16.msra.mxu0 0
    %2120 = vmatpush.bf16.msra.mxu0 0
    %2121 = vmatpush.bf16.msra.mxu0 %v2103
    %2122 = vmatpush.bf16.msra.mxu0 %v2099
    %2123 = vmatmul.bf16.gmra.mxu0 %v1154
    %v2124 = vpop.f32.mrf.mxu0
    %v2125 = vadd.f32 %v2067, %v2124
    %v2126 = vpop.f32.mrf.mxu0
    %v2127 = vadd.f32 %v2067, %v2126
    %2128 = vmatmul.bf16.gmra.mxu0 %v1157
    %v2129 = vpop.f32.mrf.mxu0
    %v2130 = vadd.f32 %v2067, %v2129
    %v2131 = vpop.f32.mrf.mxu0
    %2132 = vdwg.mxu0
    %2133 = vmatpush.bf16.msra.mxu0 0
    %2134 = vmatpush.bf16.msra.mxu0 0
    %2135 = vmatpush.bf16.msra.mxu0 0
    %2136 = vmatpush.bf16.msra.mxu0 0
    %2137 = vmatpush.bf16.msra.mxu0 0
    %2138 = vmatpush.bf16.msra.mxu0 0
    %2139 = vmatpush.bf16.msra.mxu0 %v2104
    %2140 = vmatpush.bf16.msra.mxu0 %v2100
    %2141 = vmatmul.bf16.gmra.mxu0 %v1154
    %v2142 = vpop.f32.mrf.mxu0
    %v2143 = vadd.f32 %v2068, %v2142
    %v2144 = vpop.f32.mrf.mxu0
    %v2145 = vadd.f32 %v2068, %v2144
    %2146 = vmatmul.bf16.gmra.mxu0 %v1157
    %v2147 = vpop.f32.mrf.mxu0
    %v2148 = vadd.f32 %v2068, %v2147
    %v2149 = vpop.f32.mrf.mxu0
    %2150 = vdwg.mxu0
    %2151 = vmatpush.bf16.msra.mxu0 0
    %2152 = vmatpush.bf16.msra.mxu0 0
    %2153 = vmatpush.bf16.msra.mxu0 0
    %2154 = vmatpush.bf16.msra.mxu0 0
    %2155 = vmatpush.bf16.msra.mxu0 0
    %2156 = vmatpush.bf16.msra.mxu0 0
    %2157 = vmatpush.bf16.msra.mxu0 %v2105
    %2158 = vmatpush.bf16.msra.mxu0 %v2101
    %2159 = vmatmul.bf16.gmra.mxu0 %v1154
    %v2160 = vpop.f32.mrf.mxu0
    %v2161 = vadd.f32 %v2069, %v2160
    %v2162 = vpop.f32.mrf.mxu0
    %v2163 = vadd.f32 %v2069, %v2162
    %2164 = vmatmul.bf16.gmra.mxu0 %v1157
    %v2165 = vpop.f32.mrf.mxu0
    %v2166 = vadd.f32 %v2069, %v2165
    %v2167 = vpop.f32.mrf.mxu0
    %2168 = vdwg.mxu0
    %2169 = vmatpush.bf16.msra.mxu0 0
    %2170 = vmatpush.bf16.msra.mxu0 0
    %2171 = vmatpush.bf16.msra.mxu0 0
    %2172 = vmatpush.bf16.msra.mxu0 0
    %2173 = vmatpush.bf16.msra.mxu0 0
    %2174 = vmatpush.bf16.msra.mxu0 0
    %2175 = vmatpush.bf16.msra.mxu0 %v2106
    %2176 = vmatpush.bf16.msra.mxu0 %v2102
    %2177 = vmatmul.bf16.gmra.mxu0 %v1154
    %v2178 = vpop.f32.mrf.mxu0
    %v2179 = vadd.f32 %v2070, %v2178
    %v2180 = vpop.f32.mrf.mxu0
    %v2181 = vadd.f32 %v2070, %v2180
    %2182 = vmatmul.bf16.gmra.mxu0 %v1157
    %v2183 = vpop.f32.mrf.mxu0
    %v2184 = vadd.f32 %v2070, %v2183
    %v2185 = vpop.f32.mrf.mxu0
    %2186 = vdwg.mxu0
    %v2187 = vmax.f32 %v2125, 0.0
    %v2188 = vmax.f32 %v2143, 0.0
    %v2189 = vmax.f32 %v2161, 0.0
    %v2190 = vmax.f32 %v2179, 0.0
    %v2191 = vmax.f32 %v2127, 0.0
    %v2192 = vmax.f32 %v2145, 0.0
    %v2193 = vmax.f32 %v2163, 0.0
    %v2194 = vmax.f32 %v2181, 0.0
    %v2195 = vmax.f32 %v2130, 0.0
    %v2196 = vmax.f32 %v2148, 0.0
    %v2197 = vmax.f32 %v2166, 0.0
    %v2198 = vmax.f32 %v2184, 0.0
    %v2199 = vpack.c.bf16 %v2191, %v2187
    %v2200 = vpack.c.bf16 %v2192, %v2188
    %v2201 = vpack.c.bf16 %v2193, %v2189
    %v2202 = vpack.c.bf16 %v2194, %v2190
    %v2203 = vpack.c.bf16 %v2195, %v2195
    %v2204 = vpack.c.bf16 %v2196, %v2196
    %v2205 = vpack.c.bf16 %v2197, %v2197
    %v2206 = vpack.c.bf16 %v2198, %v2198
    %v2207 = vld [vmem:[%s14 + $0x200] sm:$0xf]
    %v2208 = vld [vmem:[%s14 + $0x204] sm:$0xf]
    %v2209 = vld [vmem:[%s14 + $0x208] sm:$0xf]
    %v2210 = vld [vmem:[%s14 + $0x20c] sm:$0xf]
    %v2211 = vld [vmem:[%s14 + $0x210] sm:$0xf]
    %v2212 = vld [vmem:[%s14 + $0x214] sm:$0xf]
    %v2213 = vld [vmem:[%s14 + $0x218] sm:$0xf]
    %v2214 = vld [vmem:[%s14 + $0x21c] sm:$0xf]
    %v2215 = vld [vmem:[%s14 + $0x220] sm:$0xf]
    %v2216 = vld [vmem:[%s14 + $0x224] sm:$0xf]
    %v2217 = vld [vmem:[%s14 + $0x228] sm:$0xf]
    %v2218 = vld [vmem:[%s14 + $0x22c] sm:$0xf]
    %v2219 = vld [vmem:[%s14 + $0x230] sm:$0xf]
    %v2220 = vld [vmem:[%s14 + $0x234] sm:$0xf]
    %v2221 = vld [vmem:[%s14 + $0x238] sm:$0xf]
    %v2222 = vld [vmem:[%s14 + $0x23c] sm:$0xf]
    %v2223 = vld [vmem:[%s14 + $0x240] sm:$0xf]
    %v2224 = vld [vmem:[%s14 + $0x244] sm:$0xf]
    %v2225 = vld [vmem:[%s14 + $0x248] sm:$0xf]
    %v2226 = vld [vmem:[%s14 + $0x24c] sm:$0xf]
    %v2227 = vld [vmem:[%s14 + $0x250] sm:$0xf]
    %v2228 = vld [vmem:[%s14 + $0x254] sm:$0xf]
    %v2229 = vld [vmem:[%s14 + $0x258] sm:$0xf]
    %v2230 = vld [vmem:[%s14 + $0x25c] sm:$0xf]
    %v2231 = vld [vmem:[%s14 + $0x260] sm:$0xf]
    %v2232 = vld [vmem:[%s14 + $0x264] sm:$0xf]
    %v2233 = vld [vmem:[%s14 + $0x268] sm:$0xf]
    %v2234 = vld [vmem:[%s14 + $0x26c] sm:$0xf]
    %v2235 = vld [vmem:[%s14 + $0x270] sm:$0xf]
    %v2236 = vld [vmem:[%s14 + $0x274] sm:$0xf]
    %v2237 = vld [vmem:[%s14 + $0x278] sm:$0xf]
    %v2238 = vld [vmem:[%s14 + $0x27c] sm:$0xf]
    %v2239 = vld [vmem:[%s14 + $0x280] sm:$0xf]
    %v2240 = vld [vmem:[%s14 + $0x284] sm:$0xf]
    %v2241 = vld [vmem:[%s14 + $0x288] sm:$0xf]
    %v2242 = vld [vmem:[%s14 + $0x28c] sm:$0xf]
    %v2243 = vld [vmem:[%s14 + $0x290] sm:$0xf]
    %v2244 = vld [vmem:[%s14 + $0x294] sm:$0xf]
    %v2245 = vld [vmem:[%s14 + $0x298] sm:$0xf]
    %v2246 = vld [vmem:[%s14 + $0x29c] sm:$0xf]
    %v2247 = vld [vmem:[%s14 + $0x2a0] sm:$0xf]
    %v2248 = vld [vmem:[%s14 + $0x2a4] sm:$0xf]
    %v2249 = vld [vmem:[%s14 + $0x2a8] sm:$0xf]
    %v2250 = vld [vmem:[%s14 + $0x2ac] sm:$0xf]
    %v2251 = vld [vmem:[%s14 + $0x2b0] sm:$0xf]
    %v2252 = vld [vmem:[%s14 + $0x2b4] sm:$0xf]
    %v2253 = vld [vmem:[%s14 + $0x2b8] sm:$0xf]
    %v2254 = vld [vmem:[%s14 + $0x2bc] sm:$0xf]
    %v2255 = vld [vmem:[%s14 + $0x2c0] sm:$0xf]
    %v2256 = vld [vmem:[%s14 + $0x2c4] sm:$0xf]
    %v2257 = vld [vmem:[%s14 + $0x2c8] sm:$0xf]
    %v2258 = vld [vmem:[%s14 + $0x2cc] sm:$0xf]
    %v2259 = vld [vmem:[%s14 + $0x2d0] sm:$0xf]
    %v2260 = vld [vmem:[%s14 + $0x2d4] sm:$0xf]
    %v2261 = vld [vmem:[%s14 + $0x2d8] sm:$0xf]
    %v2262 = vld [vmem:[%s14 + $0x2dc] sm:$0xf]
    %v2263 = vld [vmem:[%s14 + $0x2e0] sm:$0xf]
    %v2264 = vld [vmem:[%s14 + $0x2e4] sm:$0xf]
    %v2265 = vld [vmem:[%s14 + $0x2e8] sm:$0xf]
    %v2266 = vld [vmem:[%s14 + $0x2ec] sm:$0xf]
    %v2267 = vld [vmem:[%s14 + $0x2f0] sm:$0xf]
    %v2268 = vld [vmem:[%s14 + $0x2f4] sm:$0xf]
    %v2269 = vld [vmem:[%s14 + $0x2f8] sm:$0xf]
    %v2270 = vld [vmem:[%s14 + $0x2fc] sm:$0xf]
    %v2335 = vunpack.c.l.b16 %v2207
    %v2336 = vunpack.c.l.b16 %v2208
    %v2337 = vunpack.c.l.b16 %v2209
    %v2338 = vunpack.c.l.b16 %v2210
    %v2339 = vunpack.c.l.b16 %v2211
    %v2340 = vunpack.c.l.b16 %v2212
    %v2341 = vunpack.c.l.b16 %v2213
    %v2342 = vunpack.c.l.b16 %v2214
    %v2343 = vunpack.c.l.b16 %v2215
    %v2344 = vunpack.c.l.b16 %v2216
    %v2345 = vunpack.c.l.b16 %v2217
    %v2346 = vunpack.c.l.b16 %v2218
    %v2347 = vunpack.c.l.b16 %v2219
    %v2348 = vunpack.c.l.b16 %v2220
    %v2349 = vunpack.c.l.b16 %v2221
    %v2350 = vunpack.c.l.b16 %v2222
    %v2351 = vunpack.c.l.b16 %v2223
    %v2352 = vunpack.c.l.b16 %v2224
    %v2353 = vunpack.c.l.b16 %v2225
    %v2354 = vunpack.c.l.b16 %v2226
    %v2355 = vunpack.c.l.b16 %v2227
    %v2356 = vunpack.c.l.b16 %v2228
    %v2357 = vunpack.c.l.b16 %v2229
    %v2358 = vunpack.c.l.b16 %v2230
    %v2359 = vunpack.c.l.b16 %v2231
    %v2360 = vunpack.c.l.b16 %v2232
    %v2361 = vunpack.c.l.b16 %v2233
    %v2362 = vunpack.c.l.b16 %v2234
    %v2363 = vunpack.c.l.b16 %v2235
    %v2364 = vunpack.c.l.b16 %v2236
    %v2365 = vunpack.c.l.b16 %v2237
    %v2366 = vunpack.c.l.b16 %v2238
    %v2367 = vunpack.c.l.b16 %v2239
    %v2368 = vunpack.c.l.b16 %v2240
    %v2369 = vunpack.c.l.b16 %v2241
    %v2370 = vunpack.c.l.b16 %v2242
    %v2371 = vunpack.c.l.b16 %v2243
    %v2372 = vunpack.c.l.b16 %v2244
    %v2373 = vunpack.c.l.b16 %v2245
    %v2374 = vunpack.c.l.b16 %v2246
    %v2375 = vunpack.c.l.b16 %v2247
    %v2376 = vunpack.c.l.b16 %v2248
    %v2377 = vunpack.c.l.b16 %v2249
    %v2378 = vunpack.c.l.b16 %v2250
    %v2379 = vunpack.c.l.b16 %v2251
    %v2380 = vunpack.c.l.b16 %v2252
    %v2381 = vunpack.c.l.b16 %v2253
    %v2382 = vunpack.c.l.b16 %v2254
    %v2383 = vunpack.c.l.b16 %v2255
    %v2384 = vunpack.c.l.b16 %v2256
    %v2385 = vunpack.c.l.b16 %v2257
    %v2386 = vunpack.c.l.b16 %v2258
    %v2387 = vunpack.c.l.b16 %v2259
    %v2388 = vunpack.c.l.b16 %v2260
    %v2389 = vunpack.c.l.b16 %v2261
    %v2390 = vunpack.c.l.b16 %v2262
    %v2391 = vunpack.c.l.b16 %v2263
    %v2392 = vunpack.c.l.b16 %v2264
    %v2393 = vunpack.c.l.b16 %v2265
    %v2394 = vunpack.c.l.b16 %v2266
    %v2395 = vunpack.c.l.b16 %v2267
    %v2396 = vunpack.c.l.b16 %v2268
    %v2397 = vunpack.c.l.b16 %v2269
    %v2398 = vunpack.c.l.b16 %v2270
    %v2399 = vpack.c.b16 %v2336, %v2335
    %v2400 = vpack.c.b16 %v2338, %v2337
    %v2401 = vpack.c.b16 %v2340, %v2339
    %v2402 = vpack.c.b16 %v2342, %v2341
    %v2403 = vpack.c.b16 %v2344, %v2343
    %v2404 = vpack.c.b16 %v2346, %v2345
    %v2405 = vpack.c.b16 %v2348, %v2347
    %v2406 = vpack.c.b16 %v2350, %v2349
    %v2407 = vpack.c.b16 %v2352, %v2351
    %v2408 = vpack.c.b16 %v2354, %v2353
    %v2409 = vpack.c.b16 %v2356, %v2355
    %v2410 = vpack.c.b16 %v2358, %v2357
    %v2411 = vpack.c.b16 %v2360, %v2359
    %v2412 = vpack.c.b16 %v2362, %v2361
    %v2413 = vpack.c.b16 %v2364, %v2363
    %v2414 = vpack.c.b16 %v2366, %v2365
    %v2415 = vpack.c.b16 %v2368, %v2367
    %v2416 = vpack.c.b16 %v2370, %v2369
    %v2417 = vpack.c.b16 %v2372, %v2371
    %v2418 = vpack.c.b16 %v2374, %v2373
    %v2419 = vpack.c.b16 %v2376, %v2375
    %v2420 = vpack.c.b16 %v2378, %v2377
    %v2421 = vpack.c.b16 %v2380, %v2379
    %v2422 = vpack.c.b16 %v2382, %v2381
    %v2423 = vpack.c.b16 %v2384, %v2383
    %v2424 = vpack.c.b16 %v2386, %v2385
    %v2425 = vpack.c.b16 %v2388, %v2387
    %v2426 = vpack.c.b16 %v2390, %v2389
    %v2427 = vpack.c.b16 %v2392, %v2391
    %v2428 = vpack.c.b16 %v2394, %v2393
    %v2429 = vpack.c.b16 %v2396, %v2395
    %v2430 = vpack.c.b16 %v2398, %v2397
    %2463 = vmatpush.bf16.msra.mxu0 %v2406
    %2464 = vmatpush.bf16.msra.mxu0 %v2405
    %2465 = vmatpush.bf16.msra.mxu0 %v2404
    %2466 = vmatpush.bf16.msra.mxu0 %v2403
    %2467 = vmatpush.bf16.msra.mxu0 %v2402
    %2468 = vmatpush.bf16.msra.mxu0 %v2401
    %2469 = vmatpush.bf16.msra.mxu0 %v2400
    %2470 = vmatpush.bf16.msra.mxu0 %v2399
    %2471 = vmatmul.bf16.gmra.mxu0 %v2199
    %v2472 = vpop.f32.mrf.mxu0
    %v2473 = vadd.f32 0.0, %v2472
    %v2474 = vpop.f32.mrf.mxu0
    %v2475 = vadd.f32 0.0, %v2474
    %2476 = vmatmul.bf16.gmra.mxu0 %v2203
    %v2477 = vpop.f32.mrf.mxu0
    %v2478 = vadd.f32 0.0, %v2477
    %v2479 = vpop.f32.mrf.mxu0
    %2480 = vdwg.mxu0
    %2481 = vmatpush.bf16.msra.mxu0 %v2414
    %2482 = vmatpush.bf16.msra.mxu0 %v2413
    %2483 = vmatpush.bf16.msra.mxu0 %v2412
    %2484 = vmatpush.bf16.msra.mxu0 %v2411
    %2485 = vmatpush.bf16.msra.mxu0 %v2410
    %2486 = vmatpush.bf16.msra.mxu0 %v2409
    %2487 = vmatpush.bf16.msra.mxu0 %v2408
    %2488 = vmatpush.bf16.msra.mxu0 %v2407
    %2489 = vmatmul.bf16.gmra.mxu0 %v2200
    %v2490 = vpop.f32.mrf.mxu0
    %v2491 = vadd.f32 %v2473, %v2490
    %v2492 = vpop.f32.mrf.mxu0
    %v2493 = vadd.f32 %v2475, %v2492
    %2494 = vmatmul.bf16.gmra.mxu0 %v2204
    %v2495 = vpop.f32.mrf.mxu0
    %v2496 = vadd.f32 %v2478, %v2495
    %v2497 = vpop.f32.mrf.mxu0
    %2498 = vdwg.mxu0
    %2499 = vmatpush.bf16.msra.mxu0 %v2422
    %2500 = vmatpush.bf16.msra.mxu0 %v2421
    %2501 = vmatpush.bf16.msra.mxu0 %v2420
    %2502 = vmatpush.bf16.msra.mxu0 %v2419
    %2503 = vmatpush.bf16.msra.mxu0 %v2418
    %2504 = vmatpush.bf16.msra.mxu0 %v2417
    %2505 = vmatpush.bf16.msra.mxu0 %v2416
    %2506 = vmatpush.bf16.msra.mxu0 %v2415
    %2507 = vmatmul.bf16.gmra.mxu0 %v2201
    %v2508 = vpop.f32.mrf.mxu0
    %v2509 = vadd.f32 %v2491, %v2508
    %v2510 = vpop.f32.mrf.mxu0
    %v2511 = vadd.f32 %v2493, %v2510
    %2512 = vmatmul.bf16.gmra.mxu0 %v2205
    %v2513 = vpop.f32.mrf.mxu0
    %v2514 = vadd.f32 %v2496, %v2513
    %v2515 = vpop.f32.mrf.mxu0
    %2516 = vdwg.mxu0
    %2517 = vmatpush.bf16.msra.mxu0 %v2430
    %2518 = vmatpush.bf16.msra.mxu0 %v2429
    %2519 = vmatpush.bf16.msra.mxu0 %v2428
    %2520 = vmatpush.bf16.msra.mxu0 %v2427
    %2521 = vmatpush.bf16.msra.mxu0 %v2426
    %2522 = vmatpush.bf16.msra.mxu0 %v2425
    %2523 = vmatpush.bf16.msra.mxu0 %v2424
    %2524 = vmatpush.bf16.msra.mxu0 %v2423
    %2525 = vmatmul.bf16.gmra.mxu0 %v2202
    %v2526 = vpop.f32.mrf.mxu0
    %v2527 = vadd.f32 %v2509, %v2526
    %v2528 = vpop.f32.mrf.mxu0
    %v2529 = vadd.f32 %v2511, %v2528
    %2530 = vmatmul.bf16.gmra.mxu0 %v2206
    %v2531 = vpop.f32.mrf.mxu0
    %v2532 = vadd.f32 %v2514, %v2531
    %v2533 = vpop.f32.mrf.mxu0
    %2534 = vdwg.mxu0
    %v2535 = vadd.f32 %v2049, %v2527
    %v2536 = vadd.f32 %v2051, %v2529
    %v2537 = vadd.f32 %v2054, %v2532
    %v2538 = vld [vmem:[%s12 + $0x30] sm:$0xff]
    %v2539 = vld [vmem:[%s12 + $0x38] sm:$0xff]
    %v2540 = vld [vmem:[%s12 + $0x70] sm:$0xff]
    %v2541 = vld [vmem:[%s12 + $0x78] sm:$0xff]
    %v2542 = vld [vmem:[%s12 + $0xb0] sm:$0xff]
    %v2543 = vld [vmem:[%s12 + $0xb8] sm:$0xff]
    %v2544 = vld [vmem:[%s12 + $0xf0] sm:$0xff]
    %v2545 = vld [vmem:[%s12 + $0xf8] sm:$0xff]
    %v2546 = vld [vmem:[%s13 + $0xc] sm:$0xf]
    %v2548 = vperm.slane %v2546, 0
    %v2549 = vperm.slane %v2546, 1
    %v2550 = vperm.slane %v2546, 2
    %v2551 = vperm.slane %v2546, 3
    %v2564 = vunpack.c.l.b16 %v2538
    %v2565 = vunpack.c.h.b16 %v2538
    %v2566 = vunpack.c.l.b16 %v2539
    %v2567 = vunpack.c.h.b16 %v2539
    %v2568 = vunpack.c.l.b16 %v2540
    %v2569 = vunpack.c.h.b16 %v2540
    %v2570 = vunpack.c.l.b16 %v2541
    %v2571 = vunpack.c.h.b16 %v2541
    %v2572 = vunpack.c.l.b16 %v2542
    %v2573 = vunpack.c.h.b16 %v2542
    %v2574 = vunpack.c.l.b16 %v2543
    %v2575 = vunpack.c.h.b16 %v2543
    %v2576 = vunpack.c.l.b16 %v2544
    %v2577 = vunpack.c.h.b16 %v2544
    %v2578 = vunpack.c.l.b16 %v2545
    %v2579 = vunpack.c.h.b16 %v2545
    %v2580 = vpack.c.b16 %v2568, %v2564
    %v2581 = vpack.c.b16 %v2569, %v2565
    %v2582 = vpack.c.b16 %v2570, %v2566
    %v2583 = vpack.c.b16 %v2571, %v2567
    %v2584 = vpack.c.b16 %v2576, %v2572
    %v2585 = vpack.c.b16 %v2577, %v2573
    %v2586 = vpack.c.b16 %v2578, %v2574
    %v2587 = vpack.c.b16 %v2579, %v2575
    %2596 = vmatpush.bf16.msra.mxu0 0
    %2597 = vmatpush.bf16.msra.mxu0 0
    %2598 = vmatpush.bf16.msra.mxu0 0
    %2599 = vmatpush.bf16.msra.mxu0 0
    %2600 = vmatpush.bf16.msra.mxu0 0
    %2601 = vmatpush.bf16.msra.mxu0 0
    %2602 = vmatpush.bf16.msra.mxu0 %v2584
    %2603 = vmatpush.bf16.msra.mxu0 %v2580
    %2604 = vmatmul.bf16.gmra.mxu0 %v1154
    %v2605 = vpop.f32.mrf.mxu0
    %v2606 = vadd.f32 %v2548, %v2605
    %v2607 = vpop.f32.mrf.mxu0
    %v2608 = vadd.f32 %v2548, %v2607
    %2609 = vmatmul.bf16.gmra.mxu0 %v1157
    %v2610 = vpop.f32.mrf.mxu0
    %v2611 = vadd.f32 %v2548, %v2610
    %v2612 = vpop.f32.mrf.mxu0
    %2613 = vdwg.mxu0
    %2614 = vmatpush.bf16.msra.mxu0 0
    %2615 = vmatpush.bf16.msra.mxu0 0
    %2616 = vmatpush.bf16.msra.mxu0 0
    %2617 = vmatpush.bf16.msra.mxu0 0
    %2618 = vmatpush.bf16.msra.mxu0 0
    %2619 = vmatpush.bf16.msra.mxu0 0
    %2620 = vmatpush.bf16.msra.mxu0 %v2585
    %2621 = vmatpush.bf16.msra.mxu0 %v2581
    %2622 = vmatmul.bf16.gmra.mxu0 %v1154
    %v2623 = vpop.f32.mrf.mxu0
    %v2624 = vadd.f32 %v2549, %v2623
    %v2625 = vpop.f32.mrf.mxu0
    %v2626 = vadd.f32 %v2549, %v2625
    %2627 = vmatmul.bf16.gmra.mxu0 %v1157
    %v2628 = vpop.f32.mrf.mxu0
    %v2629 = vadd.f32 %v2549, %v2628
    %v2630 = vpop.f32.mrf.mxu0
    %2631 = vdwg.mxu0
    %2632 = vmatpush.bf16.msra.mxu0 0
    %2633 = vmatpush.bf16.msra.mxu0 0
    %2634 = vmatpush.bf16.msra.mxu0 0
    %2635 = vmatpush.bf16.msra.mxu0 0
    %2636 = vmatpush.bf16.msra.mxu0 0
    %2637 = vmatpush.bf16.msra.mxu0 0
    %2638 = vmatpush.bf16.msra.mxu0 %v2586
    %2639 = vmatpush.bf16.msra.mxu0 %v2582
    %2640 = vmatmul.bf16.gmra.mxu0 %v1154
    %v2641 = vpop.f32.mrf.mxu0
    %v2642 = vadd.f32 %v2550, %v2641
    %v2643 = vpop.f32.mrf.mxu0
    %v2644 = vadd.f32 %v2550, %v2643
    %2645 = vmatmul.bf16.gmra.mxu0 %v1157
    %v2646 = vpop.f32.mrf.mxu0
    %v2647 = vadd.f32 %v2550, %v2646
    %v2648 = vpop.f32.mrf.mxu0
    %2649 = vdwg.mxu0
    %2650 = vmatpush.bf16.msra.mxu0 0
    %2651 = vmatpush.bf16.msra.mxu0 0
    %2652 = vmatpush.bf16.msra.mxu0 0
    %2653 = vmatpush.bf16.msra.mxu0 0
    %2654 = vmatpush.bf16.msra.mxu0 0
    %2655 = vmatpush.bf16.msra.mxu0 0
    %2656 = vmatpush.bf16.msra.mxu0 %v2587
    %2657 = vmatpush.bf16.msra.mxu0 %v2583
    %2658 = vmatmul.bf16.gmra.mxu0 %v1154
    %v2659 = vpop.f32.mrf.mxu0
    %v2660 = vadd.f32 %v2551, %v2659
    %v2661 = vpop.f32.mrf.mxu0
    %v2662 = vadd.f32 %v2551, %v2661
    %2663 = vmatmul.bf16.gmra.mxu0 %v1157
    %v2664 = vpop.f32.mrf.mxu0
    %v2665 = vadd.f32 %v2551, %v2664
    %v2666 = vpop.f32.mrf.mxu0
    %2667 = vdwg.mxu0
    %v2668 = vmax.f32 %v2606, 0.0
    %v2669 = vmax.f32 %v2624, 0.0
    %v2670 = vmax.f32 %v2642, 0.0
    %v2671 = vmax.f32 %v2660, 0.0
    %v2672 = vmax.f32 %v2608, 0.0
    %v2673 = vmax.f32 %v2626, 0.0
    %v2674 = vmax.f32 %v2644, 0.0
    %v2675 = vmax.f32 %v2662, 0.0
    %v2676 = vmax.f32 %v2611, 0.0
    %v2677 = vmax.f32 %v2629, 0.0
    %v2678 = vmax.f32 %v2647, 0.0
    %v2679 = vmax.f32 %v2665, 0.0
    %v2680 = vpack.c.bf16 %v2672, %v2668
    %v2681 = vpack.c.bf16 %v2673, %v2669
    %v2682 = vpack.c.bf16 %v2674, %v2670
    %v2683 = vpack.c.bf16 %v2675, %v2671
    %v2684 = vpack.c.bf16 %v2676, %v2676
    %v2685 = vpack.c.bf16 %v2677, %v2677
    %v2686 = vpack.c.bf16 %v2678, %v2678
    %v2687 = vpack.c.bf16 %v2679, %v2679
    %v2688 = vld [vmem:[%s14 + $0x300] sm:$0xf]
    %v2689 = vld [vmem:[%s14 + $0x304] sm:$0xf]
    %v2690 = vld [vmem:[%s14 + $0x308] sm:$0xf]
    %v2691 = vld [vmem:[%s14 + $0x30c] sm:$0xf]
    %v2692 = vld [vmem:[%s14 + $0x310] sm:$0xf]
    %v2693 = vld [vmem:[%s14 + $0x314] sm:$0xf]
    %v2694 = vld [vmem:[%s14 + $0x318] sm:$0xf]
    %v2695 = vld [vmem:[%s14 + $0x31c] sm:$0xf]
    %v2696 = vld [vmem:[%s14 + $0x320] sm:$0xf]
    %v2697 = vld [vmem:[%s14 + $0x324] sm:$0xf]
    %v2698 = vld [vmem:[%s14 + $0x328] sm:$0xf]
    %v2699 = vld [vmem:[%s14 + $0x32c] sm:$0xf]
    %v2700 = vld [vmem:[%s14 + $0x330] sm:$0xf]
    %v2701 = vld [vmem:[%s14 + $0x334] sm:$0xf]
    %v2702 = vld [vmem:[%s14 + $0x338] sm:$0xf]
    %v2703 = vld [vmem:[%s14 + $0x33c] sm:$0xf]
    %v2704 = vld [vmem:[%s14 + $0x340] sm:$0xf]
    %v2705 = vld [vmem:[%s14 + $0x344] sm:$0xf]
    %v2706 = vld [vmem:[%s14 + $0x348] sm:$0xf]
    %v2707 = vld [vmem:[%s14 + $0x34c] sm:$0xf]
    %v2708 = vld [vmem:[%s14 + $0x350] sm:$0xf]
    %v2709 = vld [vmem:[%s14 + $0x354] sm:$0xf]
    %v2710 = vld [vmem:[%s14 + $0x358] sm:$0xf]
    %v2711 = vld [vmem:[%s14 + $0x35c] sm:$0xf]
    %v2712 = vld [vmem:[%s14 + $0x360] sm:$0xf]
    %v2713 = vld [vmem:[%s14 + $0x364] sm:$0xf]
    %v2714 = vld [vmem:[%s14 + $0x368] sm:$0xf]
    %v2715 = vld [vmem:[%s14 + $0x36c] sm:$0xf]
    %v2716 = vld [vmem:[%s14 + $0x370] sm:$0xf]
    %v2717 = vld [vmem:[%s14 + $0x374] sm:$0xf]
    %v2718 = vld [vmem:[%s14 + $0x378] sm:$0xf]
    %v2719 = vld [vmem:[%s14 + $0x37c] sm:$0xf]
    %v2720 = vld [vmem:[%s14 + $0x380] sm:$0xf]
    %v2721 = vld [vmem:[%s14 + $0x384] sm:$0xf]
    %v2722 = vld [vmem:[%s14 + $0x388] sm:$0xf]
    %v2723 = vld [vmem:[%s14 + $0x38c] sm:$0xf]
    %v2724 = vld [vmem:[%s14 + $0x390] sm:$0xf]
    %v2725 = vld [vmem:[%s14 + $0x394] sm:$0xf]
    %v2726 = vld [vmem:[%s14 + $0x398] sm:$0xf]
    %v2727 = vld [vmem:[%s14 + $0x39c] sm:$0xf]
    %v2728 = vld [vmem:[%s14 + $0x3a0] sm:$0xf]
    %v2729 = vld [vmem:[%s14 + $0x3a4] sm:$0xf]
    %v2730 = vld [vmem:[%s14 + $0x3a8] sm:$0xf]
    %v2731 = vld [vmem:[%s14 + $0x3ac] sm:$0xf]
    %v2732 = vld [vmem:[%s14 + $0x3b0] sm:$0xf]
    %v2733 = vld [vmem:[%s14 + $0x3b4] sm:$0xf]
    %v2734 = vld [vmem:[%s14 + $0x3b8] sm:$0xf]
    %v2735 = vld [vmem:[%s14 + $0x3bc] sm:$0xf]
    %v2736 = vld [vmem:[%s14 + $0x3c0] sm:$0xf]
    %v2737 = vld [vmem:[%s14 + $0x3c4] sm:$0xf]
    %v2738 = vld [vmem:[%s14 + $0x3c8] sm:$0xf]
    %v2739 = vld [vmem:[%s14 + $0x3cc] sm:$0xf]
    %v2740 = vld [vmem:[%s14 + $0x3d0] sm:$0xf]
    %v2741 = vld [vmem:[%s14 + $0x3d4] sm:$0xf]
    %v2742 = vld [vmem:[%s14 + $0x3d8] sm:$0xf]
    %v2743 = vld [vmem:[%s14 + $0x3dc] sm:$0xf]
    %v2744 = vld [vmem:[%s14 + $0x3e0] sm:$0xf]
    %v2745 = vld [vmem:[%s14 + $0x3e4] sm:$0xf]
    %v2746 = vld [vmem:[%s14 + $0x3e8] sm:$0xf]
    %v2747 = vld [vmem:[%s14 + $0x3ec] sm:$0xf]
    %v2748 = vld [vmem:[%s14 + $0x3f0] sm:$0xf]
    %v2749 = vld [vmem:[%s14 + $0x3f4] sm:$0xf]
    %v2750 = vld [vmem:[%s14 + $0x3f8] sm:$0xf]
    %v2751 = vld [vmem:[%s14 + $0x3fc] sm:$0xf]
    %v2816 = vunpack.c.l.b16 %v2688
    %v2817 = vunpack.c.l.b16 %v2689
    %v2818 = vunpack.c.l.b16 %v2690
    %v2819 = vunpack.c.l.b16 %v2691
    %v2820 = vunpack.c.l.b16 %v2692
    %v2821 = vunpack.c.l.b16 %v2693
    %v2822 = vunpack.c.l.b16 %v2694
    %v2823 = vunpack.c.l.b16 %v2695
    %v2824 = vunpack.c.l.b16 %v2696
    %v2825 = vunpack.c.l.b16 %v2697
    %v2826 = vunpack.c.l.b16 %v2698
    %v2827 = vunpack.c.l.b16 %v2699
    %v2828 = vunpack.c.l.b16 %v2700
    %v2829 = vunpack.c.l.b16 %v2701
    %v2830 = vunpack.c.l.b16 %v2702
    %v2831 = vunpack.c.l.b16 %v2703
    %v2832 = vunpack.c.l.b16 %v2704
    %v2833 = vunpack.c.l.b16 %v2705
    %v2834 = vunpack.c.l.b16 %v2706
    %v2835 = vunpack.c.l.b16 %v2707
    %v2836 = vunpack.c.l.b16 %v2708
    %v2837 = vunpack.c.l.b16 %v2709
    %v2838 = vunpack.c.l.b16 %v2710
    %v2839 = vunpack.c.l.b16 %v2711
    %v2840 = vunpack.c.l.b16 %v2712
    %v2841 = vunpack.c.l.b16 %v2713
    %v2842 = vunpack.c.l.b16 %v2714
    %v2843 = vunpack.c.l.b16 %v2715
    %v2844 = vunpack.c.l.b16 %v2716
    %v2845 = vunpack.c.l.b16 %v2717
    %v2846 = vunpack.c.l.b16 %v2718
    %v2847 = vunpack.c.l.b16 %v2719
    %v2848 = vunpack.c.l.b16 %v2720
    %v2849 = vunpack.c.l.b16 %v2721
    %v2850 = vunpack.c.l.b16 %v2722
    %v2851 = vunpack.c.l.b16 %v2723
    %v2852 = vunpack.c.l.b16 %v2724
    %v2853 = vunpack.c.l.b16 %v2725
    %v2854 = vunpack.c.l.b16 %v2726
    %v2855 = vunpack.c.l.b16 %v2727
    %v2856 = vunpack.c.l.b16 %v2728
    %v2857 = vunpack.c.l.b16 %v2729
    %v2858 = vunpack.c.l.b16 %v2730
    %v2859 = vunpack.c.l.b16 %v2731
    %v2860 = vunpack.c.l.b16 %v2732
    %v2861 = vunpack.c.l.b16 %v2733
    %v2862 = vunpack.c.l.b16 %v2734
    %v2863 = vunpack.c.l.b16 %v2735
    %v2864 = vunpack.c.l.b16 %v2736
    %v2865 = vunpack.c.l.b16 %v2737
    %v2866 = vunpack.c.l.b16 %v2738
    %v2867 = vunpack.c.l.b16 %v2739
    %v2868 = vunpack.c.l.b16 %v2740
    %v2869 = vunpack.c.l.b16 %v2741
    %v2870 = vunpack.c.l.b16 %v2742
    %v2871 = vunpack.c.l.b16 %v2743
    %v2872 = vunpack.c.l.b16 %v2744
    %v2873 = vunpack.c.l.b16 %v2745
    %v2874 = vunpack.c.l.b16 %v2746
    %v2875 = vunpack.c.l.b16 %v2747
    %v2876 = vunpack.c.l.b16 %v2748
    %v2877 = vunpack.c.l.b16 %v2749
    %v2878 = vunpack.c.l.b16 %v2750
    %v2879 = vunpack.c.l.b16 %v2751
    %v2880 = vpack.c.b16 %v2817, %v2816
    %v2881 = vpack.c.b16 %v2819, %v2818
    %v2882 = vpack.c.b16 %v2821, %v2820
    %v2883 = vpack.c.b16 %v2823, %v2822
    %v2884 = vpack.c.b16 %v2825, %v2824
    %v2885 = vpack.c.b16 %v2827, %v2826
    %v2886 = vpack.c.b16 %v2829, %v2828
    %v2887 = vpack.c.b16 %v2831, %v2830
    %v2888 = vpack.c.b16 %v2833, %v2832
    %v2889 = vpack.c.b16 %v2835, %v2834
    %v2890 = vpack.c.b16 %v2837, %v2836
    %v2891 = vpack.c.b16 %v2839, %v2838
    %v2892 = vpack.c.b16 %v2841, %v2840
    %v2893 = vpack.c.b16 %v2843, %v2842
    %v2894 = vpack.c.b16 %v2845, %v2844
    %v2895 = vpack.c.b16 %v2847, %v2846
    %v2896 = vpack.c.b16 %v2849, %v2848
    %v2897 = vpack.c.b16 %v2851, %v2850
    %v2898 = vpack.c.b16 %v2853, %v2852
    %v2899 = vpack.c.b16 %v2855, %v2854
    %v2900 = vpack.c.b16 %v2857, %v2856
    %v2901 = vpack.c.b16 %v2859, %v2858
    %v2902 = vpack.c.b16 %v2861, %v2860
    %v2903 = vpack.c.b16 %v2863, %v2862
    %v2904 = vpack.c.b16 %v2865, %v2864
    %v2905 = vpack.c.b16 %v2867, %v2866
    %v2906 = vpack.c.b16 %v2869, %v2868
    %v2907 = vpack.c.b16 %v2871, %v2870
    %v2908 = vpack.c.b16 %v2873, %v2872
    %v2909 = vpack.c.b16 %v2875, %v2874
    %v2910 = vpack.c.b16 %v2877, %v2876
    %v2911 = vpack.c.b16 %v2879, %v2878
    %2944 = vmatpush.bf16.msra.mxu0 %v2887
    %2945 = vmatpush.bf16.msra.mxu0 %v2886
    %2946 = vmatpush.bf16.msra.mxu0 %v2885
    %2947 = vmatpush.bf16.msra.mxu0 %v2884
    %2948 = vmatpush.bf16.msra.mxu0 %v2883
    %2949 = vmatpush.bf16.msra.mxu0 %v2882
    %2950 = vmatpush.bf16.msra.mxu0 %v2881
    %2951 = vmatpush.bf16.msra.mxu0 %v2880
    %2952 = vmatmul.bf16.gmra.mxu0 %v2680
    %v2953 = vpop.f32.mrf.mxu0
    %v2954 = vadd.f32 0.0, %v2953
    %v2955 = vpop.f32.mrf.mxu0
    %v2956 = vadd.f32 0.0, %v2955
    %2957 = vmatmul.bf16.gmra.mxu0 %v2684
    %v2958 = vpop.f32.mrf.mxu0
    %v2959 = vadd.f32 0.0, %v2958
    %v2960 = vpop.f32.mrf.mxu0
    %2961 = vdwg.mxu0
    %2962 = vmatpush.bf16.msra.mxu0 %v2895
    %2963 = vmatpush.bf16.msra.mxu0 %v2894
    %2964 = vmatpush.bf16.msra.mxu0 %v2893
    %2965 = vmatpush.bf16.msra.mxu0 %v2892
    %2966 = vmatpush.bf16.msra.mxu0 %v2891
    %2967 = vmatpush.bf16.msra.mxu0 %v2890
    %2968 = vmatpush.bf16.msra.mxu0 %v2889
    %2969 = vmatpush.bf16.msra.mxu0 %v2888
    %2970 = vmatmul.bf16.gmra.mxu0 %v2681
    %v2971 = vpop.f32.mrf.mxu0
    %v2972 = vadd.f32 %v2954, %v2971
    %v2973 = vpop.f32.mrf.mxu0
    %v2974 = vadd.f32 %v2956, %v2973
    %2975 = vmatmul.bf16.gmra.mxu0 %v2685
    %v2976 = vpop.f32.mrf.mxu0
    %v2977 = vadd.f32 %v2959, %v2976
    %v2978 = vpop.f32.mrf.mxu0
    %2979 = vdwg.mxu0
    %2980 = vmatpush.bf16.msra.mxu0 %v2903
    %2981 = vmatpush.bf16.msra.mxu0 %v2902
    %2982 = vmatpush.bf16.msra.mxu0 %v2901
    %2983 = vmatpush.bf16.msra.mxu0 %v2900
    %2984 = vmatpush.bf16.msra.mxu0 %v2899
    %2985 = vmatpush.bf16.msra.mxu0 %v2898
    %2986 = vmatpush.bf16.msra.mxu0 %v2897
    %2987 = vmatpush.bf16.msra.mxu0 %v2896
    %2988 = vmatmul.bf16.gmra.mxu0 %v2682
    %v2989 = vpop.f32.mrf.mxu0
    %v2990 = vadd.f32 %v2972, %v2989
    %v2991 = vpop.f32.mrf.mxu0
    %v2992 = vadd.f32 %v2974, %v2991
    %2993 = vmatmul.bf16.gmra.mxu0 %v2686
    %v2994 = vpop.f32.mrf.mxu0
    %v2995 = vadd.f32 %v2977, %v2994
    %v2996 = vpop.f32.mrf.mxu0
    %2997 = vdwg.mxu0
    %2998 = vmatpush.bf16.msra.mxu0 %v2911
    %2999 = vmatpush.bf16.msra.mxu0 %v2910
    %3000 = vmatpush.bf16.msra.mxu0 %v2909
    %3001 = vmatpush.bf16.msra.mxu0 %v2908
    %3002 = vmatpush.bf16.msra.mxu0 %v2907
    %3003 = vmatpush.bf16.msra.mxu0 %v2906
    %3004 = vmatpush.bf16.msra.mxu0 %v2905
    %3005 = vmatpush.bf16.msra.mxu0 %v2904
    %3006 = vmatmul.bf16.gmra.mxu0 %v2683
    %v3007 = vpop.f32.mrf.mxu0
    %v3008 = vadd.f32 %v2990, %v3007
    %v3009 = vpop.f32.mrf.mxu0
    %v3010 = vadd.f32 %v2992, %v3009
    %3011 = vmatmul.bf16.gmra.mxu0 %v2687
    %v3012 = vpop.f32.mrf.mxu0
    %v3013 = vadd.f32 %v2995, %v3012
    %v3014 = vpop.f32.mrf.mxu0
    %3015 = vdwg.mxu0
    %v3016 = vadd.f32 %v2535, %v3008
    %v3017 = vadd.f32 %v2536, %v3010
    %v3018 = vadd.f32 %v2537, %v3013
    %v3019 = vadd.f32 %v1090, %v3016
    %v3020 = vadd.f32 %v1091, %v3017
    %v3021 = vadd.f32 %v1092, %v3018
    %v3022 = vld [vmem:[%s15] sm:$0x1]
    %v3024 = vperm.slane %v3022, 0
    %v3026 = vadd.f32 %v3019, %v3024
    %v3027 = vadd.f32 %v3020, %v3024
    %v3028 = vadd.f32 %v3021, %v3024
    %v3029 = vld [vmem:[%s16] sm:$0x1]
    %v3030 = vld [vmem:[%s17] sm:$0x1]
    %v3031 = vsel %vm73, %v3026, 0.0
    %3032 = vadd.xlane.f32.xlu0 %v3031
    %v3033 = vpop.xlane.xlu0 %3032
    %v3034 = vsel %vm73, %v3027, 0.0
    %3035 = vadd.xlane.f32.xlu0 %v3034
    %v3036 = vpop.xlane.xlu0 %3035
    %v3037 = vsel %vm73, %v3028, 0.0
    %3038 = vadd.xlane.f32.xlu0 %v3037
    %v3039 = vpop.xlane.xlu0 %3038
    %v3040 = vmul.f32 %v3033, %v1023
    %v3041 = vmul.f32 %v3036, %v1023
    %v3042 = vmul.f32 %v3039, %v1023
    %v3043 = vsub.f32 %v3026, %v3040
    %v3044 = vsub.f32 %v3027, %v3041
    %v3045 = vsub.f32 %v3028, %v3042
    %v3046 = vmul.f32 %v3043, %v3043
    %v3047 = vmul.f32 %v3044, %v3044
    %v3048 = vmul.f32 %v3045, %v3045
    %v3049 = vsel %vm73, %v3046, 0.0
    %3050 = vadd.xlane.f32.xlu0 %v3049
    %v3051 = vpop.xlane.xlu0 %3050
    %v3052 = vsel %vm73, %v3047, 0.0
    %3053 = vadd.xlane.f32.xlu0 %v3052
    %v3054 = vpop.xlane.xlu0 %3053
    %v3055 = vsel %vm73, %v3048, 0.0
    %3056 = vadd.xlane.f32.xlu0 %v3055
    %v3057 = vpop.xlane.xlu0 %3056
    %v3058 = vmul.f32 %v3051, %v1023
    %v3059 = vmul.f32 %v3054, %v1023
    %v3060 = vmul.f32 %v3057, %v1023
    %v3061 = vadd.f32 %v3058, 1e-05
    %v3062 = vadd.f32 %v3059, 1e-05
    %v3063 = vadd.f32 %v3060, 1e-05
    %v3064 = vrsqrt.pop %v3061
    %v3065 = vmul.f32 %v3064, %v3061
    %v3066 = vmul.f32 %v3065, %v3064
    %v3067 = vmul.f32 0.5, %v3066
    %v3068 = vsub.f32 1.5, %v3067
    %v3069 = vmul.f32 %v3064, %v3068
    %vm3070 = vweird.f32 %v3061
    %vm3071 = vweird.f32 %v3064
    %vm3072 = vmor %vm3070, %vm3071
    %v3073 = vsel %vm3072, %v3064, %v3069
    %v3074 = vrsqrt.pop %v3062
    %v3075 = vmul.f32 %v3074, %v3062
    %v3076 = vmul.f32 %v3075, %v3074
    %v3077 = vmul.f32 0.5, %v3076
    %v3078 = vsub.f32 1.5, %v3077
    %v3079 = vmul.f32 %v3074, %v3078
    %vm3080 = vweird.f32 %v3062
    %vm3081 = vweird.f32 %v3074
    %vm3082 = vmor %vm3080, %vm3081
    %v3083 = vsel %vm3082, %v3074, %v3079
    %v3084 = vrsqrt.pop %v3063
    %v3085 = vmul.f32 %v3084, %v3063
    %v3086 = vmul.f32 %v3085, %v3084
    %v3087 = vmul.f32 0.5, %v3086
    %v3088 = vsub.f32 1.5, %v3087
    %v3089 = vmul.f32 %v3084, %v3088
    %vm3090 = vweird.f32 %v3063
    %vm3091 = vweird.f32 %v3084
    %vm3092 = vmor %vm3090, %vm3091
    %v3093 = vsel %vm3092, %v3084, %v3089
    %v3094 = vmul.f32 %v3043, %v3073
    %v3095 = vmul.f32 %v3044, %v3083
    %v3096 = vmul.f32 %v3045, %v3093
    %v3098 = vperm.slane %v3029, 0
    %v3100 = vmul.f32 %v3094, %v3098
    %v3101 = vmul.f32 %v3095, %v3098
    %v3102 = vmul.f32 %v3096, %v3098
    %v3104 = vperm.slane %v3030, 0
    %v3106 = vadd.f32 %v3100, %v3104
    %v3107 = vadd.f32 %v3101, %v3104
    %v3108 = vadd.f32 %v3102, %v3104
    %s3109 = scalar_lea.vmem %s6, 32
    %v3110 = vld [vmem:[%s3109] sm:$0xff]
    %v3111 = vld [vmem:[%s3109 + $0x8] sm:$0xff]
    %v3112 = vld [vmem:[%s3109 + $0x10] sm:$0xff]
    %v3113 = vld [vmem:[%s3109 + $0x18] sm:$0xff]
    %s3114 = scalar_lea.vmem %s7, 1
    %v3115 = vld [vmem:[%s3114] sm:$0x1]
    %v3117 = vperm.slane %v3115, 0
    %v3120 = vsel %vm73, %v3106, 0
    %v3123 = vsel %vm73, %v3107, 0
    %v3126 = vsel %vm73, %v3108, 0
    %3128 = vmatpush.msra.mxu0 0.0
    %3129 = vmatpush.msra.mxu0 0.0
    %3130 = vmatpush.msra.mxu0 0.0
    %3131 = vmatpush.msra.mxu0 0.0
    %3132 = vmatpush.msra.mxu0 0.0
    %3133 = vmatpush.msra.mxu0 0.0
    %3134 = vmatpush.msra.mxu0 0.0
    %3135 = vmatpush.msra.mxu0 0.0
    %3136 = vmatpush.msra.mxu0 0.0
    %3137 = vmatpush.msra.mxu0 0.0
    %3138 = vmatpush.msra.mxu0 0.0
    %3139 = vmatpush.msra.mxu0 0.0
    %3140 = vmatpush.msra.mxu0 %v3113
    %3141 = vmatpush.msra.mxu0 %v3112
    %3142 = vmatpush.msra.mxu0 %v3111
    %3143 = vmatpush.msra.mxu0 %v3110
    %3144 = vmatmul.f32.gmra.mxu0 %v3120
    %v3145 = vpop.f32.mrf.mxu0
    %v3146 = vadd.f32 %v3117, %v3145
    %3147 = vmatmul.f32.gmra.mxu0 %v3123
    %v3148 = vpop.f32.mrf.mxu0
    %v3149 = vadd.f32 %v3117, %v3148
    %3150 = vmatmul.f32.gmra.mxu0 %v3126
    %v3151 = vpop.f32.mrf.mxu0
    %v3152 = vadd.f32 %v3117, %v3151
    %3153 = vdwg.mxu0
    %3154 = vmatpush.msra.mxu0 0.0
    %3155 = vmatpush.msra.mxu0 0.0
    %3156 = vmatpush.msra.mxu0 0.0
    %3157 = vmatpush.msra.mxu0 0.0
    %3158 = vmatpush.msra.mxu0 0.0
    %3159 = vmatpush.msra.mxu0 0.0
    %3160 = vmatpush.msra.mxu0 0.0
    %3161 = vmatpush.msra.mxu0 0.0
    %3162 = vmatpush.msra.mxu0 0.0
    %3163 = vmatpush.msra.mxu0 0.0
    %3164 = vmatpush.msra.mxu0 0.0
    %3165 = vmatpush.msra.mxu0 0.0
    %3166 = vmatpush.msra.mxu0 0.0
    %3167 = vmatpush.msra.mxu0 %v3152
    %3168 = vmatpush.msra.mxu0 %v3149
    %3169 = vmatpush.msra.mxu0 %v3146
    %3170 = vmatmul.f32.gmra.mxu0 %v266
    %v3171 = vpop.f32.mrf.mxu0
    %v3172 = vadd.f32 0.0, %v3171
    %3173 = vmatmul.f32.gmra.mxu0 %v269
    %v3174 = vpop.f32.mrf.mxu0
    %v3175 = vadd.f32 0.0, %v3174
    %3176 = vmatmul.f32.gmra.mxu0 %v272
    %v3177 = vpop.f32.mrf.mxu0
    %v3178 = vadd.f32 0.0, %v3177
    %3179 = vmatmul.f32.gmra.mxu0 %v275
    %v3180 = vpop.f32.mrf.mxu0
    %v3181 = vadd.f32 0.0, %v3180
    %3182 = vmatmul.f32.gmra.mxu0 %v278
    %v3183 = vpop.f32.mrf.mxu0
    %v3184 = vadd.f32 0.0, %v3183
    %3185 = vmatmul.f32.gmra.mxu0 %v281
    %v3186 = vpop.f32.mrf.mxu0
    %v3187 = vadd.f32 0.0, %v3186
    %3188 = vmatmul.f32.gmra.mxu0 %v284
    %v3189 = vpop.f32.mrf.mxu0
    %v3190 = vadd.f32 0.0, %v3189
    %3191 = vmatmul.f32.gmra.mxu0 %v287
    %v3192 = vpop.f32.mrf.mxu0
    %v3193 = vadd.f32 0.0, %v3192
    %3194 = vmatmul.f32.gmra.mxu0 %v290
    %v3195 = vpop.f32.mrf.mxu0
    %v3196 = vadd.f32 0.0, %v3195
    %3197 = vmatmul.f32.gmra.mxu0 %v293
    %v3198 = vpop.f32.mrf.mxu0
    %v3199 = vadd.f32 0.0, %v3198
    %3200 = vmatmul.f32.gmra.mxu0 %v296
    %v3201 = vpop.f32.mrf.mxu0
    %v3202 = vadd.f32 0.0, %v3201
    %3203 = vmatmul.f32.gmra.mxu0 %v299
    %v3204 = vpop.f32.mrf.mxu0
    %v3205 = vadd.f32 0.0, %v3204
    %3206 = vmatmul.f32.gmra.mxu0 %v302
    %v3207 = vpop.f32.mrf.mxu0
    %v3208 = vadd.f32 0.0, %v3207
    %3209 = vmatmul.f32.gmra.mxu0 %v305
    %v3210 = vpop.f32.mrf.mxu0
    %v3211 = vadd.f32 0.0, %v3210
    %3212 = vmatmul.f32.gmra.mxu0 %v308
    %v3213 = vpop.f32.mrf.mxu0
    %v3214 = vadd.f32 0.0, %v3213
    %3215 = vmatmul.f32.gmra.mxu0 %v311
    %v3216 = vpop.f32.mrf.mxu0
    %v3217 = vadd.f32 0.0, %v3216
    %3218 = vmatmul.f32.gmra.mxu0 %v314
    %v3219 = vpop.f32.mrf.mxu0
    %v3220 = vadd.f32 0.0, %v3219
    %3221 = vmatmul.f32.gmra.mxu0 %v317
    %v3222 = vpop.f32.mrf.mxu0
    %v3223 = vadd.f32 0.0, %v3222
    %3224 = vdwg.mxu0
    %v3225 = vmul.f32 %v3172, %v203
    %v3226 = vmul.f32 %v3175, %v204
    %v3227 = vmul.f32 %v3178, %v205
    %v3228 = vmul.f32 %v3181, %v206
    %v3229 = vmul.f32 %v3184, %v207
    %v3230 = vmul.f32 %v3187, %v208
    %v3231 = vmul.f32 %v3190, %v209
    %v3232 = vmul.f32 %v3193, %v210
    %v3233 = vmul.f32 %v3196, %v211
    %v3234 = vmul.f32 %v3199, %v212
    %v3235 = vmul.f32 %v3202, %v213
    %v3236 = vmul.f32 %v3205, %v214
    %v3237 = vmul.f32 %v3208, %v215
    %v3238 = vmul.f32 %v3211, %v216
    %v3239 = vmul.f32 %v3214, %v217
    %v3240 = vmul.f32 %v3217, %v218
    %v3241 = vmul.f32 %v3220, %v219
    %v3242 = vmul.f32 %v3223, %v220
    %3246 = vrot.lane.b32.xlu0 %v3146, 96
    %v3247 = vpop.permute.xlu0 %3246
    %3248 = vrot.lane.b32.xlu0 %v3149, 96
    %v3249 = vpop.permute.xlu0 %3248
    %3250 = vrot.lane.b32.xlu0 %v3152, 96
    %v3251 = vpop.permute.xlu0 %3250
    %v3253 = vsel %vm73, %v3225, 0
    %v3256 = vsel %vm73, %v3226, 0
    %v3259 = vsel %vm73, %v3227, 0
    %v3262 = vsel %vm73, %v3228, 0
    %v3265 = vsel %vm73, %v3229, 0
    %v3268 = vsel %vm73, %v3230, 0
    %v3271 = vsel %vm73, %v3231, 0
    %v3274 = vsel %vm73, %v3232, 0
    %v3277 = vsel %vm73, %v3233, 0
    %v3280 = vsel %vm73, %v3234, 0
    %v3283 = vsel %vm73, %v3235, 0
    %v3286 = vsel %vm73, %v3236, 0
    %v3289 = vsel %vm73, %v3237, 0
    %v3292 = vsel %vm73, %v3238, 0
    %v3295 = vsel %vm73, %v3239, 0
    %v3298 = vsel %vm73, %v3240, 0
    %v3301 = vsel %vm73, %v3241, 0
    %v3304 = vsel %vm73, %v3242, 0
    %v3306 = vsel %vm73, %v3247, 0
    %v3308 = vsel %vm73, %v3249, 0
    %v3310 = vsel %vm73, %v3251, 0
    %3312 = vmatpush.xpose.msra.mxu0 0.0
    %3313 = vmatpush.xpose.msra.mxu0 0.0
    %3314 = vmatpush.xpose.msra.mxu0 0.0
    %3315 = vmatpush.xpose.msra.mxu0 0.0
    %3316 = vmatpush.xpose.msra.mxu0 0.0
    %3317 = vmatpush.xpose.msra.mxu0 0.0
    %3318 = vmatpush.xpose.msra.mxu0 0.0
    %3319 = vmatpush.xpose.msra.mxu0 0.0
    %3320 = vmatpush.xpose.msra.mxu0 0.0
    %3321 = vmatpush.xpose.msra.mxu0 0.0
    %3322 = vmatpush.xpose.msra.mxu0 0.0
    %3323 = vmatpush.xpose.msra.mxu0 0.0
    %3324 = vmatpush.xpose.msra.mxu0 0.0
    %3325 = vmatpush.xpose.msra.mxu0 %v3310
    %3326 = vmatpush.xpose.msra.mxu0 %v3308
    %3327 = vmatpush.xpose.msra.mxu0 %v3306
    %3328 = vmatmul.f32.gmra.mxu0 %v3253
    %v3329 = vpop.f32.mrf.mxu0
    %v3330 = vadd.f32 %v179, %v3329
    %3331 = vmatmul.f32.gmra.mxu0 %v3256
    %v3332 = vpop.f32.mrf.mxu0
    %v3333 = vadd.f32 %v180, %v3332
    %3334 = vmatmul.f32.gmra.mxu0 %v3259
    %v3335 = vpop.f32.mrf.mxu0
    %v3336 = vadd.f32 %v181, %v3335
    %3337 = vmatmul.f32.gmra.mxu0 %v3262
    %v3338 = vpop.f32.mrf.mxu0
    %v3339 = vadd.f32 %v182, %v3338
    %3340 = vmatmul.f32.gmra.mxu0 %v3265
    %v3341 = vpop.f32.mrf.mxu0
    %v3342 = vadd.f32 %v183, %v3341
    %3343 = vmatmul.f32.gmra.mxu0 %v3268
    %v3344 = vpop.f32.mrf.mxu0
    %v3345 = vadd.f32 %v184, %v3344
    %3346 = vmatmul.f32.gmra.mxu0 %v3271
    %v3347 = vpop.f32.mrf.mxu0
    %v3348 = vadd.f32 %v185, %v3347
    %3349 = vmatmul.f32.gmra.mxu0 %v3274
    %v3350 = vpop.f32.mrf.mxu0
    %v3351 = vadd.f32 %v186, %v3350
    %3352 = vmatmul.f32.gmra.mxu0 %v3277
    %v3353 = vpop.f32.mrf.mxu0
    %v3354 = vadd.f32 %v187, %v3353
    %3355 = vmatmul.f32.gmra.mxu0 %v3280
    %v3356 = vpop.f32.mrf.mxu0
    %v3357 = vadd.f32 %v188, %v3356
    %3358 = vmatmul.f32.gmra.mxu0 %v3283
    %v3359 = vpop.f32.mrf.mxu0
    %v3360 = vadd.f32 %v189, %v3359
    %3361 = vmatmul.f32.gmra.mxu0 %v3286
    %v3362 = vpop.f32.mrf.mxu0
    %v3363 = vadd.f32 %v190, %v3362
    %3364 = vmatmul.f32.gmra.mxu0 %v3289
    %v3365 = vpop.f32.mrf.mxu0
    %v3366 = vadd.f32 %v191, %v3365
    %3367 = vmatmul.f32.gmra.mxu0 %v3292
    %v3368 = vpop.f32.mrf.mxu0
    %v3369 = vadd.f32 %v192, %v3368
    %3370 = vmatmul.f32.gmra.mxu0 %v3295
    %v3371 = vpop.f32.mrf.mxu0
    %v3372 = vadd.f32 %v193, %v3371
    %3373 = vmatmul.f32.gmra.mxu0 %v3298
    %v3374 = vpop.f32.mrf.mxu0
    %v3375 = vadd.f32 %v194, %v3374
    %3376 = vmatmul.f32.gmra.mxu0 %v3301
    %v3377 = vpop.f32.mrf.mxu0
    %v3378 = vadd.f32 %v195, %v3377
    %3379 = vmatmul.f32.gmra.mxu0 %v3304
    %v3380 = vpop.f32.mrf.mxu0
    %v3381 = vadd.f32 %v196, %v3380
    %3382 = vdwg.mxu0
    %v3383 = vsel %vm264, %v3330, -inf
    %3384 = vmax.xlane.f32.xlu0 %v3383
    %v3385 = vpop.xlane.xlu0 %3384
    %v3386 = vsel %vm264, %v3333, -inf
    %3387 = vmax.xlane.f32.xlu0 %v3386
    %v3388 = vpop.xlane.xlu0 %3387
    %v3389 = vsel %vm264, %v3336, -inf
    %3390 = vmax.xlane.f32.xlu0 %v3389
    %v3391 = vpop.xlane.xlu0 %3390
    %v3392 = vsel %vm264, %v3339, -inf
    %3393 = vmax.xlane.f32.xlu0 %v3392
    %v3394 = vpop.xlane.xlu0 %3393
    %v3395 = vsel %vm264, %v3342, -inf
    %3396 = vmax.xlane.f32.xlu0 %v3395
    %v3397 = vpop.xlane.xlu0 %3396
    %v3398 = vsel %vm264, %v3345, -inf
    %3399 = vmax.xlane.f32.xlu0 %v3398
    %v3400 = vpop.xlane.xlu0 %3399
    %v3401 = vsel %vm264, %v3348, -inf
    %3402 = vmax.xlane.f32.xlu0 %v3401
    %v3403 = vpop.xlane.xlu0 %3402
    %v3404 = vsel %vm264, %v3351, -inf
    %3405 = vmax.xlane.f32.xlu0 %v3404
    %v3406 = vpop.xlane.xlu0 %3405
    %v3407 = vsel %vm264, %v3354, -inf
    %3408 = vmax.xlane.f32.xlu0 %v3407
    %v3409 = vpop.xlane.xlu0 %3408
    %v3410 = vsel %vm264, %v3357, -inf
    %3411 = vmax.xlane.f32.xlu0 %v3410
    %v3412 = vpop.xlane.xlu0 %3411
    %v3413 = vsel %vm264, %v3360, -inf
    %3414 = vmax.xlane.f32.xlu0 %v3413
    %v3415 = vpop.xlane.xlu0 %3414
    %v3416 = vsel %vm264, %v3363, -inf
    %3417 = vmax.xlane.f32.xlu0 %v3416
    %v3418 = vpop.xlane.xlu0 %3417
    %v3419 = vsel %vm264, %v3366, -inf
    %3420 = vmax.xlane.f32.xlu0 %v3419
    %v3421 = vpop.xlane.xlu0 %3420
    %v3422 = vsel %vm264, %v3369, -inf
    %3423 = vmax.xlane.f32.xlu0 %v3422
    %v3424 = vpop.xlane.xlu0 %3423
    %v3425 = vsel %vm264, %v3372, -inf
    %3426 = vmax.xlane.f32.xlu0 %v3425
    %v3427 = vpop.xlane.xlu0 %3426
    %v3428 = vsel %vm264, %v3375, -inf
    %3429 = vmax.xlane.f32.xlu0 %v3428
    %v3430 = vpop.xlane.xlu0 %3429
    %v3431 = vsel %vm264, %v3378, -inf
    %3432 = vmax.xlane.f32.xlu0 %v3431
    %v3433 = vpop.xlane.xlu0 %3432
    %v3434 = vsel %vm264, %v3381, -inf
    %3435 = vmax.xlane.f32.xlu0 %v3434
    %v3436 = vpop.xlane.xlu0 %3435
    %v3437 = vsub.f32 %v3330, %v3385
    %v3438 = vsub.f32 %v3333, %v3388
    %v3439 = vsub.f32 %v3336, %v3391
    %v3440 = vsub.f32 %v3339, %v3394
    %v3441 = vsub.f32 %v3342, %v3397
    %v3442 = vsub.f32 %v3345, %v3400
    %v3443 = vsub.f32 %v3348, %v3403
    %v3444 = vsub.f32 %v3351, %v3406
    %v3445 = vsub.f32 %v3354, %v3409
    %v3446 = vsub.f32 %v3357, %v3412
    %v3447 = vsub.f32 %v3360, %v3415
    %v3448 = vsub.f32 %v3363, %v3418
    %v3449 = vsub.f32 %v3366, %v3421
    %v3450 = vsub.f32 %v3369, %v3424
    %v3451 = vsub.f32 %v3372, %v3427
    %v3452 = vsub.f32 %v3375, %v3430
    %v3453 = vsub.f32 %v3378, %v3433
    %v3454 = vsub.f32 %v3381, %v3436
    %v3455 = vmul.f32 %v3437, 1.442695
    %v3456 = vpow.pop %v3455
    %v3457 = vmul.f32 %v3438, 1.442695
    %v3458 = vpow.pop %v3457
    %v3459 = vmul.f32 %v3439, 1.442695
    %v3460 = vpow.pop %v3459
    %v3461 = vmul.f32 %v3440, 1.442695
    %v3462 = vpow.pop %v3461
    %v3463 = vmul.f32 %v3441, 1.442695
    %v3464 = vpow.pop %v3463
    %v3465 = vmul.f32 %v3442, 1.442695
    %v3466 = vpow.pop %v3465
    %v3467 = vmul.f32 %v3443, 1.442695
    %v3468 = vpow.pop %v3467
    %v3469 = vmul.f32 %v3444, 1.442695
    %v3470 = vpow.pop %v3469
    %v3471 = vmul.f32 %v3445, 1.442695
    %v3472 = vpow.pop %v3471
    %v3473 = vmul.f32 %v3446, 1.442695
    %v3474 = vpow.pop %v3473
    %v3475 = vmul.f32 %v3447, 1.442695
    %v3476 = vpow.pop %v3475
    %v3477 = vmul.f32 %v3448, 1.442695
    %v3478 = vpow.pop %v3477
    %v3479 = vmul.f32 %v3449, 1.442695
    %v3480 = vpow.pop %v3479
    %v3481 = vmul.f32 %v3450, 1.442695
    %v3482 = vpow.pop %v3481
    %v3483 = vmul.f32 %v3451, 1.442695
    %v3484 = vpow.pop %v3483
    %v3485 = vmul.f32 %v3452, 1.442695
    %v3486 = vpow.pop %v3485
    %v3487 = vmul.f32 %v3453, 1.442695
    %v3488 = vpow.pop %v3487
    %v3489 = vmul.f32 %v3454, 1.442695
    %v3490 = vpow.pop %v3489
    %v3491 = vsel %vm264, %v3456, 0.0
    %3492 = vadd.xlane.f32.xlu0 %v3491
    %v3493 = vpop.xlane.xlu0 %3492
    %v3494 = vsel %vm264, %v3458, 0.0
    %3495 = vadd.xlane.f32.xlu0 %v3494
    %v3496 = vpop.xlane.xlu0 %3495
    %v3497 = vsel %vm264, %v3460, 0.0
    %3498 = vadd.xlane.f32.xlu0 %v3497
    %v3499 = vpop.xlane.xlu0 %3498
    %v3500 = vsel %vm264, %v3462, 0.0
    %3501 = vadd.xlane.f32.xlu0 %v3500
    %v3502 = vpop.xlane.xlu0 %3501
    %v3503 = vsel %vm264, %v3464, 0.0
    %3504 = vadd.xlane.f32.xlu0 %v3503
    %v3505 = vpop.xlane.xlu0 %3504
    %v3506 = vsel %vm264, %v3466, 0.0
    %3507 = vadd.xlane.f32.xlu0 %v3506
    %v3508 = vpop.xlane.xlu0 %3507
    %v3509 = vsel %vm264, %v3468, 0.0
    %3510 = vadd.xlane.f32.xlu0 %v3509
    %v3511 = vpop.xlane.xlu0 %3510
    %v3512 = vsel %vm264, %v3470, 0.0
    %3513 = vadd.xlane.f32.xlu0 %v3512
    %v3514 = vpop.xlane.xlu0 %3513
    %v3515 = vsel %vm264, %v3472, 0.0
    %3516 = vadd.xlane.f32.xlu0 %v3515
    %v3517 = vpop.xlane.xlu0 %3516
    %v3518 = vsel %vm264, %v3474, 0.0
    %3519 = vadd.xlane.f32.xlu0 %v3518
    %v3520 = vpop.xlane.xlu0 %3519
    %v3521 = vsel %vm264, %v3476, 0.0
    %3522 = vadd.xlane.f32.xlu0 %v3521
    %v3523 = vpop.xlane.xlu0 %3522
    %v3524 = vsel %vm264, %v3478, 0.0
    %3525 = vadd.xlane.f32.xlu0 %v3524
    %v3526 = vpop.xlane.xlu0 %3525
    %v3527 = vsel %vm264, %v3480, 0.0
    %3528 = vadd.xlane.f32.xlu0 %v3527
    %v3529 = vpop.xlane.xlu0 %3528
    %v3530 = vsel %vm264, %v3482, 0.0
    %3531 = vadd.xlane.f32.xlu0 %v3530
    %v3532 = vpop.xlane.xlu0 %3531
    %v3533 = vsel %vm264, %v3484, 0.0
    %3534 = vadd.xlane.f32.xlu0 %v3533
    %v3535 = vpop.xlane.xlu0 %3534
    %v3536 = vsel %vm264, %v3486, 0.0
    %3537 = vadd.xlane.f32.xlu0 %v3536
    %v3538 = vpop.xlane.xlu0 %3537
    %v3539 = vsel %vm264, %v3488, 0.0
    %3540 = vadd.xlane.f32.xlu0 %v3539
    %v3541 = vpop.xlane.xlu0 %3540
    %v3542 = vsel %vm264, %v3490, 0.0
    %3543 = vadd.xlane.f32.xlu0 %v3542
    %v3544 = vpop.xlane.xlu0 %3543
    %v3545 = vrcp.pop %v3493
    %v3546 = vrcp.pop %v3496
    %v3547 = vrcp.pop %v3499
    %v3548 = vrcp.pop %v3502
    %v3549 = vrcp.pop %v3505
    %v3550 = vrcp.pop %v3508
    %v3551 = vrcp.pop %v3511
    %v3552 = vrcp.pop %v3514
    %v3553 = vrcp.pop %v3517
    %v3554 = vrcp.pop %v3520
    %v3555 = vrcp.pop %v3523
    %v3556 = vrcp.pop %v3526
    %v3557 = vrcp.pop %v3529
    %v3558 = vrcp.pop %v3532
    %v3559 = vrcp.pop %v3535
    %v3560 = vrcp.pop %v3538
    %v3561 = vrcp.pop %v3541
    %v3562 = vrcp.pop %v3544
    %v3563 = vmul.f32 %v3456, %v3545
    %v3564 = vmul.f32 %v3458, %v3546
    %v3565 = vmul.f32 %v3460, %v3547
    %v3566 = vmul.f32 %v3462, %v3548
    %v3567 = vmul.f32 %v3464, %v3549
    %v3568 = vmul.f32 %v3466, %v3550
    %v3569 = vmul.f32 %v3468, %v3551
    %v3570 = vmul.f32 %v3470, %v3552
    %v3571 = vmul.f32 %v3472, %v3553
    %v3572 = vmul.f32 %v3474, %v3554
    %v3573 = vmul.f32 %v3476, %v3555
    %v3574 = vmul.f32 %v3478, %v3556
    %v3575 = vmul.f32 %v3480, %v3557
    %v3576 = vmul.f32 %v3482, %v3558
    %v3577 = vmul.f32 %v3484, %v3559
    %v3578 = vmul.f32 %v3486, %v3560
    %v3579 = vmul.f32 %v3488, %v3561
    %v3580 = vmul.f32 %v3490, %v3562
    %3581 = vrot.lane.b32.xlu0 %v3146, 64
    %v3582 = vpop.permute.xlu0 %3581
    %3583 = vrot.lane.b32.xlu0 %v3149, 64
    %v3584 = vpop.permute.xlu0 %3583
    %3585 = vrot.lane.b32.xlu0 %v3152, 64
    %v3586 = vpop.permute.xlu0 %3585
    %v3591 = vsel %vm264, %v3563, 0
    %v3594 = vsel %vm264, %v3564, 0
    %v3597 = vsel %vm264, %v3565, 0
    %v3600 = vsel %vm264, %v3566, 0
    %v3603 = vsel %vm264, %v3567, 0
    %v3606 = vsel %vm264, %v3568, 0
    %v3609 = vsel %vm264, %v3569, 0
    %v3612 = vsel %vm264, %v3570, 0
    %v3615 = vsel %vm264, %v3571, 0
    %v3618 = vsel %vm264, %v3572, 0
    %v3621 = vsel %vm264, %v3573, 0
    %v3624 = vsel %vm264, %v3574, 0
    %v3627 = vsel %vm264, %v3575, 0
    %v3630 = vsel %vm264, %v3576, 0
    %v3633 = vsel %vm264, %v3577, 0
    %v3636 = vsel %vm264, %v3578, 0
    %v3639 = vsel %vm264, %v3579, 0
    %v3642 = vsel %vm264, %v3580, 0
    %3644 = vmatpush.msra.mxu0 0.0
    %3645 = vmatpush.msra.mxu0 0.0
    %3646 = vmatpush.msra.mxu0 0.0
    %3647 = vmatpush.msra.mxu0 0.0
    %3648 = vmatpush.msra.mxu0 0.0
    %3649 = vmatpush.msra.mxu0 0.0
    %3650 = vmatpush.msra.mxu0 0.0
    %3651 = vmatpush.msra.mxu0 0.0
    %3652 = vmatpush.msra.mxu0 0.0
    %3653 = vmatpush.msra.mxu0 0.0
    %3654 = vmatpush.msra.mxu0 0.0
    %3655 = vmatpush.msra.mxu0 0.0
    %3656 = vmatpush.msra.mxu0 0.0
    %3657 = vmatpush.msra.mxu0 %v3586
    %3658 = vmatpush.msra.mxu0 %v3584
    %3659 = vmatpush.msra.mxu0 %v3582
    %3660 = vmatmul.f32.gmra.mxu0 %v3591
    %v3661 = vpop.f32.mrf.mxu0
    %v3662 = vadd.f32 0.0, %v3661
    %3663 = vmatmul.f32.gmra.mxu0 %v3594
    %v3664 = vpop.f32.mrf.mxu0
    %v3665 = vadd.f32 0.0, %v3664
    %3666 = vmatmul.f32.gmra.mxu0 %v3597
    %v3667 = vpop.f32.mrf.mxu0
    %v3668 = vadd.f32 0.0, %v3667
    %3669 = vmatmul.f32.gmra.mxu0 %v3600
    %v3670 = vpop.f32.mrf.mxu0
    %v3671 = vadd.f32 0.0, %v3670
    %3672 = vmatmul.f32.gmra.mxu0 %v3603
    %v3673 = vpop.f32.mrf.mxu0
    %v3674 = vadd.f32 0.0, %v3673
    %3675 = vmatmul.f32.gmra.mxu0 %v3606
    %v3676 = vpop.f32.mrf.mxu0
    %v3677 = vadd.f32 0.0, %v3676
    %3678 = vmatmul.f32.gmra.mxu0 %v3609
    %v3679 = vpop.f32.mrf.mxu0
    %v3680 = vadd.f32 0.0, %v3679
    %3681 = vmatmul.f32.gmra.mxu0 %v3612
    %v3682 = vpop.f32.mrf.mxu0
    %v3683 = vadd.f32 0.0, %v3682
    %3684 = vmatmul.f32.gmra.mxu0 %v3615
    %v3685 = vpop.f32.mrf.mxu0
    %v3686 = vadd.f32 0.0, %v3685
    %3687 = vmatmul.f32.gmra.mxu0 %v3618
    %v3688 = vpop.f32.mrf.mxu0
    %v3689 = vadd.f32 0.0, %v3688
    %3690 = vmatmul.f32.gmra.mxu0 %v3621
    %v3691 = vpop.f32.mrf.mxu0
    %v3692 = vadd.f32 0.0, %v3691
    %3693 = vmatmul.f32.gmra.mxu0 %v3624
    %v3694 = vpop.f32.mrf.mxu0
    %v3695 = vadd.f32 0.0, %v3694
    %3696 = vmatmul.f32.gmra.mxu0 %v3627
    %v3697 = vpop.f32.mrf.mxu0
    %v3698 = vadd.f32 0.0, %v3697
    %3699 = vmatmul.f32.gmra.mxu0 %v3630
    %v3700 = vpop.f32.mrf.mxu0
    %v3701 = vadd.f32 0.0, %v3700
    %3702 = vmatmul.f32.gmra.mxu0 %v3633
    %v3703 = vpop.f32.mrf.mxu0
    %v3704 = vadd.f32 0.0, %v3703
    %3705 = vmatmul.f32.gmra.mxu0 %v3636
    %v3706 = vpop.f32.mrf.mxu0
    %v3707 = vadd.f32 0.0, %v3706
    %3708 = vmatmul.f32.gmra.mxu0 %v3639
    %v3709 = vpop.f32.mrf.mxu0
    %v3710 = vadd.f32 0.0, %v3709
    %3711 = vmatmul.f32.gmra.mxu0 %v3642
    %v3712 = vpop.f32.mrf.mxu0
    %v3713 = vadd.f32 0.0, %v3712
    %3714 = vdwg.mxu0
    %v3715 = vmul.f32 %v3662, %v203
    %v3716 = vmul.f32 %v3665, %v204
    %v3717 = vmul.f32 %v3668, %v205
    %v3718 = vmul.f32 %v3671, %v206
    %v3719 = vmul.f32 %v3674, %v207
    %v3720 = vmul.f32 %v3677, %v208
    %v3721 = vmul.f32 %v3680, %v209
    %v3722 = vmul.f32 %v3683, %v210
    %v3723 = vmul.f32 %v3686, %v211
    %v3724 = vmul.f32 %v3689, %v212
    %v3725 = vmul.f32 %v3692, %v213
    %v3726 = vmul.f32 %v3695, %v214
    %v3727 = vmul.f32 %v3698, %v215
    %v3728 = vmul.f32 %v3701, %v216
    %v3729 = vmul.f32 %v3704, %v217
    %v3730 = vmul.f32 %v3707, %v218
    %v3731 = vmul.f32 %v3710, %v219
    %v3732 = vmul.f32 %v3713, %v220
    %3733 = vmatpush.msra.mxu0 %v3730
    %3734 = vmatpush.msra.mxu0 %v3729
    %3735 = vmatpush.msra.mxu0 %v3728
    %3736 = vmatpush.msra.mxu0 %v3727
    %3737 = vmatpush.msra.mxu0 %v3726
    %3738 = vmatpush.msra.mxu0 %v3725
    %3739 = vmatpush.msra.mxu0 %v3724
    %3740 = vmatpush.msra.mxu0 %v3723
    %3741 = vmatpush.msra.mxu0 %v3722
    %3742 = vmatpush.msra.mxu0 %v3721
    %3743 = vmatpush.msra.mxu0 %v3720
    %3744 = vmatpush.msra.mxu0 %v3719
    %3745 = vmatpush.msra.mxu0 %v3718
    %3746 = vmatpush.msra.mxu0 %v3717
    %3747 = vmatpush.msra.mxu0 %v3716
    %3748 = vmatpush.msra.mxu0 %v3715
    %3749 = vmatmul.f32.gmra.mxu0 %v197
    %v3750 = vpop.f32.mrf.mxu0
    %v3751 = vadd.f32 0.0, %v3750
    %3752 = vmatmul.f32.gmra.mxu0 %v199
    %v3753 = vpop.f32.mrf.mxu0
    %v3754 = vadd.f32 0.0, %v3753
    %3755 = vmatmul.f32.gmra.mxu0 %v201
    %v3756 = vpop.f32.mrf.mxu0
    %v3757 = vadd.f32 0.0, %v3756
    %3758 = vdwg.mxu0
    %3759 = vmatpush.msra.mxu0 0.0
    %3760 = vmatpush.msra.mxu0 0.0
    %3761 = vmatpush.msra.mxu0 0.0
    %3762 = vmatpush.msra.mxu0 0.0
    %3763 = vmatpush.msra.mxu0 0.0
    %3764 = vmatpush.msra.mxu0 0.0
    %3765 = vmatpush.msra.mxu0 0.0
    %3766 = vmatpush.msra.mxu0 0.0
    %3767 = vmatpush.msra.mxu0 0.0
    %3768 = vmatpush.msra.mxu0 0.0
    %3769 = vmatpush.msra.mxu0 0.0
    %3770 = vmatpush.msra.mxu0 0.0
    %3771 = vmatpush.msra.mxu0 0.0
    %3772 = vmatpush.msra.mxu0 0.0
    %3773 = vmatpush.msra.mxu0 %v3732
    %3774 = vmatpush.msra.mxu0 %v3731
    %3775 = vmatmul.f32.gmra.mxu0 %v900
    %v3776 = vpop.f32.mrf.mxu0
    %v3777 = vadd.f32 %v3751, %v3776
    %3778 = vmatmul.f32.gmra.mxu0 %v903
    %v3779 = vpop.f32.mrf.mxu0
    %v3780 = vadd.f32 %v3754, %v3779
    %3781 = vmatmul.f32.gmra.mxu0 %v906
    %v3782 = vpop.f32.mrf.mxu0
    %v3783 = vadd.f32 %v3757, %v3782
    %3784 = vdwg.mxu0
    %s3785 = scalar_lea.vmem %s8, 32
    %v3786 = vld [vmem:[%s3785] sm:$0xff]
    %v3787 = vld [vmem:[%s3785 + $0x8] sm:$0xff]
    %v3788 = vld [vmem:[%s3785 + $0x10] sm:$0xff]
    %v3789 = vld [vmem:[%s3785 + $0x18] sm:$0xff]
    %s3790 = scalar_lea.vmem %s9, 1
    %v3791 = vld [vmem:[%s3790] sm:$0x1]
    %v3793 = vperm.slane %v3791, 0
    %v3796 = vsel %vm73, %v3777, 0
    %v3799 = vsel %vm73, %v3780, 0
    %v3802 = vsel %vm73, %v3783, 0
    %3804 = vmatpush.msra.mxu0 0.0
    %3805 = vmatpush.msra.mxu0 0.0
    %3806 = vmatpush.msra.mxu0 0.0
    %3807 = vmatpush.msra.mxu0 0.0
    %3808 = vmatpush.msra.mxu0 0.0
    %3809 = vmatpush.msra.mxu0 0.0
    %3810 = vmatpush.msra.mxu0 0.0
    %3811 = vmatpush.msra.mxu0 0.0
    %3812 = vmatpush.msra.mxu0 0.0
    %3813 = vmatpush.msra.mxu0 0.0
    %3814 = vmatpush.msra.mxu0 0.0
    %3815 = vmatpush.msra.mxu0 0.0
    %3816 = vmatpush.msra.mxu0 %v3789
    %3817 = vmatpush.msra.mxu0 %v3788
    %3818 = vmatpush.msra.mxu0 %v3787
    %3819 = vmatpush.msra.mxu0 %v3786
    %3820 = vmatmul.f32.gmra.mxu0 %v3796
    %v3821 = vpop.f32.mrf.mxu0
    %v3822 = vadd.f32 %v3793, %v3821
    %3823 = vmatmul.f32.gmra.mxu0 %v3799
    %v3824 = vpop.f32.mrf.mxu0
    %v3825 = vadd.f32 %v3793, %v3824
    %3826 = vmatmul.f32.gmra.mxu0 %v3802
    %v3827 = vpop.f32.mrf.mxu0
    %v3828 = vadd.f32 %v3793, %v3827
    %3829 = vdwg.mxu0
    %v3830 = vadd.f32 %v3106, %v3822
    %v3831 = vadd.f32 %v3107, %v3825
    %v3832 = vadd.f32 %v3108, %v3828
    %s3833 = scalar_lea.vmem %s10, 1
    %v3834 = vld [vmem:[%s3833] sm:$0x1]
    %s3835 = scalar_lea.vmem %s11, 1
    %v3836 = vld [vmem:[%s3835] sm:$0x1]
    %v3837 = vsel %vm73, %v3830, 0.0
    %3838 = vadd.xlane.f32.xlu0 %v3837
    %v3839 = vpop.xlane.xlu0 %3838
    %v3840 = vsel %vm73, %v3831, 0.0
    %3841 = vadd.xlane.f32.xlu0 %v3840
    %v3842 = vpop.xlane.xlu0 %3841
    %v3843 = vsel %vm73, %v3832, 0.0
    %3844 = vadd.xlane.f32.xlu0 %v3843
    %v3845 = vpop.xlane.xlu0 %3844
    %v3846 = vmul.f32 %v3839, %v1023
    %v3847 = vmul.f32 %v3842, %v1023
    %v3848 = vmul.f32 %v3845, %v1023
    %v3849 = vsub.f32 %v3830, %v3846
    %v3850 = vsub.f32 %v3831, %v3847
    %v3851 = vsub.f32 %v3832, %v3848
    %v3852 = vmul.f32 %v3849, %v3849
    %v3853 = vmul.f32 %v3850, %v3850
    %v3854 = vmul.f32 %v3851, %v3851
    %v3855 = vsel %vm73, %v3852, 0.0
    %3856 = vadd.xlane.f32.xlu0 %v3855
    %v3857 = vpop.xlane.xlu0 %3856
    %v3858 = vsel %vm73, %v3853, 0.0
    %3859 = vadd.xlane.f32.xlu0 %v3858
    %v3860 = vpop.xlane.xlu0 %3859
    %v3861 = vsel %vm73, %v3854, 0.0
    %3862 = vadd.xlane.f32.xlu0 %v3861
    %v3863 = vpop.xlane.xlu0 %3862
    %v3864 = vmul.f32 %v3857, %v1023
    %v3865 = vmul.f32 %v3860, %v1023
    %v3866 = vmul.f32 %v3863, %v1023
    %v3867 = vadd.f32 %v3864, 1e-05
    %v3868 = vadd.f32 %v3865, 1e-05
    %v3869 = vadd.f32 %v3866, 1e-05
    %v3870 = vrsqrt.pop %v3867
    %v3871 = vmul.f32 %v3870, %v3867
    %v3872 = vmul.f32 %v3871, %v3870
    %v3873 = vmul.f32 0.5, %v3872
    %v3874 = vsub.f32 1.5, %v3873
    %v3875 = vmul.f32 %v3870, %v3874
    %vm3876 = vweird.f32 %v3867
    %vm3877 = vweird.f32 %v3870
    %vm3878 = vmor %vm3876, %vm3877
    %v3879 = vsel %vm3878, %v3870, %v3875
    %v3880 = vrsqrt.pop %v3868
    %v3881 = vmul.f32 %v3880, %v3868
    %v3882 = vmul.f32 %v3881, %v3880
    %v3883 = vmul.f32 0.5, %v3882
    %v3884 = vsub.f32 1.5, %v3883
    %v3885 = vmul.f32 %v3880, %v3884
    %vm3886 = vweird.f32 %v3868
    %vm3887 = vweird.f32 %v3880
    %vm3888 = vmor %vm3886, %vm3887
    %v3889 = vsel %vm3888, %v3880, %v3885
    %v3890 = vrsqrt.pop %v3869
    %v3891 = vmul.f32 %v3890, %v3869
    %v3892 = vmul.f32 %v3891, %v3890
    %v3893 = vmul.f32 0.5, %v3892
    %v3894 = vsub.f32 1.5, %v3893
    %v3895 = vmul.f32 %v3890, %v3894
    %vm3896 = vweird.f32 %v3869
    %vm3897 = vweird.f32 %v3890
    %vm3898 = vmor %vm3896, %vm3897
    %v3899 = vsel %vm3898, %v3890, %v3895
    %v3900 = vmul.f32 %v3849, %v3879
    %v3901 = vmul.f32 %v3850, %v3889
    %v3902 = vmul.f32 %v3851, %v3899
    %v3904 = vperm.slane %v3834, 0
    %v3906 = vmul.f32 %v3900, %v3904
    %v3907 = vmul.f32 %v3901, %v3904
    %v3908 = vmul.f32 %v3902, %v3904
    %v3910 = vperm.slane %v3836, 0
    %v3912 = vadd.f32 %v3906, %v3910
    %v3913 = vadd.f32 %v3907, %v3910
    %v3914 = vadd.f32 %v3908, %v3910
    %v3915 = vpack.c.bf16 %v3913, %v3912
    %v3916 = vpack.c.bf16 %v3914, %v3914
    %s3917 = scalar_lea.vmem %s12, 256
    %v3918 = vld [vmem:[%s3917] sm:$0xff]
    %v3919 = vld [vmem:[%s3917 + $0x8] sm:$0xff]
    %v3920 = vld [vmem:[%s3917 + $0x40] sm:$0xff]
    %v3921 = vld [vmem:[%s3917 + $0x48] sm:$0xff]
    %v3922 = vld [vmem:[%s3917 + $0x80] sm:$0xff]
    %v3923 = vld [vmem:[%s3917 + $0x88] sm:$0xff]
    %v3924 = vld [vmem:[%s3917 + $0xc0] sm:$0xff]
    %v3925 = vld [vmem:[%s3917 + $0xc8] sm:$0xff]
    %s3926 = scalar_lea.vmem %s13, 16
    %v3927 = vld [vmem:[%s3926] sm:$0xf]
    %v3929 = vperm.slane %v3927, 0
    %v3930 = vperm.slane %v3927, 1
    %v3931 = vperm.slane %v3927, 2
    %v3932 = vperm.slane %v3927, 3
    %v3945 = vunpack.c.l.b16 %v3918
    %v3946 = vunpack.c.h.b16 %v3918
    %v3947 = vunpack.c.l.b16 %v3919
    %v3948 = vunpack.c.h.b16 %v3919
    %v3949 = vunpack.c.l.b16 %v3920
    %v3950 = vunpack.c.h.b16 %v3920
    %v3951 = vunpack.c.l.b16 %v3921
    %v3952 = vunpack.c.h.b16 %v3921
    %v3953 = vunpack.c.l.b16 %v3922
    %v3954 = vunpack.c.h.b16 %v3922
    %v3955 = vunpack.c.l.b16 %v3923
    %v3956 = vunpack.c.h.b16 %v3923
    %v3957 = vunpack.c.l.b16 %v3924
    %v3958 = vunpack.c.h.b16 %v3924
    %v3959 = vunpack.c.l.b16 %v3925
    %v3960 = vunpack.c.h.b16 %v3925
    %v3961 = vpack.c.b16 %v3949, %v3945
    %v3962 = vpack.c.b16 %v3950, %v3946
    %v3963 = vpack.c.b16 %v3951, %v3947
    %v3964 = vpack.c.b16 %v3952, %v3948
    %v3965 = vpack.c.b16 %v3957, %v3953
    %v3966 = vpack.c.b16 %v3958, %v3954
    %v3967 = vpack.c.b16 %v3959, %v3955
    %v3968 = vpack.c.b16 %v3960, %v3956
    %v3978 = vsel %vm73, %v3915, 0
    %v3981 = vsel %vm73, %v3916, 0
    %3983 = vmatpush.bf16.msra.mxu0 0
    %3984 = vmatpush.bf16.msra.mxu0 0
    %3985 = vmatpush.bf16.msra.mxu0 0
    %3986 = vmatpush.bf16.msra.mxu0 0
    %3987 = vmatpush.bf16.msra.mxu0 0
    %3988 = vmatpush.bf16.msra.mxu0 0
    %3989 = vmatpush.bf16.msra.mxu0 %v3965
    %3990 = vmatpush.bf16.msra.mxu0 %v3961
    %3991 = vmatmul.bf16.gmra.mxu0 %v3978
    %v3992 = vpop.f32.mrf.mxu0
    %v3993 = vadd.f32 %v3929, %v3992
    %v3994 = vpop.f32.mrf.mxu0
    %v3995 = vadd.f32 %v3929, %v3994
    %3996 = vmatmul.bf16.gmra.mxu0 %v3981
    %v3997 = vpop.f32.mrf.mxu0
    %v3998 = vadd.f32 %v3929, %v3997
    %v3999 = vpop.f32.mrf.mxu0
    %4000 = vdwg.mxu0
    %4001 = vmatpush.bf16.msra.mxu0 0
    %4002 = vmatpush.bf16.msra.mxu0 0
    %4003 = vmatpush.bf16.msra.mxu0 0
    %4004 = vmatpush.bf16.msra.mxu0 0
    %4005 = vmatpush.bf16.msra.mxu0 0
    %4006 = vmatpush.bf16.msra.mxu0 0
    %4007 = vmatpush.bf16.msra.mxu0 %v3966
    %4008 = vmatpush.bf16.msra.mxu0 %v3962
    %4009 = vmatmul.bf16.gmra.mxu0 %v3978
    %v4010 = vpop.f32.mrf.mxu0
    %v4011 = vadd.f32 %v3930, %v4010
    %v4012 = vpop.f32.mrf.mxu0
    %v4013 = vadd.f32 %v3930, %v4012
    %4014 = vmatmul.bf16.gmra.mxu0 %v3981
    %v4015 = vpop.f32.mrf.mxu0
    %v4016 = vadd.f32 %v3930, %v4015
    %v4017 = vpop.f32.mrf.mxu0
    %4018 = vdwg.mxu0
    %4019 = vmatpush.bf16.msra.mxu0 0
    %4020 = vmatpush.bf16.msra.mxu0 0
    %4021 = vmatpush.bf16.msra.mxu0 0
    %4022 = vmatpush.bf16.msra.mxu0 0
    %4023 = vmatpush.bf16.msra.mxu0 0
    %4024 = vmatpush.bf16.msra.mxu0 0
    %4025 = vmatpush.bf16.msra.mxu0 %v3967
    %4026 = vmatpush.bf16.msra.mxu0 %v3963
    %4027 = vmatmul.bf16.gmra.mxu0 %v3978
    %v4028 = vpop.f32.mrf.mxu0
    %v4029 = vadd.f32 %v3931, %v4028
    %v4030 = vpop.f32.mrf.mxu0
    %v4031 = vadd.f32 %v3931, %v4030
    %4032 = vmatmul.bf16.gmra.mxu0 %v3981
    %v4033 = vpop.f32.mrf.mxu0
    %v4034 = vadd.f32 %v3931, %v4033
    %v4035 = vpop.f32.mrf.mxu0
    %4036 = vdwg.mxu0
    %4037 = vmatpush.bf16.msra.mxu0 0
    %4038 = vmatpush.bf16.msra.mxu0 0
    %4039 = vmatpush.bf16.msra.mxu0 0
    %4040 = vmatpush.bf16.msra.mxu0 0
    %4041 = vmatpush.bf16.msra.mxu0 0
    %4042 = vmatpush.bf16.msra.mxu0 0
    %4043 = vmatpush.bf16.msra.mxu0 %v3968
    %4044 = vmatpush.bf16.msra.mxu0 %v3964
    %4045 = vmatmul.bf16.gmra.mxu0 %v3978
    %v4046 = vpop.f32.mrf.mxu0
    %v4047 = vadd.f32 %v3932, %v4046
    %v4048 = vpop.f32.mrf.mxu0
    %v4049 = vadd.f32 %v3932, %v4048
    %4050 = vmatmul.bf16.gmra.mxu0 %v3981
    %v4051 = vpop.f32.mrf.mxu0
    %v4052 = vadd.f32 %v3932, %v4051
    %v4053 = vpop.f32.mrf.mxu0
    %4054 = vdwg.mxu0
    %v4055 = vmax.f32 %v3993, 0.0
    %v4056 = vmax.f32 %v4011, 0.0
    %v4057 = vmax.f32 %v4029, 0.0
    %v4058 = vmax.f32 %v4047, 0.0
    %v4059 = vmax.f32 %v3995, 0.0
    %v4060 = vmax.f32 %v4013, 0.0
    %v4061 = vmax.f32 %v4031, 0.0
    %v4062 = vmax.f32 %v4049, 0.0
    %v4063 = vmax.f32 %v3998, 0.0
    %v4064 = vmax.f32 %v4016, 0.0
    %v4065 = vmax.f32 %v4034, 0.0
    %v4066 = vmax.f32 %v4052, 0.0
    %v4067 = vpack.c.bf16 %v4059, %v4055
    %v4068 = vpack.c.bf16 %v4060, %v4056
    %v4069 = vpack.c.bf16 %v4061, %v4057
    %v4070 = vpack.c.bf16 %v4062, %v4058
    %v4071 = vpack.c.bf16 %v4063, %v4063
    %v4072 = vpack.c.bf16 %v4064, %v4064
    %v4073 = vpack.c.bf16 %v4065, %v4065
    %v4074 = vpack.c.bf16 %v4066, %v4066
    %s4075 = scalar_lea.vmem %s14, 1024
    %v4076 = vld [vmem:[%s4075] sm:$0xf]
    %v4077 = vld [vmem:[%s4075 + $0x4] sm:$0xf]
    %v4078 = vld [vmem:[%s4075 + $0x8] sm:$0xf]
    %v4079 = vld [vmem:[%s4075 + $0xc] sm:$0xf]
    %v4080 = vld [vmem:[%s4075 + $0x10] sm:$0xf]
    %v4081 = vld [vmem:[%s4075 + $0x14] sm:$0xf]
    %v4082 = vld [vmem:[%s4075 + $0x18] sm:$0xf]
    %v4083 = vld [vmem:[%s4075 + $0x1c] sm:$0xf]
    %v4084 = vld [vmem:[%s4075 + $0x20] sm:$0xf]
    %v4085 = vld [vmem:[%s4075 + $0x24] sm:$0xf]
    %v4086 = vld [vmem:[%s4075 + $0x28] sm:$0xf]
    %v4087 = vld [vmem:[%s4075 + $0x2c] sm:$0xf]
    %v4088 = vld [vmem:[%s4075 + $0x30] sm:$0xf]
    %v4089 = vld [vmem:[%s4075 + $0x34] sm:$0xf]
    %v4090 = vld [vmem:[%s4075 + $0x38] sm:$0xf]
    %v4091 = vld [vmem:[%s4075 + $0x3c] sm:$0xf]
    %v4092 = vld [vmem:[%s4075 + $0x40] sm:$0xf]
    %v4093 = vld [vmem:[%s4075 + $0x44] sm:$0xf]
    %v4094 = vld [vmem:[%s4075 + $0x48] sm:$0xf]
    %v4095 = vld [vmem:[%s4075 + $0x4c] sm:$0xf]
    %v4096 = vld [vmem:[%s4075 + $0x50] sm:$0xf]
    %v4097 = vld [vmem:[%s4075 + $0x54] sm:$0xf]
    %v4098 = vld [vmem:[%s4075 + $0x58] sm:$0xf]
    %v4099 = vld [vmem:[%s4075 + $0x5c] sm:$0xf]
    %v4100 = vld [vmem:[%s4075 + $0x60] sm:$0xf]
    %v4101 = vld [vmem:[%s4075 + $0x64] sm:$0xf]
    %v4102 = vld [vmem:[%s4075 + $0x68] sm:$0xf]
    %v4103 = vld [vmem:[%s4075 + $0x6c] sm:$0xf]
    %v4104 = vld [vmem:[%s4075 + $0x70] sm:$0xf]
    %v4105 = vld [vmem:[%s4075 + $0x74] sm:$0xf]
    %v4106 = vld [vmem:[%s4075 + $0x78] sm:$0xf]
    %v4107 = vld [vmem:[%s4075 + $0x7c] sm:$0xf]
    %v4108 = vld [vmem:[%s4075 + $0x80] sm:$0xf]
    %v4109 = vld [vmem:[%s4075 + $0x84] sm:$0xf]
    %v4110 = vld [vmem:[%s4075 + $0x88] sm:$0xf]
    %v4111 = vld [vmem:[%s4075 + $0x8c] sm:$0xf]
    %v4112 = vld [vmem:[%s4075 + $0x90] sm:$0xf]
    %v4113 = vld [vmem:[%s4075 + $0x94] sm:$0xf]
    %v4114 = vld [vmem:[%s4075 + $0x98] sm:$0xf]
    %v4115 = vld [vmem:[%s4075 + $0x9c] sm:$0xf]
    %v4116 = vld [vmem:[%s4075 + $0xa0] sm:$0xf]
    %v4117 = vld [vmem:[%s4075 + $0xa4] sm:$0xf]
    %v4118 = vld [vmem:[%s4075 + $0xa8] sm:$0xf]
    %v4119 = vld [vmem:[%s4075 + $0xac] sm:$0xf]
    %v4120 = vld [vmem:[%s4075 + $0xb0] sm:$0xf]
    %v4121 = vld [vmem:[%s4075 + $0xb4] sm:$0xf]
    %v4122 = vld [vmem:[%s4075 + $0xb8] sm:$0xf]
    %v4123 = vld [vmem:[%s4075 + $0xbc] sm:$0xf]
    %v4124 = vld [vmem:[%s4075 + $0xc0] sm:$0xf]
    %v4125 = vld [vmem:[%s4075 + $0xc4] sm:$0xf]
    %v4126 = vld [vmem:[%s4075 + $0xc8] sm:$0xf]
    %v4127 = vld [vmem:[%s4075 + $0xcc] sm:$0xf]
    %v4128 = vld [vmem:[%s4075 + $0xd0] sm:$0xf]
    %v4129 = vld [vmem:[%s4075 + $0xd4] sm:$0xf]
    %v4130 = vld [vmem:[%s4075 + $0xd8] sm:$0xf]
    %v4131 = vld [vmem:[%s4075 + $0xdc] sm:$0xf]
    %v4132 = vld [vmem:[%s4075 + $0xe0] sm:$0xf]
    %v4133 = vld [vmem:[%s4075 + $0xe4] sm:$0xf]
    %v4134 = vld [vmem:[%s4075 + $0xe8] sm:$0xf]
    %v4135 = vld [vmem:[%s4075 + $0xec] sm:$0xf]
    %v4136 = vld [vmem:[%s4075 + $0xf0] sm:$0xf]
    %v4137 = vld [vmem:[%s4075 + $0xf4] sm:$0xf]
    %v4138 = vld [vmem:[%s4075 + $0xf8] sm:$0xf]
    %v4139 = vld [vmem:[%s4075 + $0xfc] sm:$0xf]
    %v4140 = vld [vmem:[%s3917 + $0x10] sm:$0xff]
    %v4141 = vld [vmem:[%s3917 + $0x18] sm:$0xff]
    %v4142 = vld [vmem:[%s3917 + $0x50] sm:$0xff]
    %v4143 = vld [vmem:[%s3917 + $0x58] sm:$0xff]
    %v4144 = vld [vmem:[%s3917 + $0x90] sm:$0xff]
    %v4145 = vld [vmem:[%s3917 + $0x98] sm:$0xff]
    %v4146 = vld [vmem:[%s3917 + $0xd0] sm:$0xff]
    %v4147 = vld [vmem:[%s3917 + $0xd8] sm:$0xff]
    %v4148 = vld [vmem:[%s3926 + $0x4] sm:$0xf]
    %v4150 = vperm.slane %v4148, 0
    %v4151 = vperm.slane %v4148, 1
    %v4152 = vperm.slane %v4148, 2
    %v4153 = vperm.slane %v4148, 3
    %v4166 = vunpack.c.l.b16 %v4140
    %v4167 = vunpack.c.h.b16 %v4140
    %v4168 = vunpack.c.l.b16 %v4141
    %v4169 = vunpack.c.h.b16 %v4141
    %v4170 = vunpack.c.l.b16 %v4142
    %v4171 = vunpack.c.h.b16 %v4142
    %v4172 = vunpack.c.l.b16 %v4143
    %v4173 = vunpack.c.h.b16 %v4143
    %v4174 = vunpack.c.l.b16 %v4144
    %v4175 = vunpack.c.h.b16 %v4144
    %v4176 = vunpack.c.l.b16 %v4145
    %v4177 = vunpack.c.h.b16 %v4145
    %v4178 = vunpack.c.l.b16 %v4146
    %v4179 = vunpack.c.h.b16 %v4146
    %v4180 = vunpack.c.l.b16 %v4147
    %v4181 = vunpack.c.h.b16 %v4147
    %v4182 = vpack.c.b16 %v4170, %v4166
    %v4183 = vpack.c.b16 %v4171, %v4167
    %v4184 = vpack.c.b16 %v4172, %v4168
    %v4185 = vpack.c.b16 %v4173, %v4169
    %v4186 = vpack.c.b16 %v4178, %v4174
    %v4187 = vpack.c.b16 %v4179, %v4175
    %v4188 = vpack.c.b16 %v4180, %v4176
    %v4189 = vpack.c.b16 %v4181, %v4177
    %4198 = vmatpush.bf16.msra.mxu0 0
    %4199 = vmatpush.bf16.msra.mxu0 0
    %4200 = vmatpush.bf16.msra.mxu0 0
    %4201 = vmatpush.bf16.msra.mxu0 0
    %4202 = vmatpush.bf16.msra.mxu0 0
    %4203 = vmatpush.bf16.msra.mxu0 0
    %4204 = vmatpush.bf16.msra.mxu0 %v4186
    %4205 = vmatpush.bf16.msra.mxu0 %v4182
    %4206 = vmatmul.bf16.gmra.mxu0 %v3978
    %v4207 = vpop.f32.mrf.mxu0
    %v4208 = vadd.f32 %v4150, %v4207
    %v4209 = vpop.f32.mrf.mxu0
    %v4210 = vadd.f32 %v4150, %v4209
    %4211 = vmatmul.bf16.gmra.mxu0 %v3981
    %v4212 = vpop.f32.mrf.mxu0
    %v4213 = vadd.f32 %v4150, %v4212
    %v4214 = vpop.f32.mrf.mxu0
    %4215 = vdwg.mxu0
    %4216 = vmatpush.bf16.msra.mxu0 0
    %4217 = vmatpush.bf16.msra.mxu0 0
    %4218 = vmatpush.bf16.msra.mxu0 0
    %4219 = vmatpush.bf16.msra.mxu0 0
    %4220 = vmatpush.bf16.msra.mxu0 0
    %4221 = vmatpush.bf16.msra.mxu0 0
    %4222 = vmatpush.bf16.msra.mxu0 %v4187
    %4223 = vmatpush.bf16.msra.mxu0 %v4183
    %4224 = vmatmul.bf16.gmra.mxu0 %v3978
    %v4225 = vpop.f32.mrf.mxu0
    %v4226 = vadd.f32 %v4151, %v4225
    %v4227 = vpop.f32.mrf.mxu0
    %v4228 = vadd.f32 %v4151, %v4227
    %4229 = vmatmul.bf16.gmra.mxu0 %v3981
    %v4230 = vpop.f32.mrf.mxu0
    %v4231 = vadd.f32 %v4151, %v4230
    %v4232 = vpop.f32.mrf.mxu0
    %4233 = vdwg.mxu0
    %4234 = vmatpush.bf16.msra.mxu0 0
    %4235 = vmatpush.bf16.msra.mxu0 0
    %4236 = vmatpush.bf16.msra.mxu0 0
    %4237 = vmatpush.bf16.msra.mxu0 0
    %4238 = vmatpush.bf16.msra.mxu0 0
    %4239 = vmatpush.bf16.msra.mxu0 0
    %4240 = vmatpush.bf16.msra.mxu0 %v4188
    %4241 = vmatpush.bf16.msra.mxu0 %v4184
    %4242 = vmatmul.bf16.gmra.mxu0 %v3978
    %v4243 = vpop.f32.mrf.mxu0
    %v4244 = vadd.f32 %v4152, %v4243
    %v4245 = vpop.f32.mrf.mxu0
    %v4246 = vadd.f32 %v4152, %v4245
    %4247 = vmatmul.bf16.gmra.mxu0 %v3981
    %v4248 = vpop.f32.mrf.mxu0
    %v4249 = vadd.f32 %v4152, %v4248
    %v4250 = vpop.f32.mrf.mxu0
    %4251 = vdwg.mxu0
    %4252 = vmatpush.bf16.msra.mxu0 0
    %4253 = vmatpush.bf16.msra.mxu0 0
    %4254 = vmatpush.bf16.msra.mxu0 0
    %4255 = vmatpush.bf16.msra.mxu0 0
    %4256 = vmatpush.bf16.msra.mxu0 0
    %4257 = vmatpush.bf16.msra.mxu0 0
    %4258 = vmatpush.bf16.msra.mxu0 %v4189
    %4259 = vmatpush.bf16.msra.mxu0 %v4185
    %4260 = vmatmul.bf16.gmra.mxu0 %v3978
    %v4261 = vpop.f32.mrf.mxu0
    %v4262 = vadd.f32 %v4153, %v4261
    %v4263 = vpop.f32.mrf.mxu0
    %v4264 = vadd.f32 %v4153, %v4263
    %4265 = vmatmul.bf16.gmra.mxu0 %v3981
    %v4266 = vpop.f32.mrf.mxu0
    %v4267 = vadd.f32 %v4153, %v4266
    %v4268 = vpop.f32.mrf.mxu0
    %4269 = vdwg.mxu0
    %v4270 = vmax.f32 %v4208, 0.0
    %v4271 = vmax.f32 %v4226, 0.0
    %v4272 = vmax.f32 %v4244, 0.0
    %v4273 = vmax.f32 %v4262, 0.0
    %v4274 = vmax.f32 %v4210, 0.0
    %v4275 = vmax.f32 %v4228, 0.0
    %v4276 = vmax.f32 %v4246, 0.0
    %v4277 = vmax.f32 %v4264, 0.0
    %v4278 = vmax.f32 %v4213, 0.0
    %v4279 = vmax.f32 %v4231, 0.0
    %v4280 = vmax.f32 %v4249, 0.0
    %v4281 = vmax.f32 %v4267, 0.0
    %v4282 = vpack.c.bf16 %v4274, %v4270
    %v4283 = vpack.c.bf16 %v4275, %v4271
    %v4284 = vpack.c.bf16 %v4276, %v4272
    %v4285 = vpack.c.bf16 %v4277, %v4273
    %v4286 = vpack.c.bf16 %v4278, %v4278
    %v4287 = vpack.c.bf16 %v4279, %v4279
    %v4288 = vpack.c.bf16 %v4280, %v4280
    %v4289 = vpack.c.bf16 %v4281, %v4281
    %v4290 = vld [vmem:[%s4075 + $0x100] sm:$0xf]
    %v4291 = vld [vmem:[%s4075 + $0x104] sm:$0xf]
    %v4292 = vld [vmem:[%s4075 + $0x108] sm:$0xf]
    %v4293 = vld [vmem:[%s4075 + $0x10c] sm:$0xf]
    %v4294 = vld [vmem:[%s4075 + $0x110] sm:$0xf]
    %v4295 = vld [vmem:[%s4075 + $0x114] sm:$0xf]
    %v4296 = vld [vmem:[%s4075 + $0x118] sm:$0xf]
    %v4297 = vld [vmem:[%s4075 + $0x11c] sm:$0xf]
    %v4298 = vld [vmem:[%s4075 + $0x120] sm:$0xf]
    %v4299 = vld [vmem:[%s4075 + $0x124] sm:$0xf]
    %v4300 = vld [vmem:[%s4075 + $0x128] sm:$0xf]
    %v4301 = vld [vmem:[%s4075 + $0x12c] sm:$0xf]
    %v4302 = vld [vmem:[%s4075 + $0x130] sm:$0xf]
    %v4303 = vld [vmem:[%s4075 + $0x134] sm:$0xf]
    %v4304 = vld [vmem:[%s4075 + $0x138] sm:$0xf]
    %v4305 = vld [vmem:[%s4075 + $0x13c] sm:$0xf]
    %v4306 = vld [vmem:[%s4075 + $0x140] sm:$0xf]
    %v4307 = vld [vmem:[%s4075 + $0x144] sm:$0xf]
    %v4308 = vld [vmem:[%s4075 + $0x148] sm:$0xf]
    %v4309 = vld [vmem:[%s4075 + $0x14c] sm:$0xf]
    %v4310 = vld [vmem:[%s4075 + $0x150] sm:$0xf]
    %v4311 = vld [vmem:[%s4075 + $0x154] sm:$0xf]
    %v4312 = vld [vmem:[%s4075 + $0x158] sm:$0xf]
    %v4313 = vld [vmem:[%s4075 + $0x15c] sm:$0xf]
    %v4314 = vld [vmem:[%s4075 + $0x160] sm:$0xf]
    %v4315 = vld [vmem:[%s4075 + $0x164] sm:$0xf]
    %v4316 = vld [vmem:[%s4075 + $0x168] sm:$0xf]
    %v4317 = vld [vmem:[%s4075 + $0x16c] sm:$0xf]
    %v4318 = vld [vmem:[%s4075 + $0x170] sm:$0xf]
    %v4319 = vld [vmem:[%s4075 + $0x174] sm:$0xf]
    %v4320 = vld [vmem:[%s4075 + $0x178] sm:$0xf]
    %v4321 = vld [vmem:[%s4075 + $0x17c] sm:$0xf]
    %v4322 = vld [vmem:[%s4075 + $0x180] sm:$0xf]
    %v4323 = vld [vmem:[%s4075 + $0x184] sm:$0xf]
    %v4324 = vld [vmem:[%s4075 + $0x188] sm:$0xf]
    %v4325 = vld [vmem:[%s4075 + $0x18c] sm:$0xf]
    %v4326 = vld [vmem:[%s4075 + $0x190] sm:$0xf]
    %v4327 = vld [vmem:[%s4075 + $0x194] sm:$0xf]
    %v4328 = vld [vmem:[%s4075 + $0x198] sm:$0xf]
    %v4329 = vld [vmem:[%s4075 + $0x19c] sm:$0xf]
    %v4330 = vld [vmem:[%s4075 + $0x1a0] sm:$0xf]
    %v4331 = vld [vmem:[%s4075 + $0x1a4] sm:$0xf]
    %v4332 = vld [vmem:[%s4075 + $0x1a8] sm:$0xf]
    %v4333 = vld [vmem:[%s4075 + $0x1ac] sm:$0xf]
    %v4334 = vld [vmem:[%s4075 + $0x1b0] sm:$0xf]
    %v4335 = vld [vmem:[%s4075 + $0x1b4] sm:$0xf]
    %v4336 = vld [vmem:[%s4075 + $0x1b8] sm:$0xf]
    %v4337 = vld [vmem:[%s4075 + $0x1bc] sm:$0xf]
    %v4338 = vld [vmem:[%s4075 + $0x1c0] sm:$0xf]
    %v4339 = vld [vmem:[%s4075 + $0x1c4] sm:$0xf]
    %v4340 = vld [vmem:[%s4075 + $0x1c8] sm:$0xf]
    %v4341 = vld [vmem:[%s4075 + $0x1cc] sm:$0xf]
    %v4342 = vld [vmem:[%s4075 + $0x1d0] sm:$0xf]
    %v4343 = vld [vmem:[%s4075 + $0x1d4] sm:$0xf]
    %v4344 = vld [vmem:[%s4075 + $0x1d8] sm:$0xf]
    %v4345 = vld [vmem:[%s4075 + $0x1dc] sm:$0xf]
    %v4346 = vld [vmem:[%s4075 + $0x1e0] sm:$0xf]
    %v4347 = vld [vmem:[%s4075 + $0x1e4] sm:$0xf]
    %v4348 = vld [vmem:[%s4075 + $0x1e8] sm:$0xf]
    %v4349 = vld [vmem:[%s4075 + $0x1ec] sm:$0xf]
    %v4350 = vld [vmem:[%s4075 + $0x1f0] sm:$0xf]
    %v4351 = vld [vmem:[%s4075 + $0x1f4] sm:$0xf]
    %v4352 = vld [vmem:[%s4075 + $0x1f8] sm:$0xf]
    %v4353 = vld [vmem:[%s4075 + $0x1fc] sm:$0xf]
    %v4418 = vunpack.c.l.b16 %v4290
    %v4419 = vunpack.c.l.b16 %v4291
    %v4420 = vunpack.c.l.b16 %v4292
    %v4421 = vunpack.c.l.b16 %v4293
    %v4422 = vunpack.c.l.b16 %v4294
    %v4423 = vunpack.c.l.b16 %v4295
    %v4424 = vunpack.c.l.b16 %v4296
    %v4425 = vunpack.c.l.b16 %v4297
    %v4426 = vunpack.c.l.b16 %v4298
    %v4427 = vunpack.c.l.b16 %v4299
    %v4428 = vunpack.c.l.b16 %v4300
    %v4429 = vunpack.c.l.b16 %v4301
    %v4430 = vunpack.c.l.b16 %v4302
    %v4431 = vunpack.c.l.b16 %v4303
    %v4432 = vunpack.c.l.b16 %v4304
    %v4433 = vunpack.c.l.b16 %v4305
    %v4434 = vunpack.c.l.b16 %v4306
    %v4435 = vunpack.c.l.b16 %v4307
    %v4436 = vunpack.c.l.b16 %v4308
    %v4437 = vunpack.c.l.b16 %v4309
    %v4438 = vunpack.c.l.b16 %v4310
    %v4439 = vunpack.c.l.b16 %v4311
    %v4440 = vunpack.c.l.b16 %v4312
    %v4441 = vunpack.c.l.b16 %v4313
    %v4442 = vunpack.c.l.b16 %v4314
    %v4443 = vunpack.c.l.b16 %v4315
    %v4444 = vunpack.c.l.b16 %v4316
    %v4445 = vunpack.c.l.b16 %v4317
    %v4446 = vunpack.c.l.b16 %v4318
    %v4447 = vunpack.c.l.b16 %v4319
    %v4448 = vunpack.c.l.b16 %v4320
    %v4449 = vunpack.c.l.b16 %v4321
    %v4450 = vunpack.c.l.b16 %v4322
    %v4451 = vunpack.c.l.b16 %v4323
    %v4452 = vunpack.c.l.b16 %v4324
    %v4453 = vunpack.c.l.b16 %v4325
    %v4454 = vunpack.c.l.b16 %v4326
    %v4455 = vunpack.c.l.b16 %v4327
    %v4456 = vunpack.c.l.b16 %v4328
    %v4457 = vunpack.c.l.b16 %v4329
    %v4458 = vunpack.c.l.b16 %v4330
    %v4459 = vunpack.c.l.b16 %v4331
    %v4460 = vunpack.c.l.b16 %v4332
    %v4461 = vunpack.c.l.b16 %v4333
    %v4462 = vunpack.c.l.b16 %v4334
    %v4463 = vunpack.c.l.b16 %v4335
    %v4464 = vunpack.c.l.b16 %v4336
    %v4465 = vunpack.c.l.b16 %v4337
    %v4466 = vunpack.c.l.b16 %v4338
    %v4467 = vunpack.c.l.b16 %v4339
    %v4468 = vunpack.c.l.b16 %v4340
    %v4469 = vunpack.c.l.b16 %v4341
    %v4470 = vunpack.c.l.b16 %v4342
    %v4471 = vunpack.c.l.b16 %v4343
    %v4472 = vunpack.c.l.b16 %v4344
    %v4473 = vunpack.c.l.b16 %v4345
    %v4474 = vunpack.c.l.b16 %v4346
    %v4475 = vunpack.c.l.b16 %v4347
    %v4476 = vunpack.c.l.b16 %v4348
    %v4477 = vunpack.c.l.b16 %v4349
    %v4478 = vunpack.c.l.b16 %v4350
    %v4479 = vunpack.c.l.b16 %v4351
    %v4480 = vunpack.c.l.b16 %v4352
    %v4481 = vunpack.c.l.b16 %v4353
    %v4482 = vpack.c.b16 %v4419, %v4418
    %v4483 = vpack.c.b16 %v4421, %v4420
    %v4484 = vpack.c.b16 %v4423, %v4422
    %v4485 = vpack.c.b16 %v4425, %v4424
    %v4486 = vpack.c.b16 %v4427, %v4426
    %v4487 = vpack.c.b16 %v4429, %v4428
    %v4488 = vpack.c.b16 %v4431, %v4430
    %v4489 = vpack.c.b16 %v4433, %v4432
    %v4490 = vpack.c.b16 %v4435, %v4434
    %v4491 = vpack.c.b16 %v4437, %v4436
    %v4492 = vpack.c.b16 %v4439, %v4438
    %v4493 = vpack.c.b16 %v4441, %v4440
    %v4494 = vpack.c.b16 %v4443, %v4442
    %v4495 = vpack.c.b16 %v4445, %v4444
    %v4496 = vpack.c.b16 %v4447, %v4446
    %v4497 = vpack.c.b16 %v4449, %v4448
    %v4498 = vpack.c.b16 %v4451, %v4450
    %v4499 = vpack.c.b16 %v4453, %v4452
    %v4500 = vpack.c.b16 %v4455, %v4454
    %v4501 = vpack.c.b16 %v4457, %v4456
    %v4502 = vpack.c.b16 %v4459, %v4458
    %v4503 = vpack.c.b16 %v4461, %v4460
    %v4504 = vpack.c.b16 %v4463, %v4462
    %v4505 = vpack.c.b16 %v4465, %v4464
    %v4506 = vpack.c.b16 %v4467, %v4466
    %v4507 = vpack.c.b16 %v4469, %v4468
    %v4508 = vpack.c.b16 %v4471, %v4470
    %v4509 = vpack.c.b16 %v4473, %v4472
    %v4510 = vpack.c.b16 %v4475, %v4474
    %v4511 = vpack.c.b16 %v4477, %v4476
    %v4512 = vpack.c.b16 %v4479, %v4478
    %v4513 = vpack.c.b16 %v4481, %v4480
    %4546 = vmatpush.bf16.msra.mxu0 %v4489
    %4547 = vmatpush.bf16.msra.mxu0 %v4488
    %4548 = vmatpush.bf16.msra.mxu0 %v4487
    %4549 = vmatpush.bf16.msra.mxu0 %v4486
    %4550 = vmatpush.bf16.msra.mxu0 %v4485
    %4551 = vmatpush.bf16.msra.mxu0 %v4484
    %4552 = vmatpush.bf16.msra.mxu0 %v4483
    %4553 = vmatpush.bf16.msra.mxu0 %v4482
    %4554 = vmatmul.bf16.gmra.mxu0 %v4282
    %v4555 = vpop.f32.mrf.mxu0
    %v4556 = vpop.f32.mrf.mxu0
    %4557 = vmatmul.bf16.gmra.mxu0 %v4286
    %v4558 = vpop.f32.mrf.mxu0
    %v4559 = vadd.f32 0.0, %v4558
    %v4560 = vpop.f32.mrf.mxu0
    %4561 = vdwg.mxu0
    %4562 = vmatpush.bf16.msra.mxu0 %v4497
    %4563 = vmatpush.bf16.msra.mxu0 %v4496
    %4564 = vmatpush.bf16.msra.mxu0 %v4495
    %4565 = vmatpush.bf16.msra.mxu0 %v4494
    %4566 = vmatpush.bf16.msra.mxu0 %v4493
    %4567 = vmatpush.bf16.msra.mxu0 %v4492
    %4568 = vmatpush.bf16.msra.mxu0 %v4491
    %4569 = vmatpush.bf16.msra.mxu0 %v4490
    %4570 = vmatmul.bf16.gmra.mxu0 %v4283
    %v4571 = vpop.f32.mrf.mxu0
    %v4572 = vpop.f32.mrf.mxu0
    %4573 = vmatmul.bf16.gmra.mxu0 %v4287
    %v4574 = vpop.f32.mrf.mxu0
    %v4575 = vadd.f32 %v4559, %v4574
    %v4576 = vpop.f32.mrf.mxu0
    %4577 = vdwg.mxu0
    %4578 = vmatpush.bf16.msra.mxu0 %v4505
    %4579 = vmatpush.bf16.msra.mxu0 %v4504
    %4580 = vmatpush.bf16.msra.mxu0 %v4503
    %4581 = vmatpush.bf16.msra.mxu0 %v4502
    %4582 = vmatpush.bf16.msra.mxu0 %v4501
    %4583 = vmatpush.bf16.msra.mxu0 %v4500
    %4584 = vmatpush.bf16.msra.mxu0 %v4499
    %4585 = vmatpush.bf16.msra.mxu0 %v4498
    %4586 = vmatmul.bf16.gmra.mxu0 %v4284
    %v4587 = vpop.f32.mrf.mxu0
    %v4588 = vpop.f32.mrf.mxu0
    %4589 = vmatmul.bf16.gmra.mxu0 %v4288
    %v4590 = vpop.f32.mrf.mxu0
    %v4591 = vadd.f32 %v4575, %v4590
    %v4592 = vpop.f32.mrf.mxu0
    %4593 = vdwg.mxu0
    %4594 = vmatpush.bf16.msra.mxu0 %v4513
    %4595 = vmatpush.bf16.msra.mxu0 %v4512
    %4596 = vmatpush.bf16.msra.mxu0 %v4511
    %4597 = vmatpush.bf16.msra.mxu0 %v4510
    %4598 = vmatpush.bf16.msra.mxu0 %v4509
    %4599 = vmatpush.bf16.msra.mxu0 %v4508
    %4600 = vmatpush.bf16.msra.mxu0 %v4507
    %4601 = vmatpush.bf16.msra.mxu0 %v4506
    %4602 = vmatmul.bf16.gmra.mxu0 %v4285
    %v4603 = vpop.f32.mrf.mxu0
    %v4604 = vpop.f32.mrf.mxu0
    %4605 = vmatmul.bf16.gmra.mxu0 %v4289
    %v4606 = vpop.f32.mrf.mxu0
    %v4607 = vadd.f32 %v4591, %v4606
    %v4608 = vpop.f32.mrf.mxu0
    %4609 = vdwg.mxu0
    %v4674 = vunpack.c.l.b16 %v4076
    %v4675 = vunpack.c.l.b16 %v4077
    %v4676 = vunpack.c.l.b16 %v4078
    %v4677 = vunpack.c.l.b16 %v4079
    %v4678 = vunpack.c.l.b16 %v4080
    %v4679 = vunpack.c.l.b16 %v4081
    %v4680 = vunpack.c.l.b16 %v4082
    %v4681 = vunpack.c.l.b16 %v4083
    %v4682 = vunpack.c.l.b16 %v4084
    %v4683 = vunpack.c.l.b16 %v4085
    %v4684 = vunpack.c.l.b16 %v4086
    %v4685 = vunpack.c.l.b16 %v4087
    %v4686 = vunpack.c.l.b16 %v4088
    %v4687 = vunpack.c.l.b16 %v4089
    %v4688 = vunpack.c.l.b16 %v4090
    %v4689 = vunpack.c.l.b16 %v4091
    %v4690 = vunpack.c.l.b16 %v4092
    %v4691 = vunpack.c.l.b16 %v4093
    %v4692 = vunpack.c.l.b16 %v4094
    %v4693 = vunpack.c.l.b16 %v4095
    %v4694 = vunpack.c.l.b16 %v4096
    %v4695 = vunpack.c.l.b16 %v4097
    %v4696 = vunpack.c.l.b16 %v4098
    %v4697 = vunpack.c.l.b16 %v4099
    %v4698 = vunpack.c.l.b16 %v4100
    %v4699 = vunpack.c.l.b16 %v4101
    %v4700 = vunpack.c.l.b16 %v4102
    %v4701 = vunpack.c.l.b16 %v4103
    %v4702 = vunpack.c.l.b16 %v4104
    %v4703 = vunpack.c.l.b16 %v4105
    %v4704 = vunpack.c.l.b16 %v4106
    %v4705 = vunpack.c.l.b16 %v4107
    %v4706 = vunpack.c.l.b16 %v4108
    %v4707 = vunpack.c.l.b16 %v4109
    %v4708 = vunpack.c.l.b16 %v4110
    %v4709 = vunpack.c.l.b16 %v4111
    %v4710 = vunpack.c.l.b16 %v4112
    %v4711 = vunpack.c.l.b16 %v4113
    %v4712 = vunpack.c.l.b16 %v4114
    %v4713 = vunpack.c.l.b16 %v4115
    %v4714 = vunpack.c.l.b16 %v4116
    %v4715 = vunpack.c.l.b16 %v4117
    %v4716 = vunpack.c.l.b16 %v4118
    %v4717 = vunpack.c.l.b16 %v4119
    %v4718 = vunpack.c.l.b16 %v4120
    %v4719 = vunpack.c.l.b16 %v4121
    %v4720 = vunpack.c.l.b16 %v4122
    %v4721 = vunpack.c.l.b16 %v4123
    %v4722 = vunpack.c.l.b16 %v4124
    %v4723 = vunpack.c.l.b16 %v4125
    %v4724 = vunpack.c.l.b16 %v4126
    %v4725 = vunpack.c.l.b16 %v4127
    %v4726 = vunpack.c.l.b16 %v4128
    %v4727 = vunpack.c.l.b16 %v4129
    %v4728 = vunpack.c.l.b16 %v4130
    %v4729 = vunpack.c.l.b16 %v4131
    %v4730 = vunpack.c.l.b16 %v4132
    %v4731 = vunpack.c.l.b16 %v4133
    %v4732 = vunpack.c.l.b16 %v4134
    %v4733 = vunpack.c.l.b16 %v4135
    %v4734 = vunpack.c.l.b16 %v4136
    %v4735 = vunpack.c.l.b16 %v4137
    %v4736 = vunpack.c.l.b16 %v4138
    %v4737 = vunpack.c.l.b16 %v4139
    %v4738 = vpack.c.b16 %v4675, %v4674
    %v4739 = vpack.c.b16 %v4677, %v4676
    %v4740 = vpack.c.b16 %v4679, %v4678
    %v4741 = vpack.c.b16 %v4681, %v4680
    %v4742 = vpack.c.b16 %v4683, %v4682
    %v4743 = vpack.c.b16 %v4685, %v4684
    %v4744 = vpack.c.b16 %v4687, %v4686
    %v4745 = vpack.c.b16 %v4689, %v4688
    %v4746 = vpack.c.b16 %v4691, %v4690
    %v4747 = vpack.c.b16 %v4693, %v4692
    %v4748 = vpack.c.b16 %v4695, %v4694
    %v4749 = vpack.c.b16 %v4697, %v4696
    %v4750 = vpack.c.b16 %v4699, %v4698
    %v4751 = vpack.c.b16 %v4701, %v4700
    %v4752 = vpack.c.b16 %v4703, %v4702
    %v4753 = vpack.c.b16 %v4705, %v4704
    %v4754 = vpack.c.b16 %v4707, %v4706
    %v4755 = vpack.c.b16 %v4709, %v4708
    %v4756 = vpack.c.b16 %v4711, %v4710
    %v4757 = vpack.c.b16 %v4713, %v4712
    %v4758 = vpack.c.b16 %v4715, %v4714
    %v4759 = vpack.c.b16 %v4717, %v4716
    %v4760 = vpack.c.b16 %v4719, %v4718
    %v4761 = vpack.c.b16 %v4721, %v4720
    %v4762 = vpack.c.b16 %v4723, %v4722
    %v4763 = vpack.c.b16 %v4725, %v4724
    %v4764 = vpack.c.b16 %v4727, %v4726
    %v4765 = vpack.c.b16 %v4729, %v4728
    %v4766 = vpack.c.b16 %v4731, %v4730
    %v4767 = vpack.c.b16 %v4733, %v4732
    %v4768 = vpack.c.b16 %v4735, %v4734
    %v4769 = vpack.c.b16 %v4737, %v4736
    %4802 = vmatpush.bf16.msra.mxu0 %v4745
    %4803 = vmatpush.bf16.msra.mxu0 %v4744
    %4804 = vmatpush.bf16.msra.mxu0 %v4743
    %4805 = vmatpush.bf16.msra.mxu0 %v4742
    %4806 = vmatpush.bf16.msra.mxu0 %v4741
    %4807 = vmatpush.bf16.msra.mxu0 %v4740
    %4808 = vmatpush.bf16.msra.mxu0 %v4739
    %4809 = vmatpush.bf16.msra.mxu0 %v4738
    %4810 = vmatmul.bf16.gmra.mxu0 %v4067
    %v4811 = vpop.f32.mrf.mxu0
    %v4812 = vpop.f32.mrf.mxu0
    %4813 = vmatmul.bf16.gmra.mxu0 %v4071
    %v4814 = vpop.f32.mrf.mxu0
    %v4815 = vadd.f32 %v4607, %v4814
    %v4816 = vpop.f32.mrf.mxu0
    %4817 = vdwg.mxu0
    %4818 = vmatpush.bf16.msra.mxu0 %v4753
    %4819 = vmatpush.bf16.msra.mxu0 %v4752
    %4820 = vmatpush.bf16.msra.mxu0 %v4751
    %4821 = vmatpush.bf16.msra.mxu0 %v4750
    %4822 = vmatpush.bf16.msra.mxu0 %v4749
    %4823 = vmatpush.bf16.msra.mxu0 %v4748
    %4824 = vmatpush.bf16.msra.mxu0 %v4747
    %4825 = vmatpush.bf16.msra.mxu0 %v4746
    %4826 = vmatmul.bf16.gmra.mxu0 %v4068
    %v4827 = vpop.f32.mrf.mxu0
    %v4828 = vpop.f32.mrf.mxu0
    %4829 = vmatmul.bf16.gmra.mxu0 %v4072
    %v4830 = vpop.f32.mrf.mxu0
    %v4831 = vadd.f32 %v4815, %v4830
    %v4832 = vpop.f32.mrf.mxu0
    %4833 = vdwg.mxu0
    %4834 = vmatpush.bf16.msra.mxu0 %v4761
    %4835 = vmatpush.bf16.msra.mxu0 %v4760
    %4836 = vmatpush.bf16.msra.mxu0 %v4759
    %4837 = vmatpush.bf16.msra.mxu0 %v4758
    %4838 = vmatpush.bf16.msra.mxu0 %v4757
    %4839 = vmatpush.bf16.msra.mxu0 %v4756
    %4840 = vmatpush.bf16.msra.mxu0 %v4755
    %4841 = vmatpush.bf16.msra.mxu0 %v4754
    %4842 = vmatmul.bf16.gmra.mxu0 %v4069
    %v4843 = vpop.f32.mrf.mxu0
    %v4844 = vpop.f32.mrf.mxu0
    %4845 = vmatmul.bf16.gmra.mxu0 %v4073
    %v4846 = vpop.f32.mrf.mxu0
    %v4847 = vadd.f32 %v4831, %v4846
    %v4848 = vpop.f32.mrf.mxu0
    %4849 = vdwg.mxu0
    %4850 = vmatpush.bf16.msra.mxu0 %v4769
    %4851 = vmatpush.bf16.msra.mxu0 %v4768
    %4852 = vmatpush.bf16.msra.mxu0 %v4767
    %4853 = vmatpush.bf16.msra.mxu0 %v4766
    %4854 = vmatpush.bf16.msra.mxu0 %v4765
    %4855 = vmatpush.bf16.msra.mxu0 %v4764
    %4856 = vmatpush.bf16.msra.mxu0 %v4763
    %4857 = vmatpush.bf16.msra.mxu0 %v4762
    %4858 = vmatmul.bf16.gmra.mxu0 %v4070
    %v4859 = vpop.f32.mrf.mxu0
    %v4860 = vpop.f32.mrf.mxu0
    %4861 = vmatmul.bf16.gmra.mxu0 %v4074
    %v4862 = vpop.f32.mrf.mxu0
    %v4863 = vadd.f32 %v4847, %v4862
    %v4864 = vpop.f32.mrf.mxu0
    %4865 = vdwg.mxu0
    %v4866 = vld [vmem:[%s3917 + $0x20] sm:$0xff]
    %v4867 = vld [vmem:[%s3917 + $0x28] sm:$0xff]
    %v4868 = vld [vmem:[%s3917 + $0x60] sm:$0xff]
    %v4869 = vld [vmem:[%s3917 + $0x68] sm:$0xff]
    %v4870 = vld [vmem:[%s3917 + $0xa0] sm:$0xff]
    %v4871 = vld [vmem:[%s3917 + $0xa8] sm:$0xff]
    %v4872 = vld [vmem:[%s3917 + $0xe0] sm:$0xff]
    %v4873 = vld [vmem:[%s3917 + $0xe8] sm:$0xff]
    %v4874 = vld [vmem:[%s3926 + $0x8] sm:$0xf]
    %v4876 = vperm.slane %v4874, 0
    %v4877 = vperm.slane %v4874, 1
    %v4878 = vperm.slane %v4874, 2
    %v4879 = vperm.slane %v4874, 3
    %v4892 = vunpack.c.l.b16 %v4866
    %v4893 = vunpack.c.h.b16 %v4866
    %v4894 = vunpack.c.l.b16 %v4867
    %v4895 = vunpack.c.h.b16 %v4867
    %v4896 = vunpack.c.l.b16 %v4868
    %v4897 = vunpack.c.h.b16 %v4868
    %v4898 = vunpack.c.l.b16 %v4869
    %v4899 = vunpack.c.h.b16 %v4869
    %v4900 = vunpack.c.l.b16 %v4870
    %v4901 = vunpack.c.h.b16 %v4870
    %v4902 = vunpack.c.l.b16 %v4871
    %v4903 = vunpack.c.h.b16 %v4871
    %v4904 = vunpack.c.l.b16 %v4872
    %v4905 = vunpack.c.h.b16 %v4872
    %v4906 = vunpack.c.l.b16 %v4873
    %v4907 = vunpack.c.h.b16 %v4873
    %v4908 = vpack.c.b16 %v4896, %v4892
    %v4909 = vpack.c.b16 %v4897, %v4893
    %v4910 = vpack.c.b16 %v4898, %v4894
    %v4911 = vpack.c.b16 %v4899, %v4895
    %v4912 = vpack.c.b16 %v4904, %v4900
    %v4913 = vpack.c.b16 %v4905, %v4901
    %v4914 = vpack.c.b16 %v4906, %v4902
    %v4915 = vpack.c.b16 %v4907, %v4903
    %4924 = vmatpush.bf16.msra.mxu0 0
    %4925 = vmatpush.bf16.msra.mxu0 0
    %4926 = vmatpush.bf16.msra.mxu0 0
    %4927 = vmatpush.bf16.msra.mxu0 0
    %4928 = vmatpush.bf16.msra.mxu0 0
    %4929 = vmatpush.bf16.msra.mxu0 0
    %4930 = vmatpush.bf16.msra.mxu0 %v4912
    %4931 = vmatpush.bf16.msra.mxu0 %v4908
    %4932 = vmatmul.bf16.gmra.mxu0 %v3978
    %v4933 = vpop.f32.mrf.mxu0
    %v4934 = vadd.f32 %v4876, %v4933
    %v4935 = vpop.f32.mrf.mxu0
    %v4936 = vadd.f32 %v4876, %v4935
    %4937 = vmatmul.bf16.gmra.mxu0 %v3981
    %v4938 = vpop.f32.mrf.mxu0
    %v4939 = vadd.f32 %v4876, %v4938
    %v4940 = vpop.f32.mrf.mxu0
    %4941 = vdwg.mxu0
    %4942 = vmatpush.bf16.msra.mxu0 0
    %4943 = vmatpush.bf16.msra.mxu0 0
    %4944 = vmatpush.bf16.msra.mxu0 0
    %4945 = vmatpush.bf16.msra.mxu0 0
    %4946 = vmatpush.bf16.msra.mxu0 0
    %4947 = vmatpush.bf16.msra.mxu0 0
    %4948 = vmatpush.bf16.msra.mxu0 %v4913
    %4949 = vmatpush.bf16.msra.mxu0 %v4909
    %4950 = vmatmul.bf16.gmra.mxu0 %v3978
    %v4951 = vpop.f32.mrf.mxu0
    %v4952 = vadd.f32 %v4877, %v4951
    %v4953 = vpop.f32.mrf.mxu0
    %v4954 = vadd.f32 %v4877, %v4953
    %4955 = vmatmul.bf16.gmra.mxu0 %v3981
    %v4956 = vpop.f32.mrf.mxu0
    %v4957 = vadd.f32 %v4877, %v4956
    %v4958 = vpop.f32.mrf.mxu0
    %4959 = vdwg.mxu0
    %4960 = vmatpush.bf16.msra.mxu0 0
    %4961 = vmatpush.bf16.msra.mxu0 0
    %4962 = vmatpush.bf16.msra.mxu0 0
    %4963 = vmatpush.bf16.msra.mxu0 0
    %4964 = vmatpush.bf16.msra.mxu0 0
    %4965 = vmatpush.bf16.msra.mxu0 0
    %4966 = vmatpush.bf16.msra.mxu0 %v4914
    %4967 = vmatpush.bf16.msra.mxu0 %v4910
    %4968 = vmatmul.bf16.gmra.mxu0 %v3978
    %v4969 = vpop.f32.mrf.mxu0
    %v4970 = vadd.f32 %v4878, %v4969
    %v4971 = vpop.f32.mrf.mxu0
    %v4972 = vadd.f32 %v4878, %v4971
    %4973 = vmatmul.bf16.gmra.mxu0 %v3981
    %v4974 = vpop.f32.mrf.mxu0
    %v4975 = vadd.f32 %v4878, %v4974
    %v4976 = vpop.f32.mrf.mxu0
    %4977 = vdwg.mxu0
    %4978 = vmatpush.bf16.msra.mxu0 0
    %4979 = vmatpush.bf16.msra.mxu0 0
    %4980 = vmatpush.bf16.msra.mxu0 0
    %4981 = vmatpush.bf16.msra.mxu0 0
    %4982 = vmatpush.bf16.msra.mxu0 0
    %4983 = vmatpush.bf16.msra.mxu0 0
    %4984 = vmatpush.bf16.msra.mxu0 %v4915
    %4985 = vmatpush.bf16.msra.mxu0 %v4911
    %4986 = vmatmul.bf16.gmra.mxu0 %v3978
    %v4987 = vpop.f32.mrf.mxu0
    %v4988 = vadd.f32 %v4879, %v4987
    %v4989 = vpop.f32.mrf.mxu0
    %v4990 = vadd.f32 %v4879, %v4989
    %4991 = vmatmul.bf16.gmra.mxu0 %v3981
    %v4992 = vpop.f32.mrf.mxu0
    %v4993 = vadd.f32 %v4879, %v4992
    %v4994 = vpop.f32.mrf.mxu0
    %4995 = vdwg.mxu0
    %v4996 = vmax.f32 %v4934, 0.0
    %v4997 = vmax.f32 %v4952, 0.0
    %v4998 = vmax.f32 %v4970, 0.0
    %v4999 = vmax.f32 %v4988, 0.0
    %v5000 = vmax.f32 %v4936, 0.0
    %v5001 = vmax.f32 %v4954, 0.0
    %v5002 = vmax.f32 %v4972, 0.0
    %v5003 = vmax.f32 %v4990, 0.0
    %v5004 = vmax.f32 %v4939, 0.0
    %v5005 = vmax.f32 %v4957, 0.0
    %v5006 = vmax.f32 %v4975, 0.0
    %v5007 = vmax.f32 %v4993, 0.0
    %v5008 = vpack.c.bf16 %v5000, %v4996
    %v5009 = vpack.c.bf16 %v5001, %v4997
    %v5010 = vpack.c.bf16 %v5002, %v4998
    %v5011 = vpack.c.bf16 %v5003, %v4999
    %v5012 = vpack.c.bf16 %v5004, %v5004
    %v5013 = vpack.c.bf16 %v5005, %v5005
    %v5014 = vpack.c.bf16 %v5006, %v5006
    %v5015 = vpack.c.bf16 %v5007, %v5007
    %v5016 = vld [vmem:[%s4075 + $0x200] sm:$0xf]
    %v5017 = vld [vmem:[%s4075 + $0x204] sm:$0xf]
    %v5018 = vld [vmem:[%s4075 + $0x208] sm:$0xf]
    %v5019 = vld [vmem:[%s4075 + $0x20c] sm:$0xf]
    %v5020 = vld [vmem:[%s4075 + $0x210] sm:$0xf]
    %v5021 = vld [vmem:[%s4075 + $0x214] sm:$0xf]
    %v5022 = vld [vmem:[%s4075 + $0x218] sm:$0xf]
    %v5023 = vld [vmem:[%s4075 + $0x21c] sm:$0xf]
    %v5024 = vld [vmem:[%s4075 + $0x220] sm:$0xf]
    %v5025 = vld [vmem:[%s4075 + $0x224] sm:$0xf]
    %v5026 = vld [vmem:[%s4075 + $0x228] sm:$0xf]
    %v5027 = vld [vmem:[%s4075 + $0x22c] sm:$0xf]
    %v5028 = vld [vmem:[%s4075 + $0x230] sm:$0xf]
    %v5029 = vld [vmem:[%s4075 + $0x234] sm:$0xf]
    %v5030 = vld [vmem:[%s4075 + $0x238] sm:$0xf]
    %v5031 = vld [vmem:[%s4075 + $0x23c] sm:$0xf]
    %v5032 = vld [vmem:[%s4075 + $0x240] sm:$0xf]
    %v5033 = vld [vmem:[%s4075 + $0x244] sm:$0xf]
    %v5034 = vld [vmem:[%s4075 + $0x248] sm:$0xf]
    %v5035 = vld [vmem:[%s4075 + $0x24c] sm:$0xf]
    %v5036 = vld [vmem:[%s4075 + $0x250] sm:$0xf]
    %v5037 = vld [vmem:[%s4075 + $0x254] sm:$0xf]
    %v5038 = vld [vmem:[%s4075 + $0x258] sm:$0xf]
    %v5039 = vld [vmem:[%s4075 + $0x25c] sm:$0xf]
    %v5040 = vld [vmem:[%s4075 + $0x260] sm:$0xf]
    %v5041 = vld [vmem:[%s4075 + $0x264] sm:$0xf]
    %v5042 = vld [vmem:[%s4075 + $0x268] sm:$0xf]
    %v5043 = vld [vmem:[%s4075 + $0x26c] sm:$0xf]
    %v5044 = vld [vmem:[%s4075 + $0x270] sm:$0xf]
    %v5045 = vld [vmem:[%s4075 + $0x274] sm:$0xf]
    %v5046 = vld [vmem:[%s4075 + $0x278] sm:$0xf]
    %v5047 = vld [vmem:[%s4075 + $0x27c] sm:$0xf]
    %v5048 = vld [vmem:[%s4075 + $0x280] sm:$0xf]
    %v5049 = vld [vmem:[%s4075 + $0x284] sm:$0xf]
    %v5050 = vld [vmem:[%s4075 + $0x288] sm:$0xf]
    %v5051 = vld [vmem:[%s4075 + $0x28c] sm:$0xf]
    %v5052 = vld [vmem:[%s4075 + $0x290] sm:$0xf]
    %v5053 = vld [vmem:[%s4075 + $0x294] sm:$0xf]
    %v5054 = vld [vmem:[%s4075 + $0x298] sm:$0xf]
    %v5055 = vld [vmem:[%s4075 + $0x29c] sm:$0xf]
    %v5056 = vld [vmem:[%s4075 + $0x2a0] sm:$0xf]
    %v5057 = vld [vmem:[%s4075 + $0x2a4] sm:$0xf]
    %v5058 = vld [vmem:[%s4075 + $0x2a8] sm:$0xf]
    %v5059 = vld [vmem:[%s4075 + $0x2ac] sm:$0xf]
    %v5060 = vld [vmem:[%s4075 + $0x2b0] sm:$0xf]
    %v5061 = vld [vmem:[%s4075 + $0x2b4] sm:$0xf]
    %v5062 = vld [vmem:[%s4075 + $0x2b8] sm:$0xf]
    %v5063 = vld [vmem:[%s4075 + $0x2bc] sm:$0xf]
    %v5064 = vld [vmem:[%s4075 + $0x2c0] sm:$0xf]
    %v5065 = vld [vmem:[%s4075 + $0x2c4] sm:$0xf]
    %v5066 = vld [vmem:[%s4075 + $0x2c8] sm:$0xf]
    %v5067 = vld [vmem:[%s4075 + $0x2cc] sm:$0xf]
    %v5068 = vld [vmem:[%s4075 + $0x2d0] sm:$0xf]
    %v5069 = vld [vmem:[%s4075 + $0x2d4] sm:$0xf]
    %v5070 = vld [vmem:[%s4075 + $0x2d8] sm:$0xf]
    %v5071 = vld [vmem:[%s4075 + $0x2dc] sm:$0xf]
    %v5072 = vld [vmem:[%s4075 + $0x2e0] sm:$0xf]
    %v5073 = vld [vmem:[%s4075 + $0x2e4] sm:$0xf]
    %v5074 = vld [vmem:[%s4075 + $0x2e8] sm:$0xf]
    %v5075 = vld [vmem:[%s4075 + $0x2ec] sm:$0xf]
    %v5076 = vld [vmem:[%s4075 + $0x2f0] sm:$0xf]
    %v5077 = vld [vmem:[%s4075 + $0x2f4] sm:$0xf]
    %v5078 = vld [vmem:[%s4075 + $0x2f8] sm:$0xf]
    %v5079 = vld [vmem:[%s4075 + $0x2fc] sm:$0xf]
    %v5144 = vunpack.c.l.b16 %v5016
    %v5145 = vunpack.c.l.b16 %v5017
    %v5146 = vunpack.c.l.b16 %v5018
    %v5147 = vunpack.c.l.b16 %v5019
    %v5148 = vunpack.c.l.b16 %v5020
    %v5149 = vunpack.c.l.b16 %v5021
    %v5150 = vunpack.c.l.b16 %v5022
    %v5151 = vunpack.c.l.b16 %v5023
    %v5152 = vunpack.c.l.b16 %v5024
    %v5153 = vunpack.c.l.b16 %v5025
    %v5154 = vunpack.c.l.b16 %v5026
    %v5155 = vunpack.c.l.b16 %v5027
    %v5156 = vunpack.c.l.b16 %v5028
    %v5157 = vunpack.c.l.b16 %v5029
    %v5158 = vunpack.c.l.b16 %v5030
    %v5159 = vunpack.c.l.b16 %v5031
    %v5160 = vunpack.c.l.b16 %v5032
    %v5161 = vunpack.c.l.b16 %v5033
    %v5162 = vunpack.c.l.b16 %v5034
    %v5163 = vunpack.c.l.b16 %v5035
    %v5164 = vunpack.c.l.b16 %v5036
    %v5165 = vunpack.c.l.b16 %v5037
    %v5166 = vunpack.c.l.b16 %v5038
    %v5167 = vunpack.c.l.b16 %v5039
    %v5168 = vunpack.c.l.b16 %v5040
    %v5169 = vunpack.c.l.b16 %v5041
    %v5170 = vunpack.c.l.b16 %v5042
    %v5171 = vunpack.c.l.b16 %v5043
    %v5172 = vunpack.c.l.b16 %v5044
    %v5173 = vunpack.c.l.b16 %v5045
    %v5174 = vunpack.c.l.b16 %v5046
    %v5175 = vunpack.c.l.b16 %v5047
    %v5176 = vunpack.c.l.b16 %v5048
    %v5177 = vunpack.c.l.b16 %v5049
    %v5178 = vunpack.c.l.b16 %v5050
    %v5179 = vunpack.c.l.b16 %v5051
    %v5180 = vunpack.c.l.b16 %v5052
    %v5181 = vunpack.c.l.b16 %v5053
    %v5182 = vunpack.c.l.b16 %v5054
    %v5183 = vunpack.c.l.b16 %v5055
    %v5184 = vunpack.c.l.b16 %v5056
    %v5185 = vunpack.c.l.b16 %v5057
    %v5186 = vunpack.c.l.b16 %v5058
    %v5187 = vunpack.c.l.b16 %v5059
    %v5188 = vunpack.c.l.b16 %v5060
    %v5189 = vunpack.c.l.b16 %v5061
    %v5190 = vunpack.c.l.b16 %v5062
    %v5191 = vunpack.c.l.b16 %v5063
    %v5192 = vunpack.c.l.b16 %v5064
    %v5193 = vunpack.c.l.b16 %v5065
    %v5194 = vunpack.c.l.b16 %v5066
    %v5195 = vunpack.c.l.b16 %v5067
    %v5196 = vunpack.c.l.b16 %v5068
    %v5197 = vunpack.c.l.b16 %v5069
    %v5198 = vunpack.c.l.b16 %v5070
    %v5199 = vunpack.c.l.b16 %v5071
    %v5200 = vunpack.c.l.b16 %v5072
    %v5201 = vunpack.c.l.b16 %v5073
    %v5202 = vunpack.c.l.b16 %v5074
    %v5203 = vunpack.c.l.b16 %v5075
    %v5204 = vunpack.c.l.b16 %v5076
    %v5205 = vunpack.c.l.b16 %v5077
    %v5206 = vunpack.c.l.b16 %v5078
    %v5207 = vunpack.c.l.b16 %v5079
    %v5208 = vpack.c.b16 %v5145, %v5144
    %v5209 = vpack.c.b16 %v5147, %v5146
    %v5210 = vpack.c.b16 %v5149, %v5148
    %v5211 = vpack.c.b16 %v5151, %v5150
    %v5212 = vpack.c.b16 %v5153, %v5152
    %v5213 = vpack.c.b16 %v5155, %v5154
    %v5214 = vpack.c.b16 %v5157, %v5156
    %v5215 = vpack.c.b16 %v5159, %v5158
    %v5216 = vpack.c.b16 %v5161, %v5160
    %v5217 = vpack.c.b16 %v5163, %v5162
    %v5218 = vpack.c.b16 %v5165, %v5164
    %v5219 = vpack.c.b16 %v5167, %v5166
    %v5220 = vpack.c.b16 %v5169, %v5168
    %v5221 = vpack.c.b16 %v5171, %v5170
    %v5222 = vpack.c.b16 %v5173, %v5172
    %v5223 = vpack.c.b16 %v5175, %v5174
    %v5224 = vpack.c.b16 %v5177, %v5176
    %v5225 = vpack.c.b16 %v5179, %v5178
    %v5226 = vpack.c.b16 %v5181, %v5180
    %v5227 = vpack.c.b16 %v5183, %v5182
    %v5228 = vpack.c.b16 %v5185, %v5184
    %v5229 = vpack.c.b16 %v5187, %v5186
    %v5230 = vpack.c.b16 %v5189, %v5188
    %v5231 = vpack.c.b16 %v5191, %v5190
    %v5232 = vpack.c.b16 %v5193, %v5192
    %v5233 = vpack.c.b16 %v5195, %v5194
    %v5234 = vpack.c.b16 %v5197, %v5196
    %v5235 = vpack.c.b16 %v5199, %v5198
    %v5236 = vpack.c.b16 %v5201, %v5200
    %v5237 = vpack.c.b16 %v5203, %v5202
    %v5238 = vpack.c.b16 %v5205, %v5204
    %v5239 = vpack.c.b16 %v5207, %v5206
    %5272 = vmatpush.bf16.msra.mxu0 %v5215
    %5273 = vmatpush.bf16.msra.mxu0 %v5214
    %5274 = vmatpush.bf16.msra.mxu0 %v5213
    %5275 = vmatpush.bf16.msra.mxu0 %v5212
    %5276 = vmatpush.bf16.msra.mxu0 %v5211
    %5277 = vmatpush.bf16.msra.mxu0 %v5210
    %5278 = vmatpush.bf16.msra.mxu0 %v5209
    %5279 = vmatpush.bf16.msra.mxu0 %v5208
    %5280 = vmatmul.bf16.gmra.mxu0 %v5008
    %v5281 = vpop.f32.mrf.mxu0
    %v5282 = vpop.f32.mrf.mxu0
    %5283 = vmatmul.bf16.gmra.mxu0 %v5012
    %v5284 = vpop.f32.mrf.mxu0
    %v5285 = vadd.f32 0.0, %v5284
    %v5286 = vpop.f32.mrf.mxu0
    %5287 = vdwg.mxu0
    %5288 = vmatpush.bf16.msra.mxu0 %v5223
    %5289 = vmatpush.bf16.msra.mxu0 %v5222
    %5290 = vmatpush.bf16.msra.mxu0 %v5221
    %5291 = vmatpush.bf16.msra.mxu0 %v5220
    %5292 = vmatpush.bf16.msra.mxu0 %v5219
    %5293 = vmatpush.bf16.msra.mxu0 %v5218
    %5294 = vmatpush.bf16.msra.mxu0 %v5217
    %5295 = vmatpush.bf16.msra.mxu0 %v5216
    %5296 = vmatmul.bf16.gmra.mxu0 %v5009
    %v5297 = vpop.f32.mrf.mxu0
    %v5298 = vpop.f32.mrf.mxu0
    %5299 = vmatmul.bf16.gmra.mxu0 %v5013
    %v5300 = vpop.f32.mrf.mxu0
    %v5301 = vadd.f32 %v5285, %v5300
    %v5302 = vpop.f32.mrf.mxu0
    %5303 = vdwg.mxu0
    %5304 = vmatpush.bf16.msra.mxu0 %v5231
    %5305 = vmatpush.bf16.msra.mxu0 %v5230
    %5306 = vmatpush.bf16.msra.mxu0 %v5229
    %5307 = vmatpush.bf16.msra.mxu0 %v5228
    %5308 = vmatpush.bf16.msra.mxu0 %v5227
    %5309 = vmatpush.bf16.msra.mxu0 %v5226
    %5310 = vmatpush.bf16.msra.mxu0 %v5225
    %5311 = vmatpush.bf16.msra.mxu0 %v5224
    %5312 = vmatmul.bf16.gmra.mxu0 %v5010
    %v5313 = vpop.f32.mrf.mxu0
    %v5314 = vpop.f32.mrf.mxu0
    %5315 = vmatmul.bf16.gmra.mxu0 %v5014
    %v5316 = vpop.f32.mrf.mxu0
    %v5317 = vadd.f32 %v5301, %v5316
    %v5318 = vpop.f32.mrf.mxu0
    %5319 = vdwg.mxu0
    %5320 = vmatpush.bf16.msra.mxu0 %v5239
    %5321 = vmatpush.bf16.msra.mxu0 %v5238
    %5322 = vmatpush.bf16.msra.mxu0 %v5237
    %5323 = vmatpush.bf16.msra.mxu0 %v5236
    %5324 = vmatpush.bf16.msra.mxu0 %v5235
    %5325 = vmatpush.bf16.msra.mxu0 %v5234
    %5326 = vmatpush.bf16.msra.mxu0 %v5233
    %5327 = vmatpush.bf16.msra.mxu0 %v5232
    %5328 = vmatmul.bf16.gmra.mxu0 %v5011
    %v5329 = vpop.f32.mrf.mxu0
    %v5330 = vpop.f32.mrf.mxu0
    %5331 = vmatmul.bf16.gmra.mxu0 %v5015
    %v5332 = vpop.f32.mrf.mxu0
    %v5333 = vadd.f32 %v5317, %v5332
    %v5334 = vpop.f32.mrf.mxu0
    %5335 = vdwg.mxu0
    %v5336 = vadd.f32 %v4863, %v5333
    %v5337 = vld [vmem:[%s3917 + $0x30] sm:$0xff]
    %v5338 = vld [vmem:[%s3917 + $0x38] sm:$0xff]
    %v5339 = vld [vmem:[%s3917 + $0x70] sm:$0xff]
    %v5340 = vld [vmem:[%s3917 + $0x78] sm:$0xff]
    %v5341 = vld [vmem:[%s3917 + $0xb0] sm:$0xff]
    %v5342 = vld [vmem:[%s3917 + $0xb8] sm:$0xff]
    %v5343 = vld [vmem:[%s3917 + $0xf0] sm:$0xff]
    %v5344 = vld [vmem:[%s3917 + $0xf8] sm:$0xff]
    %v5345 = vld [vmem:[%s3926 + $0xc] sm:$0xf]
    %v5347 = vperm.slane %v5345, 0
    %v5348 = vperm.slane %v5345, 1
    %v5349 = vperm.slane %v5345, 2
    %v5350 = vperm.slane %v5345, 3
    %v5363 = vunpack.c.l.b16 %v5337
    %v5364 = vunpack.c.h.b16 %v5337
    %v5365 = vunpack.c.l.b16 %v5338
    %v5366 = vunpack.c.h.b16 %v5338
    %v5367 = vunpack.c.l.b16 %v5339
    %v5368 = vunpack.c.h.b16 %v5339
    %v5369 = vunpack.c.l.b16 %v5340
    %v5370 = vunpack.c.h.b16 %v5340
    %v5371 = vunpack.c.l.b16 %v5341
    %v5372 = vunpack.c.h.b16 %v5341
    %v5373 = vunpack.c.l.b16 %v5342
    %v5374 = vunpack.c.h.b16 %v5342
    %v5375 = vunpack.c.l.b16 %v5343
    %v5376 = vunpack.c.h.b16 %v5343
    %v5377 = vunpack.c.l.b16 %v5344
    %v5378 = vunpack.c.h.b16 %v5344
    %v5379 = vpack.c.b16 %v5367, %v5363
    %v5380 = vpack.c.b16 %v5368, %v5364
    %v5381 = vpack.c.b16 %v5369, %v5365
    %v5382 = vpack.c.b16 %v5370, %v5366
    %v5383 = vpack.c.b16 %v5375, %v5371
    %v5384 = vpack.c.b16 %v5376, %v5372
    %v5385 = vpack.c.b16 %v5377, %v5373
    %v5386 = vpack.c.b16 %v5378, %v5374
    %5395 = vmatpush.bf16.msra.mxu0 0
    %5396 = vmatpush.bf16.msra.mxu0 0
    %5397 = vmatpush.bf16.msra.mxu0 0
    %5398 = vmatpush.bf16.msra.mxu0 0
    %5399 = vmatpush.bf16.msra.mxu0 0
    %5400 = vmatpush.bf16.msra.mxu0 0
    %5401 = vmatpush.bf16.msra.mxu0 %v5383
    %5402 = vmatpush.bf16.msra.mxu0 %v5379
    %5403 = vmatmul.bf16.gmra.mxu0 %v3978
    %v5404 = vpop.f32.mrf.mxu0
    %v5405 = vadd.f32 %v5347, %v5404
    %v5406 = vpop.f32.mrf.mxu0
    %v5407 = vadd.f32 %v5347, %v5406
    %5408 = vmatmul.bf16.gmra.mxu0 %v3981
    %v5409 = vpop.f32.mrf.mxu0
    %v5410 = vadd.f32 %v5347, %v5409
    %v5411 = vpop.f32.mrf.mxu0
    %5412 = vdwg.mxu0
    %5413 = vmatpush.bf16.msra.mxu0 0
    %5414 = vmatpush.bf16.msra.mxu0 0
    %5415 = vmatpush.bf16.msra.mxu0 0
    %5416 = vmatpush.bf16.msra.mxu0 0
    %5417 = vmatpush.bf16.msra.mxu0 0
    %5418 = vmatpush.bf16.msra.mxu0 0
    %5419 = vmatpush.bf16.msra.mxu0 %v5384
    %5420 = vmatpush.bf16.msra.mxu0 %v5380
    %5421 = vmatmul.bf16.gmra.mxu0 %v3978
    %v5422 = vpop.f32.mrf.mxu0
    %v5423 = vadd.f32 %v5348, %v5422
    %v5424 = vpop.f32.mrf.mxu0
    %v5425 = vadd.f32 %v5348, %v5424
    %5426 = vmatmul.bf16.gmra.mxu0 %v3981
    %v5427 = vpop.f32.mrf.mxu0
    %v5428 = vadd.f32 %v5348, %v5427
    %v5429 = vpop.f32.mrf.mxu0
    %5430 = vdwg.mxu0
    %5431 = vmatpush.bf16.msra.mxu0 0
    %5432 = vmatpush.bf16.msra.mxu0 0
    %5433 = vmatpush.bf16.msra.mxu0 0
    %5434 = vmatpush.bf16.msra.mxu0 0
    %5435 = vmatpush.bf16.msra.mxu0 0
    %5436 = vmatpush.bf16.msra.mxu0 0
    %5437 = vmatpush.bf16.msra.mxu0 %v5385
    %5438 = vmatpush.bf16.msra.mxu0 %v5381
    %5439 = vmatmul.bf16.gmra.mxu0 %v3978
    %v5440 = vpop.f32.mrf.mxu0
    %v5441 = vadd.f32 %v5349, %v5440
    %v5442 = vpop.f32.mrf.mxu0
    %v5443 = vadd.f32 %v5349, %v5442
    %5444 = vmatmul.bf16.gmra.mxu0 %v3981
    %v5445 = vpop.f32.mrf.mxu0
    %v5446 = vadd.f32 %v5349, %v5445
    %v5447 = vpop.f32.mrf.mxu0
    %5448 = vdwg.mxu0
    %5449 = vmatpush.bf16.msra.mxu0 0
    %5450 = vmatpush.bf16.msra.mxu0 0
    %5451 = vmatpush.bf16.msra.mxu0 0
    %5452 = vmatpush.bf16.msra.mxu0 0
    %5453 = vmatpush.bf16.msra.mxu0 0
    %5454 = vmatpush.bf16.msra.mxu0 0
    %5455 = vmatpush.bf16.msra.mxu0 %v5386
    %5456 = vmatpush.bf16.msra.mxu0 %v5382
    %5457 = vmatmul.bf16.gmra.mxu0 %v3978
    %v5458 = vpop.f32.mrf.mxu0
    %v5459 = vadd.f32 %v5350, %v5458
    %v5460 = vpop.f32.mrf.mxu0
    %v5461 = vadd.f32 %v5350, %v5460
    %5462 = vmatmul.bf16.gmra.mxu0 %v3981
    %v5463 = vpop.f32.mrf.mxu0
    %v5464 = vadd.f32 %v5350, %v5463
    %v5465 = vpop.f32.mrf.mxu0
    %5466 = vdwg.mxu0
    %v5467 = vmax.f32 %v5405, 0.0
    %v5468 = vmax.f32 %v5423, 0.0
    %v5469 = vmax.f32 %v5441, 0.0
    %v5470 = vmax.f32 %v5459, 0.0
    %v5471 = vmax.f32 %v5407, 0.0
    %v5472 = vmax.f32 %v5425, 0.0
    %v5473 = vmax.f32 %v5443, 0.0
    %v5474 = vmax.f32 %v5461, 0.0
    %v5475 = vmax.f32 %v5410, 0.0
    %v5476 = vmax.f32 %v5428, 0.0
    %v5477 = vmax.f32 %v5446, 0.0
    %v5478 = vmax.f32 %v5464, 0.0
    %v5479 = vpack.c.bf16 %v5471, %v5467
    %v5480 = vpack.c.bf16 %v5472, %v5468
    %v5481 = vpack.c.bf16 %v5473, %v5469
    %v5482 = vpack.c.bf16 %v5474, %v5470
    %v5483 = vpack.c.bf16 %v5475, %v5475
    %v5484 = vpack.c.bf16 %v5476, %v5476
    %v5485 = vpack.c.bf16 %v5477, %v5477
    %v5486 = vpack.c.bf16 %v5478, %v5478
    %v5487 = vld [vmem:[%s4075 + $0x300] sm:$0xf]
    %v5488 = vld [vmem:[%s4075 + $0x304] sm:$0xf]
    %v5489 = vld [vmem:[%s4075 + $0x308] sm:$0xf]
    %v5490 = vld [vmem:[%s4075 + $0x30c] sm:$0xf]
    %v5491 = vld [vmem:[%s4075 + $0x310] sm:$0xf]
    %v5492 = vld [vmem:[%s4075 + $0x314] sm:$0xf]
    %v5493 = vld [vmem:[%s4075 + $0x318] sm:$0xf]
    %v5494 = vld [vmem:[%s4075 + $0x31c] sm:$0xf]
    %v5495 = vld [vmem:[%s4075 + $0x320] sm:$0xf]
    %v5496 = vld [vmem:[%s4075 + $0x324] sm:$0xf]
    %v5497 = vld [vmem:[%s4075 + $0x328] sm:$0xf]
    %v5498 = vld [vmem:[%s4075 + $0x32c] sm:$0xf]
    %v5499 = vld [vmem:[%s4075 + $0x330] sm:$0xf]
    %v5500 = vld [vmem:[%s4075 + $0x334] sm:$0xf]
    %v5501 = vld [vmem:[%s4075 + $0x338] sm:$0xf]
    %v5502 = vld [vmem:[%s4075 + $0x33c] sm:$0xf]
    %v5503 = vld [vmem:[%s4075 + $0x340] sm:$0xf]
    %v5504 = vld [vmem:[%s4075 + $0x344] sm:$0xf]
    %v5505 = vld [vmem:[%s4075 + $0x348] sm:$0xf]
    %v5506 = vld [vmem:[%s4075 + $0x34c] sm:$0xf]
    %v5507 = vld [vmem:[%s4075 + $0x350] sm:$0xf]
    %v5508 = vld [vmem:[%s4075 + $0x354] sm:$0xf]
    %v5509 = vld [vmem:[%s4075 + $0x358] sm:$0xf]
    %v5510 = vld [vmem:[%s4075 + $0x35c] sm:$0xf]
    %v5511 = vld [vmem:[%s4075 + $0x360] sm:$0xf]
    %v5512 = vld [vmem:[%s4075 + $0x364] sm:$0xf]
    %v5513 = vld [vmem:[%s4075 + $0x368] sm:$0xf]
    %v5514 = vld [vmem:[%s4075 + $0x36c] sm:$0xf]
    %v5515 = vld [vmem:[%s4075 + $0x370] sm:$0xf]
    %v5516 = vld [vmem:[%s4075 + $0x374] sm:$0xf]
    %v5517 = vld [vmem:[%s4075 + $0x378] sm:$0xf]
    %v5518 = vld [vmem:[%s4075 + $0x37c] sm:$0xf]
    %v5519 = vld [vmem:[%s4075 + $0x380] sm:$0xf]
    %v5520 = vld [vmem:[%s4075 + $0x384] sm:$0xf]
    %v5521 = vld [vmem:[%s4075 + $0x388] sm:$0xf]
    %v5522 = vld [vmem:[%s4075 + $0x38c] sm:$0xf]
    %v5523 = vld [vmem:[%s4075 + $0x390] sm:$0xf]
    %v5524 = vld [vmem:[%s4075 + $0x394] sm:$0xf]
    %v5525 = vld [vmem:[%s4075 + $0x398] sm:$0xf]
    %v5526 = vld [vmem:[%s4075 + $0x39c] sm:$0xf]
    %v5527 = vld [vmem:[%s4075 + $0x3a0] sm:$0xf]
    %v5528 = vld [vmem:[%s4075 + $0x3a4] sm:$0xf]
    %v5529 = vld [vmem:[%s4075 + $0x3a8] sm:$0xf]
    %v5530 = vld [vmem:[%s4075 + $0x3ac] sm:$0xf]
    %v5531 = vld [vmem:[%s4075 + $0x3b0] sm:$0xf]
    %v5532 = vld [vmem:[%s4075 + $0x3b4] sm:$0xf]
    %v5533 = vld [vmem:[%s4075 + $0x3b8] sm:$0xf]
    %v5534 = vld [vmem:[%s4075 + $0x3bc] sm:$0xf]
    %v5535 = vld [vmem:[%s4075 + $0x3c0] sm:$0xf]
    %v5536 = vld [vmem:[%s4075 + $0x3c4] sm:$0xf]
    %v5537 = vld [vmem:[%s4075 + $0x3c8] sm:$0xf]
    %v5538 = vld [vmem:[%s4075 + $0x3cc] sm:$0xf]
    %v5539 = vld [vmem:[%s4075 + $0x3d0] sm:$0xf]
    %v5540 = vld [vmem:[%s4075 + $0x3d4] sm:$0xf]
    %v5541 = vld [vmem:[%s4075 + $0x3d8] sm:$0xf]
    %v5542 = vld [vmem:[%s4075 + $0x3dc] sm:$0xf]
    %v5543 = vld [vmem:[%s4075 + $0x3e0] sm:$0xf]
    %v5544 = vld [vmem:[%s4075 + $0x3e4] sm:$0xf]
    %v5545 = vld [vmem:[%s4075 + $0x3e8] sm:$0xf]
    %v5546 = vld [vmem:[%s4075 + $0x3ec] sm:$0xf]
    %v5547 = vld [vmem:[%s4075 + $0x3f0] sm:$0xf]
    %v5548 = vld [vmem:[%s4075 + $0x3f4] sm:$0xf]
    %v5549 = vld [vmem:[%s4075 + $0x3f8] sm:$0xf]
    %v5550 = vld [vmem:[%s4075 + $0x3fc] sm:$0xf]
    %v5615 = vunpack.c.l.b16 %v5487
    %v5616 = vunpack.c.l.b16 %v5488
    %v5617 = vunpack.c.l.b16 %v5489
    %v5618 = vunpack.c.l.b16 %v5490
    %v5619 = vunpack.c.l.b16 %v5491
    %v5620 = vunpack.c.l.b16 %v5492
    %v5621 = vunpack.c.l.b16 %v5493
    %v5622 = vunpack.c.l.b16 %v5494
    %v5623 = vunpack.c.l.b16 %v5495
    %v5624 = vunpack.c.l.b16 %v5496
    %v5625 = vunpack.c.l.b16 %v5497
    %v5626 = vunpack.c.l.b16 %v5498
    %v5627 = vunpack.c.l.b16 %v5499
    %v5628 = vunpack.c.l.b16 %v5500
    %v5629 = vunpack.c.l.b16 %v5501
    %v5630 = vunpack.c.l.b16 %v5502
    %v5631 = vunpack.c.l.b16 %v5503
    %v5632 = vunpack.c.l.b16 %v5504
    %v5633 = vunpack.c.l.b16 %v5505
    %v5634 = vunpack.c.l.b16 %v5506
    %v5635 = vunpack.c.l.b16 %v5507
    %v5636 = vunpack.c.l.b16 %v5508
    %v5637 = vunpack.c.l.b16 %v5509
    %v5638 = vunpack.c.l.b16 %v5510
    %v5639 = vunpack.c.l.b16 %v5511
    %v5640 = vunpack.c.l.b16 %v5512
    %v5641 = vunpack.c.l.b16 %v5513
    %v5642 = vunpack.c.l.b16 %v5514
    %v5643 = vunpack.c.l.b16 %v5515
    %v5644 = vunpack.c.l.b16 %v5516
    %v5645 = vunpack.c.l.b16 %v5517
    %v5646 = vunpack.c.l.b16 %v5518
    %v5647 = vunpack.c.l.b16 %v5519
    %v5648 = vunpack.c.l.b16 %v5520
    %v5649 = vunpack.c.l.b16 %v5521
    %v5650 = vunpack.c.l.b16 %v5522
    %v5651 = vunpack.c.l.b16 %v5523
    %v5652 = vunpack.c.l.b16 %v5524
    %v5653 = vunpack.c.l.b16 %v5525
    %v5654 = vunpack.c.l.b16 %v5526
    %v5655 = vunpack.c.l.b16 %v5527
    %v5656 = vunpack.c.l.b16 %v5528
    %v5657 = vunpack.c.l.b16 %v5529
    %v5658 = vunpack.c.l.b16 %v5530
    %v5659 = vunpack.c.l.b16 %v5531
    %v5660 = vunpack.c.l.b16 %v5532
    %v5661 = vunpack.c.l.b16 %v5533
    %v5662 = vunpack.c.l.b16 %v5534
    %v5663 = vunpack.c.l.b16 %v5535
    %v5664 = vunpack.c.l.b16 %v5536
    %v5665 = vunpack.c.l.b16 %v5537
    %v5666 = vunpack.c.l.b16 %v5538
    %v5667 = vunpack.c.l.b16 %v5539
    %v5668 = vunpack.c.l.b16 %v5540
    %v5669 = vunpack.c.l.b16 %v5541
    %v5670 = vunpack.c.l.b16 %v5542
    %v5671 = vunpack.c.l.b16 %v5543
    %v5672 = vunpack.c.l.b16 %v5544
    %v5673 = vunpack.c.l.b16 %v5545
    %v5674 = vunpack.c.l.b16 %v5546
    %v5675 = vunpack.c.l.b16 %v5547
    %v5676 = vunpack.c.l.b16 %v5548
    %v5677 = vunpack.c.l.b16 %v5549
    %v5678 = vunpack.c.l.b16 %v5550
    %v5679 = vpack.c.b16 %v5616, %v5615
    %v5680 = vpack.c.b16 %v5618, %v5617
    %v5681 = vpack.c.b16 %v5620, %v5619
    %v5682 = vpack.c.b16 %v5622, %v5621
    %v5683 = vpack.c.b16 %v5624, %v5623
    %v5684 = vpack.c.b16 %v5626, %v5625
    %v5685 = vpack.c.b16 %v5628, %v5627
    %v5686 = vpack.c.b16 %v5630, %v5629
    %v5687 = vpack.c.b16 %v5632, %v5631
    %v5688 = vpack.c.b16 %v5634, %v5633
    %v5689 = vpack.c.b16 %v5636, %v5635
    %v5690 = vpack.c.b16 %v5638, %v5637
    %v5691 = vpack.c.b16 %v5640, %v5639
    %v5692 = vpack.c.b16 %v5642, %v5641
    %v5693 = vpack.c.b16 %v5644, %v5643
    %v5694 = vpack.c.b16 %v5646, %v5645
    %v5695 = vpack.c.b16 %v5648, %v5647
    %v5696 = vpack.c.b16 %v5650, %v5649
    %v5697 = vpack.c.b16 %v5652, %v5651
    %v5698 = vpack.c.b16 %v5654, %v5653
    %v5699 = vpack.c.b16 %v5656, %v5655
    %v5700 = vpack.c.b16 %v5658, %v5657
    %v5701 = vpack.c.b16 %v5660, %v5659
    %v5702 = vpack.c.b16 %v5662, %v5661
    %v5703 = vpack.c.b16 %v5664, %v5663
    %v5704 = vpack.c.b16 %v5666, %v5665
    %v5705 = vpack.c.b16 %v5668, %v5667
    %v5706 = vpack.c.b16 %v5670, %v5669
    %v5707 = vpack.c.b16 %v5672, %v5671
    %v5708 = vpack.c.b16 %v5674, %v5673
    %v5709 = vpack.c.b16 %v5676, %v5675
    %v5710 = vpack.c.b16 %v5678, %v5677
    %5743 = vmatpush.bf16.msra.mxu0 %v5686
    %5744 = vmatpush.bf16.msra.mxu0 %v5685
    %5745 = vmatpush.bf16.msra.mxu0 %v5684
    %5746 = vmatpush.bf16.msra.mxu0 %v5683
    %5747 = vmatpush.bf16.msra.mxu0 %v5682
    %5748 = vmatpush.bf16.msra.mxu0 %v5681
    %5749 = vmatpush.bf16.msra.mxu0 %v5680
    %5750 = vmatpush.bf16.msra.mxu0 %v5679
    %5751 = vmatmul.bf16.gmra.mxu0 %v5479
    %v5752 = vpop.f32.mrf.mxu0
    %v5753 = vpop.f32.mrf.mxu0
    %5754 = vmatmul.bf16.gmra.mxu0 %v5483
    %v5755 = vpop.f32.mrf.mxu0
    %v5756 = vadd.f32 0.0, %v5755
    %v5757 = vpop.f32.mrf.mxu0
    %5758 = vdwg.mxu0
    %5759 = vmatpush.bf16.msra.mxu0 %v5694
    %5760 = vmatpush.bf16.msra.mxu0 %v5693
    %5761 = vmatpush.bf16.msra.mxu0 %v5692
    %5762 = vmatpush.bf16.msra.mxu0 %v5691
    %5763 = vmatpush.bf16.msra.mxu0 %v5690
    %5764 = vmatpush.bf16.msra.mxu0 %v5689
    %5765 = vmatpush.bf16.msra.mxu0 %v5688
    %5766 = vmatpush.bf16.msra.mxu0 %v5687
    %5767 = vmatmul.bf16.gmra.mxu0 %v5480
    %v5768 = vpop.f32.mrf.mxu0
    %v5769 = vpop.f32.mrf.mxu0
    %5770 = vmatmul.bf16.gmra.mxu0 %v5484
    %v5771 = vpop.f32.mrf.mxu0
    %v5772 = vadd.f32 %v5756, %v5771
    %v5773 = vpop.f32.mrf.mxu0
    %5774 = vdwg.mxu0
    %5775 = vmatpush.bf16.msra.mxu0 %v5702
    %5776 = vmatpush.bf16.msra.mxu0 %v5701
    %5777 = vmatpush.bf16.msra.mxu0 %v5700
    %5778 = vmatpush.bf16.msra.mxu0 %v5699
    %5779 = vmatpush.bf16.msra.mxu0 %v5698
    %5780 = vmatpush.bf16.msra.mxu0 %v5697
    %5781 = vmatpush.bf16.msra.mxu0 %v5696
    %5782 = vmatpush.bf16.msra.mxu0 %v5695
    %5783 = vmatmul.bf16.gmra.mxu0 %v5481
    %v5784 = vpop.f32.mrf.mxu0
    %v5785 = vpop.f32.mrf.mxu0
    %5786 = vmatmul.bf16.gmra.mxu0 %v5485
    %v5787 = vpop.f32.mrf.mxu0
    %v5788 = vadd.f32 %v5772, %v5787
    %v5789 = vpop.f32.mrf.mxu0
    %5790 = vdwg.mxu0
    %5791 = vmatpush.bf16.msra.mxu0 %v5710
    %5792 = vmatpush.bf16.msra.mxu0 %v5709
    %5793 = vmatpush.bf16.msra.mxu0 %v5708
    %5794 = vmatpush.bf16.msra.mxu0 %v5707
    %5795 = vmatpush.bf16.msra.mxu0 %v5706
    %5796 = vmatpush.bf16.msra.mxu0 %v5705
    %5797 = vmatpush.bf16.msra.mxu0 %v5704
    %5798 = vmatpush.bf16.msra.mxu0 %v5703
    %5799 = vmatmul.bf16.gmra.mxu0 %v5482
    %v5800 = vpop.f32.mrf.mxu0
    %v5801 = vpop.f32.mrf.mxu0
    %5802 = vmatmul.bf16.gmra.mxu0 %v5486
    %v5803 = vpop.f32.mrf.mxu0
    %v5804 = vadd.f32 %v5788, %v5803
    %v5805 = vpop.f32.mrf.mxu0
    %5806 = vdwg.mxu0
    %v5807 = vadd.f32 %v5336, %v5804
    %v5808 = vadd.f32 %v3914, %v5807
    %s5809 = scalar_lea.vmem %s15, 1
    %v5810 = vld [vmem:[%s5809] sm:$0x1]
    %v5812 = vperm.slane %v5810, 0
    %v5814 = vadd.f32 %v5808, %v5812
    %s5815 = scalar_lea.vmem %s16, 1
    %v5816 = vld [vmem:[%s5815] sm:$0x1]
    %s5817 = scalar_lea.vmem %s17, 1
    %v5818 = vld [vmem:[%s5817] sm:$0x1]
    %v5819 = vsel %vm73, %v5814, 0.0
    %5820 = vadd.xlane.f32.xlu0 %v5819
    %v5821 = vpop.xlane.xlu0 %5820
    %v5822 = vmul.f32 %v5821, %v1023
    %v5823 = vsub.f32 %v5814, %v5822
    %v5824 = vmul.f32 %v5823, %v5823
    %v5825 = vsel %vm73, %v5824, 0.0
    %5826 = vadd.xlane.f32.xlu0 %v5825
    %v5827 = vpop.xlane.xlu0 %5826
    %v5828 = vmul.f32 %v5827, %v1023
    %v5829 = vadd.f32 %v5828, 1e-05
    %v5830 = vrsqrt.pop %v5829
    %v5831 = vmul.f32 %v5830, %v5829
    %v5832 = vmul.f32 %v5831, %v5830
    %v5833 = vmul.f32 0.5, %v5832
    %v5834 = vsub.f32 1.5, %v5833
    %v5835 = vmul.f32 %v5830, %v5834
    %vm5836 = vweird.f32 %v5829
    %vm5837 = vweird.f32 %v5830
    %vm5838 = vmor %vm5836, %vm5837
    %v5839 = vsel %vm5838, %v5830, %v5835
    %v5840 = vmul.f32 %v5823, %v5839
    %v5842 = vperm.slane %v5816, 0
    %v5844 = vmul.f32 %v5840, %v5842
    %v5846 = vperm.slane %v5818, 0
    %v5848 = vadd.f32 %v5844, %v5846
    %v5849 = vld [vmem:[%s18] sm:$0xff]
    %v5850 = vld [vmem:[%s18 + $0x8] sm:$0xff]
    %v5851 = vld [vmem:[%s18 + $0x10] sm:$0xff]
    %v5852 = vld [vmem:[%s18 + $0x18] sm:$0xff]
    %v5853 = vld [vmem:[%s19] sm:$0x1]
    %v5855 = vperm.slane %v5853, 0
    %v5858 = vsel %vm73, %v5848, 0
    %5860 = vmatpush.msra.mxu0 0.0
    %5861 = vmatpush.msra.mxu0 0.0
    %5862 = vmatpush.msra.mxu0 0.0
    %5863 = vmatpush.msra.mxu0 0.0
    %5864 = vmatpush.msra.mxu0 0.0
    %5865 = vmatpush.msra.mxu0 0.0
    %5866 = vmatpush.msra.mxu0 0.0
    %5867 = vmatpush.msra.mxu0 0.0
    %5868 = vmatpush.msra.mxu0 0.0
    %5869 = vmatpush.msra.mxu0 0.0
    %5870 = vmatpush.msra.mxu0 0.0
    %5871 = vmatpush.msra.mxu0 0.0
    %5872 = vmatpush.msra.mxu0 %v5852
    %5873 = vmatpush.msra.mxu0 %v5851
    %5874 = vmatpush.msra.mxu0 %v5850
    %5875 = vmatpush.msra.mxu0 %v5849
    %5876 = vmatmul.f32.gmra.mxu0 %v5858
    %v5877 = vpop.f32.mrf.mxu0
    %v5878 = vadd.f32 %v5855, %v5877
    %5879 = vdwg.mxu0
    %v5880 = vmax.f32 %v5878, 0.0
    %v5881 = vld [vmem:[%s20] sm:$0xff]
    %v5882 = vld [vmem:[%s20 + $0x8] sm:$0xff]
    %v5883 = vld [vmem:[%s20 + $0x10] sm:$0xff]
    %v5884 = vld [vmem:[%s20 + $0x18] sm:$0xff]
    %v5885 = vld [vmem:[%s21] sm:$0x1]
    %v5887 = vperm.slane %v5885, 0
    %v5890 = vsel %vm73, %v5880, 0
    %5892 = vmatpush.msra.mxu0 0.0
    %5893 = vmatpush.msra.mxu0 0.0
    %5894 = vmatpush.msra.mxu0 0.0
    %5895 = vmatpush.msra.mxu0 0.0
    %5896 = vmatpush.msra.mxu0 0.0
    %5897 = vmatpush.msra.mxu0 0.0
    %5898 = vmatpush.msra.mxu0 0.0
    %5899 = vmatpush.msra.mxu0 0.0
    %5900 = vmatpush.msra.mxu0 0.0
    %5901 = vmatpush.msra.mxu0 0.0
    %5902 = vmatpush.msra.mxu0 0.0
    %5903 = vmatpush.msra.mxu0 0.0
    %5904 = vmatpush.msra.mxu0 %v5884
    %5905 = vmatpush.msra.mxu0 %v5883
    %5906 = vmatpush.msra.mxu0 %v5882
    %5907 = vmatpush.msra.mxu0 %v5881
    %5908 = vmatmul.f32.gmra.mxu0 %v5890
    %v5909 = vpop.f32.mrf.mxu0
    %v5910 = vadd.f32 %v5887, %v5909
    %5911 = vdwg.mxu0
    %v5912 = vsub.f32 0.0, %v5910
    %v5913 = vmul.f32 %v5912, 1.442695
    %v5914 = vpow.pop %v5913
    %v5915 = vadd.f32 %v5914, 1.0
    %v5916 = vrcp.pop %v5915
    %v5917 = vmul.f32 %v5915, %v5916
    %v5918 = vsub.f32 1.0, %v5917
    %v5919 = vmul.f32 %v5916, %v5918
    %v5920 = vadd.f32 %v5916, %v5919
    %vm5921 = vweird.f32 %v5915
    %vm5922 = vweird.f32 %v5916
    %vm5923 = vmor %vm5921, %vm5922
    %v5924 = vsel %vm5923, %v5916, %v5920
    %v5925 = vand.u32 2147483647, %v5915
    %vm5926 = vcmp.eq.f32.partialorder %v5925, 8.507059e+37
    %v5927 = vand.u32 %v5915, 2147483648
    %v5928 = vor.u32 1.1754944e-38, %v5927
    %v5929 = vsel %vm5926, %v5928, %v5924
    %v5930 = vmul.f32 1.0, %v5929
    %vm5931 = vcmask 74752
    %5932 = vst.msk [vmem:[#allocation3] sm:$0x3] %vm5931, %v5930
    // Predicated region
    $region90: #{backend_forward.1} parent=1 // pred_check
      _
    $region91: #{backend_forward.1} parent=1 // pred_check_branch
      %5934 = sbr.rel (0) target = $region93
    $region92: #{backend_forward.1} parent=1 // pred_region
      %5936 = vsyncadd [#allocation4], 0
      %s5938 = sshll.u32 [#allocation3], 4
      %s5939 = int_to_ptr.vmem [resolvable:$true] %s5938
      %s5940 = sshll.u32 %s22, 4
      %s5941 = int_to_ptr.hbm [resolvable:$true] %s5940
      %5943 = dma.vmem_to_hbm [thread:$0]  %s5939, 32, %s5941, [#allocation4]
    $region93: #{backend_forward.1} parent=1 // pred_fallthru
      _
    // Predicated region
    $region94: #{backend_forward.1} parent=1 // pred_check
      _
    $region95: #{backend_forward.1} parent=1 // pred_check_branch
      %5945 = sbr.rel (0) target = $region97
    $region96: #{backend_forward.1} parent=1 // pred_region
      %5947 = dma.done [#allocation4], 32
    $region97: #{backend_forward.1} parent=1 // pred_fallthru
      _
    %5948 = vsyncpa [#allocation4], 1

</llo_original>
